<compile_context>
chip_gen: v7x
topology: tpu7x:2x2x1
jax: 0.10.0
libtpu: 0.0.40
codegen_flags: <defaults>
</compile_context>

<pallas_src>
import math
import functools

import jax
import jax.numpy as jnp
from jax.experimental import pallas as pl
from jax.experimental.pallas import tpu as pltpu


def _round_up(x, m):
    return ((x + m - 1) // m) * m


def _vmem_capacity_bytes():
    """Per-generation VMEM capacity; conservative 64 MiB fallback (v7x per-TC)."""
    try:
        return int(pltpu.get_tpu_info().vmem_capacity_bytes)
    except Exception:
        return 64 * 2 ** 20


def _resident_block_spec(block_shape, index_map):
    """Constant-index (VMEM-resident) spec, single-buffered when supported."""
    if hasattr(pl, "Buffered"):
        try:
            return pl.BlockSpec(block_shape, index_map,
                                pipeline_mode=pl.Buffered(1))
        except TypeError:
            pass  # older BlockSpec without pipeline_mode
    return pl.BlockSpec(block_shape, index_map)


def _sigmoid_via_tanh(x):
    # One EUP tanh instead of exp + reciprocal; scale/offset go to spare VALU.
    return 0.5 * (1.0 + jnp.tanh(0.5 * x))


def _gru_recurrent_kernel(gi_ref, whh_ref, bhn_ref, out_ref, h_scratch):
    """Recurrent part of one GRU layer for one (batch_block, time_chunk) tile.

    gi_ref : (B_BLK, CHUNK, 3*Hp)  -- x@W_ih^T + b_ih + [b_hr, b_hz, 0], gate-padded
    whh_ref: (Hp, 3*Hp)            -- W_hh^T, VMEM-resident, storage dtype
    bhn_ref: (1, Hp) f32           -- b_hn (gate-padded)
    out_ref: (B_BLK, CHUNK, Hp)
    h_scratch: (B_BLK, Hp) f32     -- hidden state carried across time chunks
    """
    b_blk, chunk, _ = gi_ref.shape
    hp = out_ref.shape[-1]

    # New batch block (t == 0): reset the hidden state.
    @pl.when(pl.program_id(1) == 0)
    def _():
        h_scratch[...] = jnp.zeros_like(h_scratch)

    whh = whh_ref[...]                                            # storage dtype
    # Hoisted broadcast (JAX does not CSE broadcast_in_dim inside the unroll).
    b_hn = jnp.broadcast_to(bhn_ref[...].astype(jnp.float32), (b_blk, hp))

    h = h_scratch[...]                                            # (B_BLK, Hp) f32
    # Groups of 8 steps -> one sublane-dense (b_blk, 8, Hp) store per group.
    # TODO(synk): for very large b_blk*Hp switch the group loop to
    # lax.fori_loop to bound live ranges; per-chip (v5e) explicit MXU weight
    # staging (matmul_push_rhs) and a v6e bf16 gate-math path are further opts.
    for g in range(chunk // 8):
        hs = []
        for i in range(8):
            t = g * 8 + i
            gi = gi_ref[:, t, :].astype(jnp.float32)              # (B_BLK, 3Hp)
            gh = jnp.dot(h.astype(whh.dtype), whh,
                         preferred_element_type=jnp.float32)      # (B_BLK, 3Hp)
            r = _sigmoid_via_tanh(gi[:, 0:hp] + gh[:, 0:hp])
            z = _sigmoid_via_tanh(gi[:, hp:2 * hp] + gh[:, hp:2 * hp])
            n = jnp.tanh(gi[:, 2 * hp:3 * hp] + r * (gh[:, 2 * hp:3 * hp] + b_hn))
            h = (1.0 - z) * n + z * h
            hs.append(h)
        out_ref[:, g * 8:(g + 1) * 8, :] = jnp.stack(hs, axis=1).astype(out_ref.dtype)
    h_scratch[...] = h


def gru_layer_pallas(x, w_ih, w_hh, b_ih, b_hh, *, t_chunk=32, batch_block=128,
                     weight_dtype=None, gi_dtype=None):
    """One GRU layer, batch_first.

    x: (B, S, I).  w_ih: (3H, I), w_hh: (3H, H), b_ih/b_hh: (3H,).
    Returns (B, S, H) in x.dtype.
    """
    B, S, I = x.shape
    H = w_hh.shape[1]
    Hp = _round_up(H, 128)                 # lane-aligned per-gate width
    f32 = jnp.float32
    wdt = jnp.dtype(weight_dtype) if weight_dtype is not None else jnp.dtype(w_hh.dtype)
    gdt = jnp.dtype(gi_dtype) if gi_dtype is not None else jnp.dtype(f32)

    # ---- Gate-padded (lane-aligned) weights / biases -----------------------
    w_ih_t = jnp.transpose(w_ih).astype(f32)                      # (I, 3H)
    w_hh_t = jnp.transpose(w_hh).astype(f32)                      # (H, 3H)
    w_proj = jnp.zeros((I, 3 * Hp), f32)
    whh_tp = jnp.zeros((Hp, 3 * Hp), f32)
    bias_gi = jnp.zeros((3 * Hp,), f32)
    for g in range(3):
        w_proj = w_proj.at[:, g * Hp:g * Hp + H].set(w_ih_t[:, g * H:(g + 1) * H])
        whh_tp = whh_tp.at[:H, g * Hp:g * Hp + H].set(w_hh_t[:, g * H:(g + 1) * H])
        bias = b_ih[g * H:(g + 1) * H]
        if g < 2:  # fold hidden r/z biases into the hoisted projection
            bias = bias + b_hh[g * H:(g + 1) * H]
        bias_gi = bias_gi.at[g * Hp:g * Hp + H].set(bias.astype(f32))
    b_hn = jnp.zeros((1, Hp), f32).at[0, :H].set(b_hh[2 * H:3 * H].astype(f32))
    w_proj = w_proj.astype(wdt)
    whh_tp = whh_tp.astype(wdt)

    # ---- Hoisted, time-independent input projection (one big MXU matmul) ---
    gi_all = jax.lax.dot_general(
        x.astype(wdt), w_proj, (((2,), (0,)), ((), ())),
        preferred_element_type=f32)                               # (B, S, 3Hp)
    gi_all = (gi_all + bias_gi[None, None, :]).astype(gdt)

    # ---- Tile sizes: pad B and S instead of shrinking to divisors ----------
    b_blk = max(8, min(_round_up(batch_block, 8), _round_up(B, 8)))
    if B > 8 and _round_up(B, b_blk) <= b_blk:
        # keep >= 2 batch blocks so the "parallel" axis can shard over 2 TCs
        b_blk = max(8, _round_up((B + 1) // 2, 8))
    B_pad = _round_up(B, b_blk)
    chunk = _round_up(min(t_chunk, _round_up(S, 8)), 8)
    s_pad = _round_up(S, chunk)
    if (B_pad, s_pad) != (B, S):
        gi_all = jnp.pad(gi_all, ((0, B_pad - B), (0, s_pad - S), (0, 0)))

    grid = (B_pad // b_blk, s_pad // chunk)

    # ---- VMEM budget, clamped to this chip's capacity -----------------------
    est = (2 * b_blk * chunk * 3 * Hp * jnp.dtype(gdt).itemsize   # gi blocks (2-buf)
           + 2 * b_blk * chunk * Hp * jnp.dtype(x.dtype).itemsize # out blocks
           + 2 * Hp * 3 * Hp * jnp.dtype(wdt).itemsize            # resident W_hh^T
           + 2 * Hp * 4                                           # b_hn
           + b_blk * Hp * 4)                                      # h scratch
    cap = _vmem_capacity_bytes()
    vmem_limit = int(min(100 * 2 ** 20, int(0.8 * cap),
                         max(32 * 2 ** 20, 2 * est)))

    out = pl.pallas_call(
        _gru_recurrent_kernel,
        out_shape=jax.ShapeDtypeStruct((B_pad, s_pad, Hp), x.dtype),
        grid_spec=pltpu.PrefetchScalarGridSpec(
            num_scalar_prefetch=0,
            grid=grid,
            in_specs=[
                pl.BlockSpec((b_blk, chunk, 3 * Hp), lambda b, t: (b, t, 0)),
                _resident_block_spec((Hp, 3 * Hp), lambda b, t: (0, 0)),
                _resident_block_spec((1, Hp), lambda b, t: (0, 0)),
            ],
            out_specs=pl.BlockSpec((b_blk, chunk, Hp), lambda b, t: (b, t, 0)),
            scratch_shapes=[pltpu.VMEM((b_blk, Hp), jnp.float32)],
        ),
        compiler_params=pltpu.CompilerParams(
            # batch axis shards across TensorCores; time axis is a recurrence.
            dimension_semantics=("parallel", "arbitrary"),
            vmem_limit_bytes=vmem_limit,
        ),
    )(gi_all, whh_tp, b_hn)

    return out[:B, :S, :H]


def init_gru_params(key, input_size, hidden_size, num_layers):
    """Deterministic init matching torch.nn.GRU parameter shapes (uniform +-1/sqrt(H))."""
    params = []
    k = 1.0 / math.sqrt(hidden_size)
    for layer in range(num_layers):
        in_sz = input_size if layer == 0 else hidden_size
        key, k1, k2, k3, k4 = jax.random.split(key, 5)
        w_ih = jax.random.uniform(k1, (3 * hidden_size, in_sz), jnp.float32, -k, k)
        w_hh = jax.random.uniform(k2, (3 * hidden_size, hidden_size), jnp.float32, -k, k)
        b_ih = jax.random.uniform(k3, (3 * hidden_size,), jnp.float32, -k, k)
        b_hh = jax.random.uniform(k4, (3 * hidden_size,), jnp.float32, -k, k)
        params.append((w_ih, w_hh, b_ih, b_hh))
    return params


@functools.partial(jax.jit, static_argnames=("t_chunk", "batch_block",
                                              "weight_dtype", "gi_dtype"))
def gru_uni_forward(x, params, *, t_chunk=32, batch_block=128,
                    weight_dtype=None, gi_dtype=None):
    """GRU_uni.forward: x (batch, seq, input) -> r_out (batch, seq, hidden)."""
    h = x
    for (w_ih, w_hh, b_ih, b_hh) in params:
        h = gru_layer_pallas(h, w_ih, w_hh, b_ih, b_hh,
                             t_chunk=t_chunk, batch_block=batch_block,
                             weight_dtype=weight_dtype, gi_dtype=gi_dtype)
    return h


def gru_uni_reference(x_bsi, params):
    """Pure-JAX reference (matches torch.nn.GRU math) for correctness check."""
    x = jnp.transpose(x_bsi, (1, 0, 2)).astype(jnp.float32)
    for (w_ih, w_hh, b_ih, b_hh) in params:
        S, B, _ = x.shape
        H = w_hh.shape[1]
        h = jnp.zeros((B, H), jnp.float32)
        outs = []
        for t in range(S):
            gi = x[t] @ w_ih.T + b_ih
            gh = h @ w_hh.T + b_hh
            r = jax.nn.sigmoid(gi[:, :H] + gh[:, :H])
            z = jax.nn.sigmoid(gi[:, H:2 * H] + gh[:, H:2 * H])
            n = jnp.tanh(gi[:, 2 * H:] + r * gh[:, 2 * H:])
            h = (1.0 - z) * n + z * h
            outs.append(h)
        x = jnp.stack(outs, axis=0)
    return jnp.transpose(x, (1, 0, 2))


if __name__ == "__main__":
    batch, seq, input_size, hidden_size, num_layers = 2, 8, 16, 32, 2

    key = jax.random.PRNGKey(0)
    key, kx, kp = jax.random.split(key, 3)
    x = jax.random.normal(kx, (batch, seq, input_size), jnp.float32)
    params = init_gru_params(kp, input_size, hidden_size, num_layers)

    ref = gru_uni_reference(x, params)

    # Default path: f32 weights, f32 gi carried through HBM.
    out = jax.block_until_ready(gru_uni_forward(x, params))
    assert out.shape == (batch, seq, hidden_size), out.shape
    err = float(jnp.max(jnp.abs(out - ref)))
    assert err < 2e-2, f"f32 max abs err {err}"

    # bf16 resident-weight + bf16 gi path (halves resident VMEM and the
    # dominant gi HBM traffic); looser tolerance from bf16 rounding.
    out_bf16 = jax.block_until_ready(
        gru_uni_forward(x, params, weight_dtype=jnp.bfloat16, gi_dtype=jnp.bfloat16))
    err_bf16 = float(jnp.max(jnp.abs(out_bf16 - ref)))
    assert err_bf16 < 1.5e-1, f"bf16 max abs err {err_bf16}"

    print("KERNEL_OK")
</pallas_src>

<mosaic_0001>
module attributes {stable_mosaic.version = 11 : i64} {
  func.func @_gru_recurrent_kernel(%arg0: i32, %arg1: i32, %arg2: memref<8x8x384xf32, #tpu.memory_space<vmem>>, %arg3: memref<128x384xf32, #tpu.memory_space<vmem>>, %arg4: memref<1x128xf32, #tpu.memory_space<vmem>>, %arg5: memref<8x8x128xf32, #tpu.memory_space<vmem>>, %arg6: memref<8x128xf32, #tpu.memory_space<vmem>>) attributes {dimension_semantics = [#tpu.dimension_semantics<parallel>, #tpu.dimension_semantics<arbitrary>], iteration_bounds = array<i64: 1, 1>, scalar_prefetch = 0 : i64, scratch_operands = 1 : i64, tpu.core_type = #tpu.core_type<tc>, window_params = [{transform_indices = @transform_0, window_bounds = array<i64: 8, 8, 384>}, {pipeline_mode = #tpu.pipeline_mode<synchronous>, transform_indices = @transform_1, window_bounds = array<i64: 128, 384>}, {pipeline_mode = #tpu.pipeline_mode<synchronous>, transform_indices = @transform_2, window_bounds = array<i64: 1, 128>}, {transform_indices = @transform_3, window_bounds = array<i64: 8, 8, 128>}]} {
    %c0_i32 = arith.constant 0 : i32
    %0 = arith.cmpi eq, %arg1, %c0_i32 : i32
    %1 = arith.extui %0 : i1 to i32
    %c0_i32_0 = arith.constant 0 : i32
    %2 = arith.cmpi ne, %1, %c0_i32_0 : i32
    scf.if %2 {
      %cst_91 = arith.constant 0.000000e+00 : f32
      %291 = vector.broadcast %cst_91 : f32 to vector<8x128xf32>
      %c0_92 = arith.constant 0 : index
      %c0_93 = arith.constant 0 : index
      %292 = vector.load %arg6[%c0_92, %c0_93] : memref<8x128xf32, #tpu.memory_space<vmem>>, vector<8x128xf32>
      tpu.vector_store %arg6[%c0_92, %c0_93], %291 {strides = array<i32>} : memref<8x128xf32, #tpu.memory_space<vmem>>, vector<8x128xf32>,
    } else {
    }
    %c0 = arith.constant 0 : index
    %c0_1 = arith.constant 0 : index
    %3 = vector.load %arg3[%c0, %c0_1] : memref<128x384xf32, #tpu.memory_space<vmem>>, vector<128x384xf32>
    %c0_2 = arith.constant 0 : index
    %c0_3 = arith.constant 0 : index
    %4 = vector.load %arg4[%c0_2, %c0_3] : memref<1x128xf32, #tpu.memory_space<vmem>>, vector<1x128xf32>
    %5 = vector.shape_cast %4 : vector<1x128xf32> to vector<1x128xf32>
    %6 = vector.broadcast %5 : vector<1x128xf32> to vector<8x128xf32>
    %c0_4 = arith.constant 0 : index
    %c0_5 = arith.constant 0 : index
    %7 = vector.load %arg6[%c0_4, %c0_5] : memref<8x128xf32, #tpu.memory_space<vmem>>, vector<8x128xf32>
    %c0_6 = arith.constant 0 : index
    %c0_7 = arith.constant 0 : index
    %c0_8 = arith.constant 0 : index
    %8 = vector.load %arg2[%c0_6, %c0_7, %c0_8] : memref<8x8x384xf32, #tpu.memory_space<vmem>>, vector<8x1x384xf32>
    %9 = vector.shape_cast %8 : vector<8x1x384xf32> to vector<8x384xf32>
    %cst = arith.constant dense<0.000000e+00> : vector<8x384xf32>
    %10 = tpu.matmul %7, %3, %cst {dimension_numbers = #tpu.dot_dimension_numbers<[1], [0], [0], [1], [0, 0, 1, 1], [], []>} : vector<8x128xf32>, vector<128x384xf32>, vector<8x384xf32> -> vector<8x384xf32>
    %11 = vector.extract_strided_slice %9 {offsets = [0, 0], sizes = [8, 128], strides = [1, 1]} : vector<8x384xf32> to vector<8x128xf32>
    %12 = vector.extract_strided_slice %10 {offsets = [0, 0], sizes = [8, 128], strides = [1, 1]} : vector<8x384xf32> to vector<8x128xf32>
    %13 = arith.addf %11, %12 : vector<8x128xf32>
    %cst_9 = arith.constant 5.000000e-01 : f32
    %14 = vector.broadcast %cst_9 : f32 to vector<8x128xf32>
    %15 = arith.mulf %14, %13 : vector<8x128xf32>
    %16 = math.tanh %15 : vector<8x128xf32>
    %cst_10 = arith.constant 1.000000e+00 : f32
    %17 = vector.broadcast %cst_10 : f32 to vector<8x128xf32>
    %18 = arith.addf %17, %16 : vector<8x128xf32>
    %cst_11 = arith.constant 5.000000e-01 : f32
    %19 = vector.broadcast %cst_11 : f32 to vector<8x128xf32>
    %20 = arith.mulf %19, %18 : vector<8x128xf32>
    %21 = vector.extract_strided_slice %9 {offsets = [0, 128], sizes = [8, 128], strides = [1, 1]} : vector<8x384xf32> to vector<8x128xf32>
    %22 = vector.extract_strided_slice %10 {offsets = [0, 128], sizes = [8, 128], strides = [1, 1]} : vector<8x384xf32> to vector<8x128xf32>
    %23 = arith.addf %21, %22 : vector<8x128xf32>
    %cst_12 = arith.constant 5.000000e-01 : f32
    %24 = vector.broadcast %cst_12 : f32 to vector<8x128xf32>
    %25 = arith.mulf %24, %23 : vector<8x128xf32>
    %26 = math.tanh %25 : vector<8x128xf32>
    %cst_13 = arith.constant 1.000000e+00 : f32
    %27 = vector.broadcast %cst_13 : f32 to vector<8x128xf32>
    %28 = arith.addf %27, %26 : vector<8x128xf32>
    %cst_14 = arith.constant 5.000000e-01 : f32
    %29 = vector.broadcast %cst_14 : f32 to vector<8x128xf32>
    %30 = arith.mulf %29, %28 : vector<8x128xf32>
    %31 = vector.extract_strided_slice %9 {offsets = [0, 256], sizes = [8, 128], strides = [1, 1]} : vector<8x384xf32> to vector<8x128xf32>
    %32 = vector.extract_strided_slice %10 {offsets = [0, 256], sizes = [8, 128], strides = [1, 1]} : vector<8x384xf32> to vector<8x128xf32>
    %33 = arith.addf %32, %6 : vector<8x128xf32>
    %34 = arith.mulf %20, %33 : vector<8x128xf32>
    %35 = arith.addf %31, %34 : vector<8x128xf32>
    %36 = math.tanh %35 : vector<8x128xf32>
    %cst_15 = arith.constant 1.000000e+00 : f32
    %37 = vector.broadcast %cst_15 : f32 to vector<8x128xf32>
    %38 = arith.subf %37, %30 : vector<8x128xf32>
    %39 = arith.mulf %38, %36 : vector<8x128xf32>
    %40 = arith.mulf %30, %7 : vector<8x128xf32>
    %41 = arith.addf %39, %40 : vector<8x128xf32>
    %c0_16 = arith.constant 0 : index
    %c1 = arith.constant 1 : index
    %c0_17 = arith.constant 0 : index
    %42 = vector.load %arg2[%c0_16, %c1, %c0_17] : memref<8x8x384xf32, #tpu.memory_space<vmem>>, vector<8x1x384xf32>
    %43 = vector.shape_cast %42 : vector<8x1x384xf32> to vector<8x384xf32>
    %cst_18 = arith.constant dense<0.000000e+00> : vector<8x384xf32>
    %44 = tpu.matmul %41, %3, %cst_18 {dimension_numbers = #tpu.dot_dimension_numbers<[1], [0], [0], [1], [0, 0, 1, 1], [], []>} : vector<8x128xf32>, vector<128x384xf32>, vector<8x384xf32> -> vector<8x384xf32>
    %45 = vector.extract_strided_slice %43 {offsets = [0, 0], sizes = [8, 128], strides = [1, 1]} : vector<8x384xf32> to vector<8x128xf32>
    %46 = vector.extract_strided_slice %44 {offsets = [0, 0], sizes = [8, 128], strides = [1, 1]} : vector<8x384xf32> to vector<8x128xf32>
    %47 = arith.addf %45, %46 : vector<8x128xf32>
    %cst_19 = arith.constant 5.000000e-01 : f32
    %48 = vector.broadcast %cst_19 : f32 to vector<8x128xf32>
    %49 = arith.mulf %48, %47 : vector<8x128xf32>
    %50 = math.tanh %49 : vector<8x128xf32>
    %cst_20 = arith.constant 1.000000e+00 : f32
    %51 = vector.broadcast %cst_20 : f32 to vector<8x128xf32>
    %52 = arith.addf %51, %50 : vector<8x128xf32>
    %cst_21 = arith.constant 5.000000e-01 : f32
    %53 = vector.broadcast %cst_21 : f32 to vector<8x128xf32>
    %54 = arith.mulf %53, %52 : vector<8x128xf32>
    %55 = vector.extract_strided_slice %43 {offsets = [0, 128], sizes = [8, 128], strides = [1, 1]} : vector<8x384xf32> to vector<8x128xf32>
    %56 = vector.extract_strided_slice %44 {offsets = [0, 128], sizes = [8, 128], strides = [1, 1]} : vector<8x384xf32> to vector<8x128xf32>
    %57 = arith.addf %55, %56 : vector<8x128xf32>
    %cst_22 = arith.constant 5.000000e-01 : f32
    %58 = vector.broadcast %cst_22 : f32 to vector<8x128xf32>
    %59 = arith.mulf %58, %57 : vector<8x128xf32>
    %60 = math.tanh %59 : vector<8x128xf32>
    %cst_23 = arith.constant 1.000000e+00 : f32
    %61 = vector.broadcast %cst_23 : f32 to vector<8x128xf32>
    %62 = arith.addf %61, %60 : vector<8x128xf32>
    %cst_24 = arith.constant 5.000000e-01 : f32
    %63 = vector.broadcast %cst_24 : f32 to vector<8x128xf32>
    %64 = arith.mulf %63, %62 : vector<8x128xf32>
    %65 = vector.extract_strided_slice %43 {offsets = [0, 256], sizes = [8, 128], strides = [1, 1]} : vector<8x384xf32> to vector<8x128xf32>
    %66 = vector.extract_strided_slice %44 {offsets = [0, 256], sizes = [8, 128], strides = [1, 1]} : vector<8x384xf32> to vector<8x128xf32>
    %67 = arith.addf %66, %6 : vector<8x128xf32>
    %68 = arith.mulf %54, %67 : vector<8x128xf32>
    %69 = arith.addf %65, %68 : vector<8x128xf32>
    %70 = math.tanh %69 : vector<8x128xf32>
    %cst_25 = arith.constant 1.000000e+00 : f32
    %71 = vector.broadcast %cst_25 : f32 to vector<8x128xf32>
    %72 = arith.subf %71, %64 : vector<8x128xf32>
    %73 = arith.mulf %72, %70 : vector<8x128xf32>
    %74 = arith.mulf %64, %41 : vector<8x128xf32>
    %75 = arith.addf %73, %74 : vector<8x128xf32>
    %c0_26 = arith.constant 0 : index
    %c2 = arith.constant 2 : index
    %c0_27 = arith.constant 0 : index
    %76 = vector.load %arg2[%c0_26, %c2, %c0_27] : memref<8x8x384xf32, #tpu.memory_space<vmem>>, vector<8x1x384xf32>
    %77 = vector.shape_cast %76 : vector<8x1x384xf32> to vector<8x384xf32>
    %cst_28 = arith.constant dense<0.000000e+00> : vector<8x384xf32>
    %78 = tpu.matmul %75, %3, %cst_28 {dimension_numbers = #tpu.dot_dimension_numbers<[1], [0], [0], [1], [0, 0, 1, 1], [], []>} : vector<8x128xf32>, vector<128x384xf32>, vector<8x384xf32> -> vector<8x384xf32>
    %79 = vector.extract_strided_slice %77 {offsets = [0, 0], sizes = [8, 128], strides = [1, 1]} : vector<8x384xf32> to vector<8x128xf32>
    %80 = vector.extract_strided_slice %78 {offsets = [0, 0], sizes = [8, 128], strides = [1, 1]} : vector<8x384xf32> to vector<8x128xf32>
    %81 = arith.addf %79, %80 : vector<8x128xf32>
    %cst_29 = arith.constant 5.000000e-01 : f32
    %82 = vector.broadcast %cst_29 : f32 to vector<8x128xf32>
    %83 = arith.mulf %82, %81 : vector<8x128xf32>
    %84 = math.tanh %83 : vector<8x128xf32>
    %cst_30 = arith.constant 1.000000e+00 : f32
    %85 = vector.broadcast %cst_30 : f32 to vector<8x128xf32>
    %86 = arith.addf %85, %84 : vector<8x128xf32>
    %cst_31 = arith.constant 5.000000e-01 : f32
    %87 = vector.broadcast %cst_31 : f32 to vector<8x128xf32>
    %88 = arith.mulf %87, %86 : vector<8x128xf32>
    %89 = vector.extract_strided_slice %77 {offsets = [0, 128], sizes = [8, 128], strides = [1, 1]} : vector<8x384xf32> to vector<8x128xf32>
    %90 = vector.extract_strided_slice %78 {offsets = [0, 128], sizes = [8, 128], strides = [1, 1]} : vector<8x384xf32> to vector<8x128xf32>
    %91 = arith.addf %89, %90 : vector<8x128xf32>
    %cst_32 = arith.constant 5.000000e-01 : f32
    %92 = vector.broadcast %cst_32 : f32 to vector<8x128xf32>
    %93 = arith.mulf %92, %91 : vector<8x128xf32>
    %94 = math.tanh %93 : vector<8x128xf32>
    %cst_33 = arith.constant 1.000000e+00 : f32
    %95 = vector.broadcast %cst_33 : f32 to vector<8x128xf32>
    %96 = arith.addf %95, %94 : vector<8x128xf32>
    %cst_34 = arith.constant 5.000000e-01 : f32
    %97 = vector.broadcast %cst_34 : f32 to vector<8x128xf32>
    %98 = arith.mulf %97, %96 : vector<8x128xf32>
    %99 = vector.extract_strided_slice %77 {offsets = [0, 256], sizes = [8, 128], strides = [1, 1]} : vector<8x384xf32> to vector<8x128xf32>
    %100 = vector.extract_strided_slice %78 {offsets = [0, 256], sizes = [8, 128], strides = [1, 1]} : vector<8x384xf32> to vector<8x128xf32>
    %101 = arith.addf %100, %6 : vector<8x128xf32>
    %102 = arith.mulf %88, %101 : vector<8x128xf32>
    %103 = arith.addf %99, %102 : vector<8x128xf32>
    %104 = math.tanh %103 : vector<8x128xf32>
    %cst_35 = arith.constant 1.000000e+00 : f32
    %105 = vector.broadcast %cst_35 : f32 to vector<8x128xf32>
    %106 = arith.subf %105, %98 : vector<8x128xf32>
    %107 = arith.mulf %106, %104 : vector<8x128xf32>
    %108 = arith.mulf %98, %75 : vector<8x128xf32>
    %109 = arith.addf %107, %108 : vector<8x128xf32>
    %c0_36 = arith.constant 0 : index
    %c3 = arith.constant 3 : index
    %c0_37 = arith.constant 0 : index
    %110 = vector.load %arg2[%c0_36, %c3, %c0_37] : memref<8x8x384xf32, #tpu.memory_space<vmem>>, vector<8x1x384xf32>
    %111 = vector.shape_cast %110 : vector<8x1x384xf32> to vector<8x384xf32>
    %cst_38 = arith.constant dense<0.000000e+00> : vector<8x384xf32>
    %112 = tpu.matmul %109, %3, %cst_38 {dimension_numbers = #tpu.dot_dimension_numbers<[1], [0], [0], [1], [0, 0, 1, 1], [], []>} : vector<8x128xf32>, vector<128x384xf32>, vector<8x384xf32> -> vector<8x384xf32>
    %113 = vector.extract_strided_slice %111 {offsets = [0, 0], sizes = [8, 128], strides = [1, 1]} : vector<8x384xf32> to vector<8x128xf32>
    %114 = vector.extract_strided_slice %112 {offsets = [0, 0], sizes = [8, 128], strides = [1, 1]} : vector<8x384xf32> to vector<8x128xf32>
    %115 = arith.addf %113, %114 : vector<8x128xf32>
    %cst_39 = arith.constant 5.000000e-01 : f32
    %116 = vector.broadcast %cst_39 : f32 to vector<8x128xf32>
    %117 = arith.mulf %116, %115 : vector<8x128xf32>
    %118 = math.tanh %117 : vector<8x128xf32>
    %cst_40 = arith.constant 1.000000e+00 : f32
    %119 = vector.broadcast %cst_40 : f32 to vector<8x128xf32>
    %120 = arith.addf %119, %118 : vector<8x128xf32>
    %cst_41 = arith.constant 5.000000e-01 : f32
    %121 = vector.broadcast %cst_41 : f32 to vector<8x128xf32>
    %122 = arith.mulf %121, %120 : vector<8x128xf32>
    %123 = vector.extract_strided_slice %111 {offsets = [0, 128], sizes = [8, 128], strides = [1, 1]} : vector<8x384xf32> to vector<8x128xf32>
    %124 = vector.extract_strided_slice %112 {offsets = [0, 128], sizes = [8, 128], strides = [1, 1]} : vector<8x384xf32> to vector<8x128xf32>
    %125 = arith.addf %123, %124 : vector<8x128xf32>
    %cst_42 = arith.constant 5.000000e-01 : f32
    %126 = vector.broadcast %cst_42 : f32 to vector<8x128xf32>
    %127 = arith.mulf %126, %125 : vector<8x128xf32>
    %128 = math.tanh %127 : vector<8x128xf32>
    %cst_43 = arith.constant 1.000000e+00 : f32
    %129 = vector.broadcast %cst_43 : f32 to vector<8x128xf32>
    %130 = arith.addf %129, %128 : vector<8x128xf32>
    %cst_44 = arith.constant 5.000000e-01 : f32
    %131 = vector.broadcast %cst_44 : f32 to vector<8x128xf32>
    %132 = arith.mulf %131, %130 : vector<8x128xf32>
    %133 = vector.extract_strided_slice %111 {offsets = [0, 256], sizes = [8, 128], strides = [1, 1]} : vector<8x384xf32> to vector<8x128xf32>
    %134 = vector.extract_strided_slice %112 {offsets = [0, 256], sizes = [8, 128], strides = [1, 1]} : vector<8x384xf32> to vector<8x128xf32>
    %135 = arith.addf %134, %6 : vector<8x128xf32>
    %136 = arith.mulf %122, %135 : vector<8x128xf32>
    %137 = arith.addf %133, %136 : vector<8x128xf32>
    %138 = math.tanh %137 : vector<8x128xf32>
    %cst_45 = arith.constant 1.000000e+00 : f32
    %139 = vector.broadcast %cst_45 : f32 to vector<8x128xf32>
    %140 = arith.subf %139, %132 : vector<8x128xf32>
    %141 = arith.mulf %140, %138 : vector<8x128xf32>
    %142 = arith.mulf %132, %109 : vector<8x128xf32>
    %143 = arith.addf %141, %142 : vector<8x128xf32>
    %c0_46 = arith.constant 0 : index
    %c4 = arith.constant 4 : index
    %c0_47 = arith.constant 0 : index
    %144 = vector.load %arg2[%c0_46, %c4, %c0_47] : memref<8x8x384xf32, #tpu.memory_space<vmem>>, vector<8x1x384xf32>
    %145 = vector.shape_cast %144 : vector<8x1x384xf32> to vector<8x384xf32>
    %cst_48 = arith.constant dense<0.000000e+00> : vector<8x384xf32>
    %146 = tpu.matmul %143, %3, %cst_48 {dimension_numbers = #tpu.dot_dimension_numbers<[1], [0], [0], [1], [0, 0, 1, 1], [], []>} : vector<8x128xf32>, vector<128x384xf32>, vector<8x384xf32> -> vector<8x384xf32>
    %147 = vector.extract_strided_slice %145 {offsets = [0, 0], sizes = [8, 128], strides = [1, 1]} : vector<8x384xf32> to vector<8x128xf32>
    %148 = vector.extract_strided_slice %146 {offsets = [0, 0], sizes = [8, 128], strides = [1, 1]} : vector<8x384xf32> to vector<8x128xf32>
    %149 = arith.addf %147, %148 : vector<8x128xf32>
    %cst_49 = arith.constant 5.000000e-01 : f32
    %150 = vector.broadcast %cst_49 : f32 to vector<8x128xf32>
    %151 = arith.mulf %150, %149 : vector<8x128xf32>
    %152 = math.tanh %151 : vector<8x128xf32>
    %cst_50 = arith.constant 1.000000e+00 : f32
    %153 = vector.broadcast %cst_50 : f32 to vector<8x128xf32>
    %154 = arith.addf %153, %152 : vector<8x128xf32>
    %cst_51 = arith.constant 5.000000e-01 : f32
    %155 = vector.broadcast %cst_51 : f32 to vector<8x128xf32>
    %156 = arith.mulf %155, %154 : vector<8x128xf32>
    %157 = vector.extract_strided_slice %145 {offsets = [0, 128], sizes = [8, 128], strides = [1, 1]} : vector<8x384xf32> to vector<8x128xf32>
    %158 = vector.extract_strided_slice %146 {offsets = [0, 128], sizes = [8, 128], strides = [1, 1]} : vector<8x384xf32> to vector<8x128xf32>
    %159 = arith.addf %157, %158 : vector<8x128xf32>
    %cst_52 = arith.constant 5.000000e-01 : f32
    %160 = vector.broadcast %cst_52 : f32 to vector<8x128xf32>
    %161 = arith.mulf %160, %159 : vector<8x128xf32>
    %162 = math.tanh %161 : vector<8x128xf32>
    %cst_53 = arith.constant 1.000000e+00 : f32
    %163 = vector.broadcast %cst_53 : f32 to vector<8x128xf32>
    %164 = arith.addf %163, %162 : vector<8x128xf32>
    %cst_54 = arith.constant 5.000000e-01 : f32
    %165 = vector.broadcast %cst_54 : f32 to vector<8x128xf32>
    %166 = arith.mulf %165, %164 : vector<8x128xf32>
    %167 = vector.extract_strided_slice %145 {offsets = [0, 256], sizes = [8, 128], strides = [1, 1]} : vector<8x384xf32> to vector<8x128xf32>
    %168 = vector.extract_strided_slice %146 {offsets = [0, 256], sizes = [8, 128], strides = [1, 1]} : vector<8x384xf32> to vector<8x128xf32>
    %169 = arith.addf %168, %6 : vector<8x128xf32>
    %170 = arith.mulf %156, %169 : vector<8x128xf32>
    %171 = arith.addf %167, %170 : vector<8x128xf32>
    %172 = math.tanh %171 : vector<8x128xf32>
    %cst_55 = arith.constant 1.000000e+00 : f32
    %173 = vector.broadcast %cst_55 : f32 to vector<8x128xf32>
    %174 = arith.subf %173, %166 : vector<8x128xf32>
    %175 = arith.mulf %174, %172 : vector<8x128xf32>
    %176 = arith.mulf %166, %143 : vector<8x128xf32>
    %177 = arith.addf %175, %176 : vector<8x128xf32>
    %c0_56 = arith.constant 0 : index
    %c5 = arith.constant 5 : index
    %c0_57 = arith.constant 0 : index
    %178 = vector.load %arg2[%c0_56, %c5, %c0_57] : memref<8x8x384xf32, #tpu.memory_space<vmem>>, vector<8x1x384xf32>
    %179 = vector.shape_cast %178 : vector<8x1x384xf32> to vector<8x384xf32>
    %cst_58 = arith.constant dense<0.000000e+00> : vector<8x384xf32>
    %180 = tpu.matmul %177, %3, %cst_58 {dimension_numbers = #tpu.dot_dimension_numbers<[1], [0], [0], [1], [0, 0, 1, 1], [], []>} : vector<8x128xf32>, vector<128x384xf32>, vector<8x384xf32> -> vector<8x384xf32>
    %181 = vector.extract_strided_slice %179 {offsets = [0, 0], sizes = [8, 128], strides = [1, 1]} : vector<8x384xf32> to vector<8x128xf32>
    %182 = vector.extract_strided_slice %180 {offsets = [0, 0], sizes = [8, 128], strides = [1, 1]} : vector<8x384xf32> to vector<8x128xf32>
    %183 = arith.addf %181, %182 : vector<8x128xf32>
    %cst_59 = arith.constant 5.000000e-01 : f32
    %184 = vector.broadcast %cst_59 : f32 to vector<8x128xf32>
    %185 = arith.mulf %184, %183 : vector<8x128xf32>
    %186 = math.tanh %185 : vector<8x128xf32>
    %cst_60 = arith.constant 1.000000e+00 : f32
    %187 = vector.broadcast %cst_60 : f32 to vector<8x128xf32>
    %188 = arith.addf %187, %186 : vector<8x128xf32>
    %cst_61 = arith.constant 5.000000e-01 : f32
    %189 = vector.broadcast %cst_61 : f32 to vector<8x128xf32>
    %190 = arith.mulf %189, %188 : vector<8x128xf32>
    %191 = vector.extract_strided_slice %179 {offsets = [0, 128], sizes = [8, 128], strides = [1, 1]} : vector<8x384xf32> to vector<8x128xf32>
    %192 = vector.extract_strided_slice %180 {offsets = [0, 128], sizes = [8, 128], strides = [1, 1]} : vector<8x384xf32> to vector<8x128xf32>
    %193 = arith.addf %191, %192 : vector<8x128xf32>
    %cst_62 = arith.constant 5.000000e-01 : f32
    %194 = vector.broadcast %cst_62 : f32 to vector<8x128xf32>
    %195 = arith.mulf %194, %193 : vector<8x128xf32>
    %196 = math.tanh %195 : vector<8x128xf32>
    %cst_63 = arith.constant 1.000000e+00 : f32
    %197 = vector.broadcast %cst_63 : f32 to vector<8x128xf32>
    %198 = arith.addf %197, %196 : vector<8x128xf32>
    %cst_64 = arith.constant 5.000000e-01 : f32
    %199 = vector.broadcast %cst_64 : f32 to vector<8x128xf32>
    %200 = arith.mulf %199, %198 : vector<8x128xf32>
    %201 = vector.extract_strided_slice %179 {offsets = [0, 256], sizes = [8, 128], strides = [1, 1]} : vector<8x384xf32> to vector<8x128xf32>
    %202 = vector.extract_strided_slice %180 {offsets = [0, 256], sizes = [8, 128], strides = [1, 1]} : vector<8x384xf32> to vector<8x128xf32>
    %203 = arith.addf %202, %6 : vector<8x128xf32>
    %204 = arith.mulf %190, %203 : vector<8x128xf32>
    %205 = arith.addf %201, %204 : vector<8x128xf32>
    %206 = math.tanh %205 : vector<8x128xf32>
    %cst_65 = arith.constant 1.000000e+00 : f32
    %207 = vector.broadcast %cst_65 : f32 to vector<8x128xf32>
    %208 = arith.subf %207, %200 : vector<8x128xf32>
    %209 = arith.mulf %208, %206 : vector<8x128xf32>
    %210 = arith.mulf %200, %177 : vector<8x128xf32>
    %211 = arith.addf %209, %210 : vector<8x128xf32>
    %c0_66 = arith.constant 0 : index
    %c6 = arith.constant 6 : index
    %c0_67 = arith.constant 0 : index
    %212 = vector.load %arg2[%c0_66, %c6, %c0_67] : memref<8x8x384xf32, #tpu.memory_space<vmem>>, vector<8x1x384xf32>
    %213 = vector.shape_cast %212 : vector<8x1x384xf32> to vector<8x384xf32>
    %cst_68 = arith.constant dense<0.000000e+00> : vector<8x384xf32>
    %214 = tpu.matmul %211, %3, %cst_68 {dimension_numbers = #tpu.dot_dimension_numbers<[1], [0], [0], [1], [0, 0, 1, 1], [], []>} : vector<8x128xf32>, vector<128x384xf32>, vector<8x384xf32> -> vector<8x384xf32>
    %215 = vector.extract_strided_slice %213 {offsets = [0, 0], sizes = [8, 128], strides = [1, 1]} : vector<8x384xf32> to vector<8x128xf32>
    %216 = vector.extract_strided_slice %214 {offsets = [0, 0], sizes = [8, 128], strides = [1, 1]} : vector<8x384xf32> to vector<8x128xf32>
    %217 = arith.addf %215, %216 : vector<8x128xf32>
    %cst_69 = arith.constant 5.000000e-01 : f32
    %218 = vector.broadcast %cst_69 : f32 to vector<8x128xf32>
    %219 = arith.mulf %218, %217 : vector<8x128xf32>
    %220 = math.tanh %219 : vector<8x128xf32>
    %cst_70 = arith.constant 1.000000e+00 : f32
    %221 = vector.broadcast %cst_70 : f32 to vector<8x128xf32>
    %222 = arith.addf %221, %220 : vector<8x128xf32>
    %cst_71 = arith.constant 5.000000e-01 : f32
    %223 = vector.broadcast %cst_71 : f32 to vector<8x128xf32>
    %224 = arith.mulf %223, %222 : vector<8x128xf32>
    %225 = vector.extract_strided_slice %213 {offsets = [0, 128], sizes = [8, 128], strides = [1, 1]} : vector<8x384xf32> to vector<8x128xf32>
    %226 = vector.extract_strided_slice %214 {offsets = [0, 128], sizes = [8, 128], strides = [1, 1]} : vector<8x384xf32> to vector<8x128xf32>
    %227 = arith.addf %225, %226 : vector<8x128xf32>
    %cst_72 = arith.constant 5.000000e-01 : f32
    %228 = vector.broadcast %cst_72 : f32 to vector<8x128xf32>
    %229 = arith.mulf %228, %227 : vector<8x128xf32>
    %230 = math.tanh %229 : vector<8x128xf32>
    %cst_73 = arith.constant 1.000000e+00 : f32
    %231 = vector.broadcast %cst_73 : f32 to vector<8x128xf32>
    %232 = arith.addf %231, %230 : vector<8x128xf32>
    %cst_74 = arith.constant 5.000000e-01 : f32
    %233 = vector.broadcast %cst_74 : f32 to vector<8x128xf32>
    %234 = arith.mulf %233, %232 : vector<8x128xf32>
    %235 = vector.extract_strided_slice %213 {offsets = [0, 256], sizes = [8, 128], strides = [1, 1]} : vector<8x384xf32> to vector<8x128xf32>
    %236 = vector.extract_strided_slice %214 {offsets = [0, 256], sizes = [8, 128], strides = [1, 1]} : vector<8x384xf32> to vector<8x128xf32>
    %237 = arith.addf %236, %6 : vector<8x128xf32>
    %238 = arith.mulf %224, %237 : vector<8x128xf32>
    %239 = arith.addf %235, %238 : vector<8x128xf32>
    %240 = math.tanh %239 : vector<8x128xf32>
    %cst_75 = arith.constant 1.000000e+00 : f32
    %241 = vector.broadcast %cst_75 : f32 to vector<8x128xf32>
    %242 = arith.subf %241, %234 : vector<8x128xf32>
    %243 = arith.mulf %242, %240 : vector<8x128xf32>
    %244 = arith.mulf %234, %211 : vector<8x128xf32>
    %245 = arith.addf %243, %244 : vector<8x128xf32>
    %c0_76 = arith.constant 0 : index
    %c7 = arith.constant 7 : index
    %c0_77 = arith.constant 0 : index
    %246 = vector.load %arg2[%c0_76, %c7, %c0_77] : memref<8x8x384xf32, #tpu.memory_space<vmem>>, vector<8x1x384xf32>
    %247 = vector.shape_cast %246 : vector<8x1x384xf32> to vector<8x384xf32>
    %cst_78 = arith.constant dense<0.000000e+00> : vector<8x384xf32>
    %248 = tpu.matmul %245, %3, %cst_78 {dimension_numbers = #tpu.dot_dimension_numbers<[1], [0], [0], [1], [0, 0, 1, 1], [], []>} : vector<8x128xf32>, vector<128x384xf32>, vector<8x384xf32> -> vector<8x384xf32>
    %249 = vector.extract_strided_slice %247 {offsets = [0, 0], sizes = [8, 128], strides = [1, 1]} : vector<8x384xf32> to vector<8x128xf32>
    %250 = vector.extract_strided_slice %248 {offsets = [0, 0], sizes = [8, 128], strides = [1, 1]} : vector<8x384xf32> to vector<8x128xf32>
    %251 = arith.addf %249, %250 : vector<8x128xf32>
    %cst_79 = arith.constant 5.000000e-01 : f32
    %252 = vector.broadcast %cst_79 : f32 to vector<8x128xf32>
    %253 = arith.mulf %252, %251 : vector<8x128xf32>
    %254 = math.tanh %253 : vector<8x128xf32>
    %cst_80 = arith.constant 1.000000e+00 : f32
    %255 = vector.broadcast %cst_80 : f32 to vector<8x128xf32>
    %256 = arith.addf %255, %254 : vector<8x128xf32>
    %cst_81 = arith.constant 5.000000e-01 : f32
    %257 = vector.broadcast %cst_81 : f32 to vector<8x128xf32>
    %258 = arith.mulf %257, %256 : vector<8x128xf32>
    %259 = vector.extract_strided_slice %247 {offsets = [0, 128], sizes = [8, 128], strides = [1, 1]} : vector<8x384xf32> to vector<8x128xf32>
    %260 = vector.extract_strided_slice %248 {offsets = [0, 128], sizes = [8, 128], strides = [1, 1]} : vector<8x384xf32> to vector<8x128xf32>
    %261 = arith.addf %259, %260 : vector<8x128xf32>
    %cst_82 = arith.constant 5.000000e-01 : f32
    %262 = vector.broadcast %cst_82 : f32 to vector<8x128xf32>
    %263 = arith.mulf %262, %261 : vector<8x128xf32>
    %264 = math.tanh %263 : vector<8x128xf32>
    %cst_83 = arith.constant 1.000000e+00 : f32
    %265 = vector.broadcast %cst_83 : f32 to vector<8x128xf32>
    %266 = arith.addf %265, %264 : vector<8x128xf32>
    %cst_84 = arith.constant 5.000000e-01 : f32
    %267 = vector.broadcast %cst_84 : f32 to vector<8x128xf32>
    %268 = arith.mulf %267, %266 : vector<8x128xf32>
    %269 = vector.extract_strided_slice %247 {offsets = [0, 256], sizes = [8, 128], strides = [1, 1]} : vector<8x384xf32> to vector<8x128xf32>
    %270 = vector.extract_strided_slice %248 {offsets = [0, 256], sizes = [8, 128], strides = [1, 1]} : vector<8x384xf32> to vector<8x128xf32>
    %271 = arith.addf %270, %6 : vector<8x128xf32>
    %272 = arith.mulf %258, %271 : vector<8x128xf32>
    %273 = arith.addf %269, %272 : vector<8x128xf32>
    %274 = math.tanh %273 : vector<8x128xf32>
    %cst_85 = arith.constant 1.000000e+00 : f32
    %275 = vector.broadcast %cst_85 : f32 to vector<8x128xf32>
    %276 = arith.subf %275, %268 : vector<8x128xf32>
    %277 = arith.mulf %276, %274 : vector<8x128xf32>
    %278 = arith.mulf %268, %245 : vector<8x128xf32>
    %279 = arith.addf %277, %278 : vector<8x128xf32>
    %280 = vector.shape_cast %41 : vector<8x128xf32> to vector<8x1x128xf32>
    %281 = vector.shape_cast %75 : vector<8x128xf32> to vector<8x1x128xf32>
    %282 = vector.shape_cast %109 : vector<8x128xf32> to vector<8x1x128xf32>
    %283 = vector.shape_cast %143 : vector<8x128xf32> to vector<8x1x128xf32>
    %284 = vector.shape_cast %177 : vector<8x128xf32> to vector<8x1x128xf32>
    %285 = vector.shape_cast %211 : vector<8x128xf32> to vector<8x1x128xf32>
    %286 = vector.shape_cast %245 : vector<8x128xf32> to vector<8x1x128xf32>
    %287 = vector.shape_cast %279 : vector<8x128xf32> to vector<8x1x128xf32>
    %288 = tpu.concatenate %280, %281, %282, %283, %284, %285, %286, %287 in 1 : vector<8x1x128xf32>, vector<8x1x128xf32>, vector<8x1x128xf32>, vector<8x1x128xf32>, vector<8x1x128xf32>, vector<8x1x128xf32>, vector<8x1x128xf32>, vector<8x1x128xf32> -> vector<8x8x128xf32>
    %c0_86 = arith.constant 0 : index
    %c0_87 = arith.constant 0 : index
    %c0_88 = arith.constant 0 : index
    %289 = vector.load %arg5[%c0_86, %c0_87, %c0_88] : memref<8x8x128xf32, #tpu.memory_space<vmem>>, vector<8x8x128xf32>
    tpu.vector_store %arg5[%c0_86, %c0_87, %c0_88], %288 {strides = array<i32>} : memref<8x8x128xf32, #tpu.memory_space<vmem>>, vector<8x8x128xf32>,
    %c0_89 = arith.constant 0 : index
    %c0_90 = arith.constant 0 : index
    %290 = vector.load %arg6[%c0_89, %c0_90] : memref<8x128xf32, #tpu.memory_space<vmem>>, vector<8x128xf32>
    tpu.vector_store %arg6[%c0_89, %c0_90], %279 {strides = array<i32>} : memref<8x128xf32, #tpu.memory_space<vmem>>, vector<8x128xf32>,
    return
  }
  func.func @transform_0(%arg0: i32, %arg1: i32) -> (i32, i32, i32) {
    %c0_i32 = arith.constant 0 : i32
    %c0_i32_0 = arith.constant 0 : i32
    return %arg0, %arg1, %c0_i32 : i32, i32, i32
  }
  func.func @transform_1(%arg0: i32, %arg1: i32) -> (i32, i32) {
    %c0_i32 = arith.constant 0 : i32
    %c0_i32_0 = arith.constant 0 : i32
    %c0_i32_1 = arith.constant 0 : i32
    return %c0_i32, %c0_i32_0 : i32, i32
  }
  func.func @transform_2(%arg0: i32, %arg1: i32) -> (i32, i32) {
    %c0_i32 = arith.constant 0 : i32
    %c0_i32_0 = arith.constant 0 : i32
    %c0_i32_1 = arith.constant 0 : i32
    return %c0_i32, %c0_i32_0 : i32, i32
  }
  func.func @transform_3(%arg0: i32, %arg1: i32) -> (i32, i32, i32) {
    %c0_i32 = arith.constant 0 : i32
    %c0_i32_0 = arith.constant 0 : i32
    return %arg0, %arg1, %c0_i32 : i32, i32, i32
  }
}

</mosaic_0001>

<llo_original>
// kernel: gru_uni_forward.2
$region0: #{gru_uni_forward.2}
  #allocation0 [shape = 'u32[]', space=smem, size = 0x4, offset = 0x4, fixed_abs, tag = 'smem constant byte address 0x4 - core index']
  #allocation1 [shape = 'u32[144,128]{1,0:T(1,128)}', space=vmem, size = 0x12000, scoped, tag = 'internal scratch']
  #allocation2 [shape = 'f32[8,128]{1,0:T(8,128)}', space=vmem, size = 0x1000, scoped, tag = 'scratch operand']
  %s0 = inlined_call_operand.vmem [shape: f32[8,8,384], index: 0, kind: input, shape index: {}]
  %s1 = inlined_call_operand.vmem [shape: f32[128,384], index: 1, kind: input, shape index: {}]
  %s2 = inlined_call_operand.vmem [shape: f32[1,128], index: 2, kind: input, shape index: {}]
  %s3 = inlined_call_operand.vmem [shape: f32[8,8,128], index: 3, kind: output, shape index: {}]
  %s4 = sld [smem:[#allocation0]]
  $region26: #{gru_uni_forward.2} parent=0
    _
  %s6 = ssub.s32 1, %s4
  %s7 = scalar_select 0, %s6, %s4
  // Predicated region
  $region2: #{gru_uni_forward.2} parent=0 // pred_check
    _
  $region3: #{gru_uni_forward.2} parent=0 // pred_check_branch
    %9 = sbr.rel (0) target = $region5
  $region4: #{gru_uni_forward.2} parent=0 // pred_region
    _
  $region5: #{gru_uni_forward.2} parent=0 // pred_fallthru
    _
  // Predicated region
  $region6: #{gru_uni_forward.2} parent=0 // pred_check
    _
  $region7: #{gru_uni_forward.2} parent=0 // pred_check_branch
    %11 = sbr.rel (0) target = $region9
  $region8: #{gru_uni_forward.2} parent=0 // pred_region
    _
  $region9: #{gru_uni_forward.2} parent=0 // pred_fallthru
    _
  // Predicated region
  $region10: #{gru_uni_forward.2} parent=0 // pred_check
    _
  $region11: #{gru_uni_forward.2} parent=0 // pred_check_branch
    %13 = sbr.rel (0) target = $region13
  $region12: #{gru_uni_forward.2} parent=0 // pred_region
    _
  $region13: #{gru_uni_forward.2} parent=0 // pred_fallthru
    _
  %p14 = scmp.eq.s32.totalorder 0, 0
  // Predicated region
  $region14: #{gru_uni_forward.2} parent=0 // pred_check
    %p15 = pneg %p14
  $region15: #{gru_uni_forward.2} parent=0 // pred_check_branch
    %17 = sbr.rel (%p15) target = $region17
  $region16: #{gru_uni_forward.2} parent=0 // pred_region
    %18 = vst [vmem:[#allocation2] sm:$0xff] 0.0
  $region17: #{gru_uni_forward.2} parent=0 // pred_fallthru
    _
  %v19 = vld [vmem:[%s1] sm:$0xff]
  %v20 = vld [vmem:[%s1 + $0x8] sm:$0xff]
  %v21 = vld [vmem:[%s1 + $0x10] sm:$0xff]
  %v22 = vld [vmem:[%s1 + $0x18] sm:$0xff]
  %v23 = vld [vmem:[%s1 + $0x20] sm:$0xff]
  %v24 = vld [vmem:[%s1 + $0x28] sm:$0xff]
  %v25 = vld [vmem:[%s1 + $0x30] sm:$0xff]
  %v26 = vld [vmem:[%s1 + $0x38] sm:$0xff]
  %v27 = vld [vmem:[%s1 + $0x40] sm:$0xff]
  %v28 = vld [vmem:[%s1 + $0x48] sm:$0xff]
  %v29 = vld [vmem:[%s1 + $0x50] sm:$0xff]
  %v30 = vld [vmem:[%s1 + $0x58] sm:$0xff]
  %v31 = vld [vmem:[%s1 + $0x60] sm:$0xff]
  %v32 = vld [vmem:[%s1 + $0x68] sm:$0xff]
  %v33 = vld [vmem:[%s1 + $0x70] sm:$0xff]
  %v34 = vld [vmem:[%s1 + $0x78] sm:$0xff]
  %v35 = vld [vmem:[%s1 + $0x80] sm:$0xff]
  %v36 = vld [vmem:[%s1 + $0x88] sm:$0xff]
  %v37 = vld [vmem:[%s1 + $0x90] sm:$0xff]
  %v38 = vld [vmem:[%s1 + $0x98] sm:$0xff]
  %v39 = vld [vmem:[%s1 + $0xa0] sm:$0xff]
  %v40 = vld [vmem:[%s1 + $0xa8] sm:$0xff]
  %v41 = vld [vmem:[%s1 + $0xb0] sm:$0xff]
  %v42 = vld [vmem:[%s1 + $0xb8] sm:$0xff]
  %v43 = vld [vmem:[%s1 + $0xc0] sm:$0xff]
  %v44 = vld [vmem:[%s1 + $0xc8] sm:$0xff]
  %v45 = vld [vmem:[%s1 + $0xd0] sm:$0xff]
  %v46 = vld [vmem:[%s1 + $0xd8] sm:$0xff]
  %v47 = vld [vmem:[%s1 + $0xe0] sm:$0xff]
  %v48 = vld [vmem:[%s1 + $0xe8] sm:$0xff]
  %v49 = vld [vmem:[%s1 + $0xf0] sm:$0xff]
  %v50 = vld [vmem:[%s1 + $0xf8] sm:$0xff]
  %v51 = vld [vmem:[%s1 + $0x100] sm:$0xff]
  %v52 = vld [vmem:[%s1 + $0x108] sm:$0xff]
  %v53 = vld [vmem:[%s1 + $0x110] sm:$0xff]
  %v54 = vld [vmem:[%s1 + $0x118] sm:$0xff]
  %v55 = vld [vmem:[%s1 + $0x120] sm:$0xff]
  %v56 = vld [vmem:[%s1 + $0x128] sm:$0xff]
  %v57 = vld [vmem:[%s1 + $0x130] sm:$0xff]
  %v58 = vld [vmem:[%s1 + $0x138] sm:$0xff]
  %v59 = vld [vmem:[%s1 + $0x140] sm:$0xff]
  %v60 = vld [vmem:[%s1 + $0x148] sm:$0xff]
  %v61 = vld [vmem:[%s1 + $0x150] sm:$0xff]
  %v62 = vld [vmem:[%s1 + $0x158] sm:$0xff]
  %v63 = vld [vmem:[%s1 + $0x160] sm:$0xff]
  %v64 = vld [vmem:[%s1 + $0x168] sm:$0xff]
  %v65 = vld [vmem:[%s1 + $0x170] sm:$0xff]
  %v66 = vld [vmem:[%s1 + $0x178] sm:$0xff]
  %v67 = vld [vmem:[%s2] sm:$0x1]
  %v69 = vlaneseq
  %v70 = vshrl.u32 %v69, 7
  %v71 = vsub.s32 0, %v70
  %v72 = vrot.slane %v67, %v71
  %v74 = vld [vmem:[#allocation2] sm:$0xff]
  %v75 = vld [vmem:[%s0] ss:$8 sm:$0x7]
  %s76 = scalar_lea.vmem %s0, 24
  %v77 = vld [vmem:[%s76] ss:$8 sm:$0x7]
  %s78 = scalar_lea.vmem %s0, 48
  %v79 = vld [vmem:[%s78] ss:$8 sm:$0x7]
  %s80 = scalar_lea.vmem %s0, 72
  %v81 = vld [vmem:[%s80] ss:$8 sm:$0x7]
  %s82 = scalar_lea.vmem %s0, 96
  %v83 = vld [vmem:[%s82] ss:$8 sm:$0x7]
  %s84 = scalar_lea.vmem %s0, 120
  %v85 = vld [vmem:[%s84] ss:$8 sm:$0x7]
  %s86 = scalar_lea.vmem %s0, 144
  %v87 = vld [vmem:[%s86] ss:$8 sm:$0x7]
  %s88 = scalar_lea.vmem %s0, 168
  %v89 = vld [vmem:[%s88] ss:$8 sm:$0x7]
  %90 = vmatprep.subr.mxu0 %v20
  %91 = vmatpush1.msra.mxu0 %v19
  %92 = vmatprep.subr.mxu0 %v23
  %93 = vmatpush1.msra.mxu0 %v22
  %94 = vmatprep.subr.mxu0 %v26
  %95 = vmatpush1.msra.mxu0 %v25
  %96 = vmatprep.subr.mxu0 %v29
  %97 = vmatpush1.msra.mxu0 %v28
  %98 = vmatprep.subr.mxu0 %v32
  %99 = vmatpush1.msra.mxu0 %v31
  %100 = vmatprep.subr.mxu0 %v35
  %101 = vmatpush1.msra.mxu0 %v34
  %102 = vmatprep.subr.mxu0 %v38
  %103 = vmatpush1.msra.mxu0 %v37
  %104 = vmatprep.subr.mxu0 %v41
  %105 = vmatpush1.msra.mxu0 %v40
  %106 = vmatprep.subr.mxu0 %v44
  %107 = vmatpush1.msra.mxu0 %v43
  %108 = vmatprep.subr.mxu0 %v47
  %109 = vmatpush1.msra.mxu0 %v46
  %110 = vmatprep.subr.mxu0 %v50
  %111 = vmatpush1.msra.mxu0 %v49
  %112 = vmatprep.subr.mxu0 %v53
  %113 = vmatpush1.msra.mxu0 %v52
  %114 = vmatprep.subr.mxu0 %v56
  %115 = vmatpush1.msra.mxu0 %v55
  %116 = vmatprep.subr.mxu0 %v59
  %117 = vmatpush1.msra.mxu0 %v58
  %118 = vmatprep.subr.mxu0 %v62
  %119 = vmatpush1.msra.mxu0 %v61
  %120 = vmatprep.subr.mxu0 %v65
  %121 = vmatpush1.msra.mxu0 %v64
  %122 = vmatprep.subr.mxu0 0.0
  %123 = vmatpush1.msra.mxu0 0.0
  %124 = vmatprep.subr.mxu0 0.0
  %125 = vmatpush1.msra.mxu0 0.0
  %126 = vmatprep.subr.mxu0 0.0
  %127 = vmatpush1.msra.mxu0 0.0
  %128 = vmatprep.subr.mxu0 0.0
  %129 = vmatpush1.msra.mxu0 0.0
  %130 = vmatprep.subr.mxu0 0.0
  %131 = vmatpush1.msra.mxu0 0.0
  %132 = vmatprep.subr.mxu0 0.0
  %133 = vmatpush1.msra.mxu0 0.0
  %134 = vmatprep.subr.mxu0 0.0
  %135 = vmatpush1.msra.mxu0 0.0
  %136 = vmatprep.subr.mxu0 0.0
  %137 = vmatpush1.msra.mxu0 0.0
  %138 = vmatprep.subr.mxu0 0.0
  %139 = vmatpush1.msra.mxu0 0.0
  %140 = vmatprep.subr.mxu0 0.0
  %141 = vmatpush1.msra.mxu0 0.0
  %142 = vmatprep.subr.mxu0 0.0
  %143 = vmatpush1.msra.mxu0 0.0
  %144 = vmatprep.subr.mxu0 0.0
  %145 = vmatpush1.msra.mxu0 0.0
  %146 = vmatprep.subr.mxu0 0.0
  %147 = vmatpush1.msra.mxu0 0.0
  %148 = vmatprep.subr.mxu0 0.0
  %149 = vmatpush1.msra.mxu0 0.0
  %150 = vmatprep.subr.mxu0 0.0
  %151 = vmatpush1.msra.mxu0 0.0
  %152 = vmatprep.subr.mxu0 0.0
  %153 = vmatpush1.msra.mxu0 0.0
  %154 = vmatprep.mubr.f32.mxu0 0.0
  %155 = vmatmul.mubr.f32.gmra.mrb[0].mxu0 %v74
  %v156 = vpop.f32.mrb[0].mxu0
  %v157 = vadd.f32 0.0, %v156
  %v158 = vpop.f32.mrb[0].mxu0
  %v159 = vadd.f32 0.0, %v158
  %160 = vdwg.mxu0
  %161 = vmatprep.subr.mxu0 0.0
  %162 = vmatpush1.msra.mxu0 %v21
  %163 = vmatprep.subr.mxu0 0.0
  %164 = vmatpush1.msra.mxu0 %v24
  %165 = vmatprep.subr.mxu0 0.0
  %166 = vmatpush1.msra.mxu0 %v27
  %167 = vmatprep.subr.mxu0 0.0
  %168 = vmatpush1.msra.mxu0 %v30
  %169 = vmatprep.subr.mxu0 0.0
  %170 = vmatpush1.msra.mxu0 %v33
  %171 = vmatprep.subr.mxu0 0.0
  %172 = vmatpush1.msra.mxu0 %v36
  %173 = vmatprep.subr.mxu0 0.0
  %174 = vmatpush1.msra.mxu0 %v39
  %175 = vmatprep.subr.mxu0 0.0
  %176 = vmatpush1.msra.mxu0 %v42
  %177 = vmatprep.subr.mxu0 0.0
  %178 = vmatpush1.msra.mxu0 %v45
  %179 = vmatprep.subr.mxu0 0.0
  %180 = vmatpush1.msra.mxu0 %v48
  %181 = vmatprep.subr.mxu0 0.0
  %182 = vmatpush1.msra.mxu0 %v51
  %183 = vmatprep.subr.mxu0 0.0
  %184 = vmatpush1.msra.mxu0 %v54
  %185 = vmatprep.subr.mxu0 0.0
  %186 = vmatpush1.msra.mxu0 %v57
  %187 = vmatprep.subr.mxu0 0.0
  %188 = vmatpush1.msra.mxu0 %v60
  %189 = vmatprep.subr.mxu0 0.0
  %190 = vmatpush1.msra.mxu0 %v63
  %191 = vmatprep.subr.mxu0 0.0
  %192 = vmatpush1.msra.mxu0 %v66
  %193 = vmatprep.subr.mxu0 0.0
  %194 = vmatpush1.msra.mxu0 0.0
  %195 = vmatprep.subr.mxu0 0.0
  %196 = vmatpush1.msra.mxu0 0.0
  %197 = vmatprep.subr.mxu0 0.0
  %198 = vmatpush1.msra.mxu0 0.0
  %199 = vmatprep.subr.mxu0 0.0
  %200 = vmatpush1.msra.mxu0 0.0
  %201 = vmatprep.subr.mxu0 0.0
  %202 = vmatpush1.msra.mxu0 0.0
  %203 = vmatprep.subr.mxu0 0.0
  %204 = vmatpush1.msra.mxu0 0.0
  %205 = vmatprep.subr.mxu0 0.0
  %206 = vmatpush1.msra.mxu0 0.0
  %207 = vmatprep.subr.mxu0 0.0
  %208 = vmatpush1.msra.mxu0 0.0
  %209 = vmatprep.subr.mxu0 0.0
  %210 = vmatpush1.msra.mxu0 0.0
  %211 = vmatprep.subr.mxu0 0.0
  %212 = vmatpush1.msra.mxu0 0.0
  %213 = vmatprep.subr.mxu0 0.0
  %214 = vmatpush1.msra.mxu0 0.0
  %215 = vmatprep.subr.mxu0 0.0
  %216 = vmatpush1.msra.mxu0 0.0
  %217 = vmatprep.subr.mxu0 0.0
  %218 = vmatpush1.msra.mxu0 0.0
  %219 = vmatprep.subr.mxu0 0.0
  %220 = vmatpush1.msra.mxu0 0.0
  %221 = vmatprep.subr.mxu0 0.0
  %222 = vmatpush1.msra.mxu0 0.0
  %223 = vmatprep.subr.mxu0 0.0
  %224 = vmatpush1.msra.mxu0 0.0
  %225 = vmatprep.mubr.f32.mxu0 0.0
  %226 = vmatmul.mubr.f32.gmra.mrb[0].mxu0 %v74
  %v227 = vpop.f32.mrb[0].mxu0
  %v228 = vadd.f32 0.0, %v227
  %v229 = vpop.f32.mrb[0].mxu0
  %230 = vdwg.mxu0
  %v232 = vcombine.high %v157, %v157
  %v234 = vunpack.c.l.s4 1966171168
  %v235 = vunpack.c.0.s8 %v234
  %v236 = vlaneseq
  %v237 = vshrl.u32 %v236, 7
  %v238 = vsub.s32 %v235, %v237
  %v239 = vrot.slane %v157, %v238
  %v241 = vunpack.c.l.s4 1966171168
  %v242 = vunpack.c.0.s8 %v241
  %v243 = vlaneseq
  %v244 = vshrl.u32 %v243, 7
  %v245 = vsub.s32 %v242, %v244
  %v246 = vrot.slane %v232, %v245
  %v247 = vcombine.high %v239, %v239
  %v248 = vcombine.high %v246, %v246
  %v250 = vunpack.c.l.s4 1966171168
  %v251 = vunpack.c.0.s8 %v250
  %v252 = vlaneseq
  %v253 = vshrl.u32 %v252, 7
  %v254 = vsub.s32 %v251, %v253
  %v255 = vrot.slane %v239, %v254
  %v257 = vunpack.c.l.s4 1966171168
  %v258 = vunpack.c.0.s8 %v257
  %v259 = vlaneseq
  %v260 = vshrl.u32 %v259, 7
  %v261 = vsub.s32 %v258, %v260
  %v262 = vrot.slane %v246, %v261
  %v264 = vunpack.c.l.s4 1966171168
  %v265 = vunpack.c.0.s8 %v264
  %v266 = vlaneseq
  %v267 = vshrl.u32 %v266, 7
  %v268 = vsub.s32 %v265, %v267
  %v269 = vrot.slane %v247, %v268
  %v271 = vunpack.c.l.s4 1966171168
  %v272 = vunpack.c.0.s8 %v271
  %v273 = vlaneseq
  %v274 = vshrl.u32 %v273, 7
  %v275 = vsub.s32 %v272, %v274
  %v276 = vrot.slane %v248, %v275
  %v277 = vcombine.high %v255, %v255
  %v278 = vcombine.high %v262, %v262
  %v279 = vcombine.high %v269, %v269
  %v280 = vcombine.high %v276, %v276
  %v289 = vadd.f32 %v75, %v255
  %v290 = vadd.f32 %v77, %v269
  %v291 = vadd.f32 %v79, %v277
  %v292 = vadd.f32 %v81, %v279
  %v293 = vadd.f32 %v83, %v262
  %v294 = vadd.f32 %v85, %v276
  %v295 = vadd.f32 %v87, %v278
  %v296 = vadd.f32 %v89, %v280
  %v297 = vmul.f32 %v289, 0.5
  %v298 = vmul.f32 %v290, 0.5
  %v299 = vmul.f32 %v291, 0.5
  %v300 = vmul.f32 %v292, 0.5
  %v301 = vmul.f32 %v293, 0.5
  %v302 = vmul.f32 %v294, 0.5
  %v303 = vmul.f32 %v295, 0.5
  %v304 = vmul.f32 %v296, 0.5
  %v305 = vtanh.pop %v297
  %v306 = vtanh.pop %v298
  %v307 = vtanh.pop %v299
  %v308 = vtanh.pop %v300
  %v309 = vtanh.pop %v301
  %v310 = vtanh.pop %v302
  %v311 = vtanh.pop %v303
  %v312 = vtanh.pop %v304
  %v313 = vadd.f32 %v305, 1.0
  %v314 = vadd.f32 %v306, 1.0
  %v315 = vadd.f32 %v307, 1.0
  %v316 = vadd.f32 %v308, 1.0
  %v317 = vadd.f32 %v309, 1.0
  %v318 = vadd.f32 %v310, 1.0
  %v319 = vadd.f32 %v311, 1.0
  %v320 = vadd.f32 %v312, 1.0
  %v321 = vmul.f32 %v313, 0.5
  %v322 = vmul.f32 %v314, 0.5
  %v323 = vmul.f32 %v315, 0.5
  %v324 = vmul.f32 %v316, 0.5
  %v325 = vmul.f32 %v317, 0.5
  %v326 = vmul.f32 %v318, 0.5
  %v327 = vmul.f32 %v319, 0.5
  %v328 = vmul.f32 %v320, 0.5
  %v337 = vrot.slane %v75, 1
  %v338 = vrot.slane %v77, 1
  %v339 = vrot.slane %v79, 1
  %v340 = vrot.slane %v81, 1
  %v341 = vrot.slane %v83, 1
  %v342 = vrot.slane %v85, 1
  %v343 = vrot.slane %v87, 1
  %v344 = vrot.slane %v89, 1
  %v354 = vcombine.high %v159, %v159
  %v356 = vunpack.c.l.s4 1966171168
  %v357 = vunpack.c.0.s8 %v356
  %v358 = vlaneseq
  %v359 = vshrl.u32 %v358, 7
  %v360 = vsub.s32 %v357, %v359
  %v361 = vrot.slane %v159, %v360
  %v363 = vunpack.c.l.s4 1966171168
  %v364 = vunpack.c.0.s8 %v363
  %v365 = vlaneseq
  %v366 = vshrl.u32 %v365, 7
  %v367 = vsub.s32 %v364, %v366
  %v368 = vrot.slane %v354, %v367
  %v369 = vcombine.high %v361, %v361
  %v370 = vcombine.high %v368, %v368
  %v372 = vunpack.c.l.s4 1966171168
  %v373 = vunpack.c.0.s8 %v372
  %v374 = vlaneseq
  %v375 = vshrl.u32 %v374, 7
  %v376 = vsub.s32 %v373, %v375
  %v377 = vrot.slane %v361, %v376
  %v379 = vunpack.c.l.s4 1966171168
  %v380 = vunpack.c.0.s8 %v379
  %v381 = vlaneseq
  %v382 = vshrl.u32 %v381, 7
  %v383 = vsub.s32 %v380, %v382
  %v384 = vrot.slane %v368, %v383
  %v386 = vunpack.c.l.s4 1966171168
  %v387 = vunpack.c.0.s8 %v386
  %v388 = vlaneseq
  %v389 = vshrl.u32 %v388, 7
  %v390 = vsub.s32 %v387, %v389
  %v391 = vrot.slane %v369, %v390
  %v393 = vunpack.c.l.s4 1966171168
  %v394 = vunpack.c.0.s8 %v393
  %v395 = vlaneseq
  %v396 = vshrl.u32 %v395, 7
  %v397 = vsub.s32 %v394, %v396
  %v398 = vrot.slane %v370, %v397
  %v399 = vcombine.high %v377, %v377
  %v400 = vcombine.high %v384, %v384
  %v401 = vcombine.high %v391, %v391
  %v402 = vcombine.high %v398, %v398
  %v411 = vadd.f32 %v337, %v377
  %v412 = vadd.f32 %v338, %v391
  %v413 = vadd.f32 %v339, %v399
  %v414 = vadd.f32 %v340, %v401
  %v415 = vadd.f32 %v341, %v384
  %v416 = vadd.f32 %v342, %v398
  %v417 = vadd.f32 %v343, %v400
  %v418 = vadd.f32 %v344, %v402
  %v419 = vmul.f32 %v411, 0.5
  %v420 = vmul.f32 %v412, 0.5
  %v421 = vmul.f32 %v413, 0.5
  %v422 = vmul.f32 %v414, 0.5
  %v423 = vmul.f32 %v415, 0.5
  %v424 = vmul.f32 %v416, 0.5
  %v425 = vmul.f32 %v417, 0.5
  %v426 = vmul.f32 %v418, 0.5
  %v427 = vtanh.pop %v419
  %v428 = vtanh.pop %v420
  %v429 = vtanh.pop %v421
  %v430 = vtanh.pop %v422
  %v431 = vtanh.pop %v423
  %v432 = vtanh.pop %v424
  %v433 = vtanh.pop %v425
  %v434 = vtanh.pop %v426
  %v435 = vadd.f32 %v427, 1.0
  %v436 = vadd.f32 %v428, 1.0
  %v437 = vadd.f32 %v429, 1.0
  %v438 = vadd.f32 %v430, 1.0
  %v439 = vadd.f32 %v431, 1.0
  %v440 = vadd.f32 %v432, 1.0
  %v441 = vadd.f32 %v433, 1.0
  %v442 = vadd.f32 %v434, 1.0
  %v443 = vmul.f32 %v435, 0.5
  %v444 = vmul.f32 %v436, 0.5
  %v445 = vmul.f32 %v437, 0.5
  %v446 = vmul.f32 %v438, 0.5
  %v447 = vmul.f32 %v439, 0.5
  %v448 = vmul.f32 %v440, 0.5
  %v449 = vmul.f32 %v441, 0.5
  %v450 = vmul.f32 %v442, 0.5
  %v451 = vadd.f32 %v228, %v72
  %v453 = vcombine.high %v451, %v451
  %v455 = vunpack.c.l.s4 1966171168
  %v456 = vunpack.c.0.s8 %v455
  %v457 = vlaneseq
  %v458 = vshrl.u32 %v457, 7
  %v459 = vsub.s32 %v456, %v458
  %v460 = vrot.slane %v451, %v459
  %v462 = vunpack.c.l.s4 1966171168
  %v463 = vunpack.c.0.s8 %v462
  %v464 = vlaneseq
  %v465 = vshrl.u32 %v464, 7
  %v466 = vsub.s32 %v463, %v465
  %v467 = vrot.slane %v453, %v466
  %v468 = vcombine.high %v460, %v460
  %v469 = vcombine.high %v467, %v467
  %v471 = vunpack.c.l.s4 1966171168
  %v472 = vunpack.c.0.s8 %v471
  %v473 = vlaneseq
  %v474 = vshrl.u32 %v473, 7
  %v475 = vsub.s32 %v472, %v474
  %v476 = vrot.slane %v460, %v475
  %v478 = vunpack.c.l.s4 1966171168
  %v479 = vunpack.c.0.s8 %v478
  %v480 = vlaneseq
  %v481 = vshrl.u32 %v480, 7
  %v482 = vsub.s32 %v479, %v481
  %v483 = vrot.slane %v467, %v482
  %v485 = vunpack.c.l.s4 1966171168
  %v486 = vunpack.c.0.s8 %v485
  %v487 = vlaneseq
  %v488 = vshrl.u32 %v487, 7
  %v489 = vsub.s32 %v486, %v488
  %v490 = vrot.slane %v468, %v489
  %v492 = vunpack.c.l.s4 1966171168
  %v493 = vunpack.c.0.s8 %v492
  %v494 = vlaneseq
  %v495 = vshrl.u32 %v494, 7
  %v496 = vsub.s32 %v493, %v495
  %v497 = vrot.slane %v469, %v496
  %v498 = vcombine.high %v476, %v476
  %v499 = vcombine.high %v483, %v483
  %v500 = vcombine.high %v490, %v490
  %v501 = vcombine.high %v497, %v497
  %v510 = vmul.f32 %v321, %v476
  %v511 = vmul.f32 %v322, %v490
  %v512 = vmul.f32 %v323, %v498
  %v513 = vmul.f32 %v324, %v500
  %v514 = vmul.f32 %v325, %v483
  %v515 = vmul.f32 %v326, %v497
  %v516 = vmul.f32 %v327, %v499
  %v517 = vmul.f32 %v328, %v501
  %v518 = vrot.slane %v75, 2
  %v519 = vrot.slane %v77, 2
  %v520 = vrot.slane %v79, 2
  %v521 = vrot.slane %v81, 2
  %v522 = vrot.slane %v83, 2
  %v523 = vrot.slane %v85, 2
  %v524 = vrot.slane %v87, 2
  %v525 = vrot.slane %v89, 2
  %v534 = vadd.f32 %v518, %v510
  %v535 = vadd.f32 %v519, %v511
  %v536 = vadd.f32 %v520, %v512
  %v537 = vadd.f32 %v521, %v513
  %v538 = vadd.f32 %v522, %v514
  %v539 = vadd.f32 %v523, %v515
  %v540 = vadd.f32 %v524, %v516
  %v541 = vadd.f32 %v525, %v517
  %v542 = vtanh.pop %v534
  %v543 = vtanh.pop %v535
  %v544 = vtanh.pop %v536
  %v545 = vtanh.pop %v537
  %v546 = vtanh.pop %v538
  %v547 = vtanh.pop %v539
  %v548 = vtanh.pop %v540
  %v549 = vtanh.pop %v541
  %v550 = vsub.f32 1.0, %v443
  %v551 = vsub.f32 1.0, %v444
  %v552 = vsub.f32 1.0, %v445
  %v553 = vsub.f32 1.0, %v446
  %v554 = vsub.f32 1.0, %v447
  %v555 = vsub.f32 1.0, %v448
  %v556 = vsub.f32 1.0, %v449
  %v557 = vsub.f32 1.0, %v450
  %v558 = vmul.f32 %v550, %v542
  %v559 = vmul.f32 %v551, %v543
  %v560 = vmul.f32 %v552, %v544
  %v561 = vmul.f32 %v553, %v545
  %v562 = vmul.f32 %v554, %v546
  %v563 = vmul.f32 %v555, %v547
  %v564 = vmul.f32 %v556, %v548
  %v565 = vmul.f32 %v557, %v549
  %v567 = vcombine.high %v74, %v74
  %v569 = vunpack.c.l.s4 1966171168
  %v570 = vunpack.c.0.s8 %v569
  %v571 = vlaneseq
  %v572 = vshrl.u32 %v571, 7
  %v573 = vsub.s32 %v570, %v572
  %v574 = vrot.slane %v74, %v573
  %v576 = vunpack.c.l.s4 1966171168
  %v577 = vunpack.c.0.s8 %v576
  %v578 = vlaneseq
  %v579 = vshrl.u32 %v578, 7
  %v580 = vsub.s32 %v577, %v579
  %v581 = vrot.slane %v567, %v580
  %v582 = vcombine.high %v574, %v574
  %v583 = vcombine.high %v581, %v581
  %v585 = vunpack.c.l.s4 1966171168
  %v586 = vunpack.c.0.s8 %v585
  %v587 = vlaneseq
  %v588 = vshrl.u32 %v587, 7
  %v589 = vsub.s32 %v586, %v588
  %v590 = vrot.slane %v574, %v589
  %v592 = vunpack.c.l.s4 1966171168
  %v593 = vunpack.c.0.s8 %v592
  %v594 = vlaneseq
  %v595 = vshrl.u32 %v594, 7
  %v596 = vsub.s32 %v593, %v595
  %v597 = vrot.slane %v581, %v596
  %v599 = vunpack.c.l.s4 1966171168
  %v600 = vunpack.c.0.s8 %v599
  %v601 = vlaneseq
  %v602 = vshrl.u32 %v601, 7
  %v603 = vsub.s32 %v600, %v602
  %v604 = vrot.slane %v582, %v603
  %v606 = vunpack.c.l.s4 1966171168
  %v607 = vunpack.c.0.s8 %v606
  %v608 = vlaneseq
  %v609 = vshrl.u32 %v608, 7
  %v610 = vsub.s32 %v607, %v609
  %v611 = vrot.slane %v583, %v610
  %v612 = vcombine.high %v590, %v590
  %v613 = vcombine.high %v597, %v597
  %v614 = vcombine.high %v604, %v604
  %v615 = vcombine.high %v611, %v611
  %v624 = vmul.f32 %v443, %v590
  %v625 = vmul.f32 %v444, %v604
  %v626 = vmul.f32 %v445, %v612
  %v627 = vmul.f32 %v446, %v614
  %v628 = vmul.f32 %v447, %v597
  %v629 = vmul.f32 %v448, %v611
  %v630 = vmul.f32 %v449, %v613
  %v631 = vmul.f32 %v450, %v615
  %v632 = vadd.f32 %v558, %v624
  %v633 = vadd.f32 %v559, %v625
  %v634 = vadd.f32 %v560, %v626
  %v635 = vadd.f32 %v561, %v627
  %v636 = vadd.f32 %v562, %v628
  %v637 = vadd.f32 %v563, %v629
  %v638 = vadd.f32 %v564, %v630
  %v639 = vadd.f32 %v565, %v631
  %s640 = scalar_lea.vmem %s0, 1
  %v641 = vld [vmem:[%s640] ss:$8 sm:$0x7]
  %s642 = scalar_lea.vmem %s0, 25
  %v643 = vld [vmem:[%s642] ss:$8 sm:$0x7]
  %s644 = scalar_lea.vmem %s0, 49
  %v645 = vld [vmem:[%s644] ss:$8 sm:$0x7]
  %s646 = scalar_lea.vmem %s0, 73
  %v647 = vld [vmem:[%s646] ss:$8 sm:$0x7]
  %s648 = scalar_lea.vmem %s0, 97
  %v649 = vld [vmem:[%s648] ss:$8 sm:$0x7]
  %s650 = scalar_lea.vmem %s0, 121
  %v651 = vld [vmem:[%s650] ss:$8 sm:$0x7]
  %s652 = scalar_lea.vmem %s0, 145
  %v653 = vld [vmem:[%s652] ss:$8 sm:$0x7]
  %s654 = scalar_lea.vmem %s0, 169
  %v655 = vld [vmem:[%s654] ss:$8 sm:$0x7]
  %v664 = vcombine.low %v632, %v633
  %v665 = vcombine.low %v634, %v635
  %v666 = vcombine.low %v636, %v637
  %v667 = vcombine.low %v638, %v639
  %v669 = vunpack.c.l.s4 1966171168
  %v670 = vunpack.c.0.s8 %v669
  %v671 = vlaneseq
  %v672 = vshrl.u32 %v671, 7
  %v673 = vsub.s32 %v670, %v672
  %v674 = vrot.slane %v664, %v673
  %v676 = vunpack.c.l.s4 1966171168
  %v677 = vunpack.c.0.s8 %v676
  %v678 = vlaneseq
  %v679 = vshrl.u32 %v678, 7
  %v680 = vsub.s32 %v677, %v679
  %v681 = vrot.slane %v665, %v680
  %v683 = vunpack.c.l.s4 1966171168
  %v684 = vunpack.c.0.s8 %v683
  %v685 = vlaneseq
  %v686 = vshrl.u32 %v685, 7
  %v687 = vsub.s32 %v684, %v686
  %v688 = vrot.slane %v666, %v687
  %v690 = vunpack.c.l.s4 1966171168
  %v691 = vunpack.c.0.s8 %v690
  %v692 = vlaneseq
  %v693 = vshrl.u32 %v692, 7
  %v694 = vsub.s32 %v691, %v693
  %v695 = vrot.slane %v667, %v694
  %v696 = vcombine.low %v674, %v681
  %v697 = vcombine.low %v688, %v695
  %v699 = vunpack.c.l.s4 1966171168
  %v700 = vunpack.c.0.s8 %v699
  %v701 = vlaneseq
  %v702 = vshrl.u32 %v701, 7
  %v703 = vsub.s32 %v700, %v702
  %v704 = vrot.slane %v696, %v703
  %v706 = vunpack.c.l.s4 1966171168
  %v707 = vunpack.c.0.s8 %v706
  %v708 = vlaneseq
  %v709 = vshrl.u32 %v708, 7
  %v710 = vsub.s32 %v707, %v709
  %v711 = vrot.slane %v697, %v710
  %v712 = vcombine.low %v704, %v711
  %714 = vmatprep.subr.mxu0 %v20
  %715 = vmatpush1.msra.mxu0 %v19
  %716 = vmatprep.subr.mxu0 %v23
  %717 = vmatpush1.msra.mxu0 %v22
  %718 = vmatprep.subr.mxu0 %v26
  %719 = vmatpush1.msra.mxu0 %v25
  %720 = vmatprep.subr.mxu0 %v29
  %721 = vmatpush1.msra.mxu0 %v28
  %722 = vmatprep.subr.mxu0 %v32
  %723 = vmatpush1.msra.mxu0 %v31
  %724 = vmatprep.subr.mxu0 %v35
  %725 = vmatpush1.msra.mxu0 %v34
  %726 = vmatprep.subr.mxu0 %v38
  %727 = vmatpush1.msra.mxu0 %v37
  %728 = vmatprep.subr.mxu0 %v41
  %729 = vmatpush1.msra.mxu0 %v40
  %730 = vmatprep.subr.mxu0 %v44
  %731 = vmatpush1.msra.mxu0 %v43
  %732 = vmatprep.subr.mxu0 %v47
  %733 = vmatpush1.msra.mxu0 %v46
  %734 = vmatprep.subr.mxu0 %v50
  %735 = vmatpush1.msra.mxu0 %v49
  %736 = vmatprep.subr.mxu0 %v53
  %737 = vmatpush1.msra.mxu0 %v52
  %738 = vmatprep.subr.mxu0 %v56
  %739 = vmatpush1.msra.mxu0 %v55
  %740 = vmatprep.subr.mxu0 %v59
  %741 = vmatpush1.msra.mxu0 %v58
  %742 = vmatprep.subr.mxu0 %v62
  %743 = vmatpush1.msra.mxu0 %v61
  %744 = vmatprep.subr.mxu0 %v65
  %745 = vmatpush1.msra.mxu0 %v64
  %746 = vmatprep.subr.mxu0 0.0
  %747 = vmatpush1.msra.mxu0 0.0
  %748 = vmatprep.subr.mxu0 0.0
  %749 = vmatpush1.msra.mxu0 0.0
  %750 = vmatprep.subr.mxu0 0.0
  %751 = vmatpush1.msra.mxu0 0.0
  %752 = vmatprep.subr.mxu0 0.0
  %753 = vmatpush1.msra.mxu0 0.0
  %754 = vmatprep.subr.mxu0 0.0
  %755 = vmatpush1.msra.mxu0 0.0
  %756 = vmatprep.subr.mxu0 0.0
  %757 = vmatpush1.msra.mxu0 0.0
  %758 = vmatprep.subr.mxu0 0.0
  %759 = vmatpush1.msra.mxu0 0.0
  %760 = vmatprep.subr.mxu0 0.0
  %761 = vmatpush1.msra.mxu0 0.0
  %762 = vmatprep.subr.mxu0 0.0
  %763 = vmatpush1.msra.mxu0 0.0
  %764 = vmatprep.subr.mxu0 0.0
  %765 = vmatpush1.msra.mxu0 0.0
  %766 = vmatprep.subr.mxu0 0.0
  %767 = vmatpush1.msra.mxu0 0.0
  %768 = vmatprep.subr.mxu0 0.0
  %769 = vmatpush1.msra.mxu0 0.0
  %770 = vmatprep.subr.mxu0 0.0
  %771 = vmatpush1.msra.mxu0 0.0
  %772 = vmatprep.subr.mxu0 0.0
  %773 = vmatpush1.msra.mxu0 0.0
  %774 = vmatprep.subr.mxu0 0.0
  %775 = vmatpush1.msra.mxu0 0.0
  %776 = vmatprep.subr.mxu0 0.0
  %777 = vmatpush1.msra.mxu0 0.0
  %778 = vmatprep.mubr.f32.mxu0 0.0
  %779 = vmatmul.mubr.f32.gmra.mrb[0].mxu0 %v712
  %v780 = vpop.f32.mrb[0].mxu0
  %v781 = vadd.f32 0.0, %v780
  %v782 = vpop.f32.mrb[0].mxu0
  %v783 = vadd.f32 0.0, %v782
  %784 = vdwg.mxu0
  %785 = vmatprep.subr.mxu0 0.0
  %786 = vmatpush1.msra.mxu0 %v21
  %787 = vmatprep.subr.mxu0 0.0
  %788 = vmatpush1.msra.mxu0 %v24
  %789 = vmatprep.subr.mxu0 0.0
  %790 = vmatpush1.msra.mxu0 %v27
  %791 = vmatprep.subr.mxu0 0.0
  %792 = vmatpush1.msra.mxu0 %v30
  %793 = vmatprep.subr.mxu0 0.0
  %794 = vmatpush1.msra.mxu0 %v33
  %795 = vmatprep.subr.mxu0 0.0
  %796 = vmatpush1.msra.mxu0 %v36
  %797 = vmatprep.subr.mxu0 0.0
  %798 = vmatpush1.msra.mxu0 %v39
  %799 = vmatprep.subr.mxu0 0.0
  %800 = vmatpush1.msra.mxu0 %v42
  %801 = vmatprep.subr.mxu0 0.0
  %802 = vmatpush1.msra.mxu0 %v45
  %803 = vmatprep.subr.mxu0 0.0
  %804 = vmatpush1.msra.mxu0 %v48
  %805 = vmatprep.subr.mxu0 0.0
  %806 = vmatpush1.msra.mxu0 %v51
  %807 = vmatprep.subr.mxu0 0.0
  %808 = vmatpush1.msra.mxu0 %v54
  %809 = vmatprep.subr.mxu0 0.0
  %810 = vmatpush1.msra.mxu0 %v57
  %811 = vmatprep.subr.mxu0 0.0
  %812 = vmatpush1.msra.mxu0 %v60
  %813 = vmatprep.subr.mxu0 0.0
  %814 = vmatpush1.msra.mxu0 %v63
  %815 = vmatprep.subr.mxu0 0.0
  %816 = vmatpush1.msra.mxu0 %v66
  %817 = vmatprep.subr.mxu0 0.0
  %818 = vmatpush1.msra.mxu0 0.0
  %819 = vmatprep.subr.mxu0 0.0
  %820 = vmatpush1.msra.mxu0 0.0
  %821 = vmatprep.subr.mxu0 0.0
  %822 = vmatpush1.msra.mxu0 0.0
  %823 = vmatprep.subr.mxu0 0.0
  %824 = vmatpush1.msra.mxu0 0.0
  %825 = vmatprep.subr.mxu0 0.0
  %826 = vmatpush1.msra.mxu0 0.0
  %827 = vmatprep.subr.mxu0 0.0
  %828 = vmatpush1.msra.mxu0 0.0
  %829 = vmatprep.subr.mxu0 0.0
  %830 = vmatpush1.msra.mxu0 0.0
  %831 = vmatprep.subr.mxu0 0.0
  %832 = vmatpush1.msra.mxu0 0.0
  %833 = vmatprep.subr.mxu0 0.0
  %834 = vmatpush1.msra.mxu0 0.0
  %835 = vmatprep.subr.mxu0 0.0
  %836 = vmatpush1.msra.mxu0 0.0
  %837 = vmatprep.subr.mxu0 0.0
  %838 = vmatpush1.msra.mxu0 0.0
  %839 = vmatprep.subr.mxu0 0.0
  %840 = vmatpush1.msra.mxu0 0.0
  %841 = vmatprep.subr.mxu0 0.0
  %842 = vmatpush1.msra.mxu0 0.0
  %843 = vmatprep.subr.mxu0 0.0
  %844 = vmatpush1.msra.mxu0 0.0
  %845 = vmatprep.subr.mxu0 0.0
  %846 = vmatpush1.msra.mxu0 0.0
  %847 = vmatprep.subr.mxu0 0.0
  %848 = vmatpush1.msra.mxu0 0.0
  %849 = vmatprep.mubr.f32.mxu0 0.0
  %850 = vmatmul.mubr.f32.gmra.mrb[0].mxu0 %v712
  %v851 = vpop.f32.mrb[0].mxu0
  %v852 = vadd.f32 0.0, %v851
  %v853 = vpop.f32.mrb[0].mxu0
  %854 = vdwg.mxu0
  %v856 = vcombine.high %v781, %v781
  %v858 = vunpack.c.l.s4 1966171168
  %v859 = vunpack.c.0.s8 %v858
  %v860 = vlaneseq
  %v861 = vshrl.u32 %v860, 7
  %v862 = vsub.s32 %v859, %v861
  %v863 = vrot.slane %v781, %v862
  %v865 = vunpack.c.l.s4 1966171168
  %v866 = vunpack.c.0.s8 %v865
  %v867 = vlaneseq
  %v868 = vshrl.u32 %v867, 7
  %v869 = vsub.s32 %v866, %v868
  %v870 = vrot.slane %v856, %v869
  %v871 = vcombine.high %v863, %v863
  %v872 = vcombine.high %v870, %v870
  %v874 = vunpack.c.l.s4 1966171168
  %v875 = vunpack.c.0.s8 %v874
  %v876 = vlaneseq
  %v877 = vshrl.u32 %v876, 7
  %v878 = vsub.s32 %v875, %v877
  %v879 = vrot.slane %v863, %v878
  %v881 = vunpack.c.l.s4 1966171168
  %v882 = vunpack.c.0.s8 %v881
  %v883 = vlaneseq
  %v884 = vshrl.u32 %v883, 7
  %v885 = vsub.s32 %v882, %v884
  %v886 = vrot.slane %v870, %v885
  %v888 = vunpack.c.l.s4 1966171168
  %v889 = vunpack.c.0.s8 %v888
  %v890 = vlaneseq
  %v891 = vshrl.u32 %v890, 7
  %v892 = vsub.s32 %v889, %v891
  %v893 = vrot.slane %v871, %v892
  %v895 = vunpack.c.l.s4 1966171168
  %v896 = vunpack.c.0.s8 %v895
  %v897 = vlaneseq
  %v898 = vshrl.u32 %v897, 7
  %v899 = vsub.s32 %v896, %v898
  %v900 = vrot.slane %v872, %v899
  %v901 = vcombine.high %v879, %v879
  %v902 = vcombine.high %v886, %v886
  %v903 = vcombine.high %v893, %v893
  %v904 = vcombine.high %v900, %v900
  %v913 = vadd.f32 %v641, %v879
  %v914 = vadd.f32 %v643, %v893
  %v915 = vadd.f32 %v645, %v901
  %v916 = vadd.f32 %v647, %v903
  %v917 = vadd.f32 %v649, %v886
  %v918 = vadd.f32 %v651, %v900
  %v919 = vadd.f32 %v653, %v902
  %v920 = vadd.f32 %v655, %v904
  %v921 = vmul.f32 %v913, 0.5
  %v922 = vmul.f32 %v914, 0.5
  %v923 = vmul.f32 %v915, 0.5
  %v924 = vmul.f32 %v916, 0.5
  %v925 = vmul.f32 %v917, 0.5
  %v926 = vmul.f32 %v918, 0.5
  %v927 = vmul.f32 %v919, 0.5
  %v928 = vmul.f32 %v920, 0.5
  %v929 = vtanh.pop %v921
  %v930 = vtanh.pop %v922
  %v931 = vtanh.pop %v923
  %v932 = vtanh.pop %v924
  %v933 = vtanh.pop %v925
  %v934 = vtanh.pop %v926
  %v935 = vtanh.pop %v927
  %v936 = vtanh.pop %v928
  %v937 = vadd.f32 %v929, 1.0
  %v938 = vadd.f32 %v930, 1.0
  %v939 = vadd.f32 %v931, 1.0
  %v940 = vadd.f32 %v932, 1.0
  %v941 = vadd.f32 %v933, 1.0
  %v942 = vadd.f32 %v934, 1.0
  %v943 = vadd.f32 %v935, 1.0
  %v944 = vadd.f32 %v936, 1.0
  %v945 = vmul.f32 %v937, 0.5
  %v946 = vmul.f32 %v938, 0.5
  %v947 = vmul.f32 %v939, 0.5
  %v948 = vmul.f32 %v940, 0.5
  %v949 = vmul.f32 %v941, 0.5
  %v950 = vmul.f32 %v942, 0.5
  %v951 = vmul.f32 %v943, 0.5
  %v952 = vmul.f32 %v944, 0.5
  %v961 = vrot.slane %v641, 1
  %v962 = vrot.slane %v643, 1
  %v963 = vrot.slane %v645, 1
  %v964 = vrot.slane %v647, 1
  %v965 = vrot.slane %v649, 1
  %v966 = vrot.slane %v651, 1
  %v967 = vrot.slane %v653, 1
  %v968 = vrot.slane %v655, 1
  %v978 = vcombine.high %v783, %v783
  %v980 = vunpack.c.l.s4 1966171168
  %v981 = vunpack.c.0.s8 %v980
  %v982 = vlaneseq
  %v983 = vshrl.u32 %v982, 7
  %v984 = vsub.s32 %v981, %v983
  %v985 = vrot.slane %v783, %v984
  %v987 = vunpack.c.l.s4 1966171168
  %v988 = vunpack.c.0.s8 %v987
  %v989 = vlaneseq
  %v990 = vshrl.u32 %v989, 7
  %v991 = vsub.s32 %v988, %v990
  %v992 = vrot.slane %v978, %v991
  %v993 = vcombine.high %v985, %v985
  %v994 = vcombine.high %v992, %v992
  %v996 = vunpack.c.l.s4 1966171168
  %v997 = vunpack.c.0.s8 %v996
  %v998 = vlaneseq
  %v999 = vshrl.u32 %v998, 7
  %v1000 = vsub.s32 %v997, %v999
  %v1001 = vrot.slane %v985, %v1000
  %v1003 = vunpack.c.l.s4 1966171168
  %v1004 = vunpack.c.0.s8 %v1003
  %v1005 = vlaneseq
  %v1006 = vshrl.u32 %v1005, 7
  %v1007 = vsub.s32 %v1004, %v1006
  %v1008 = vrot.slane %v992, %v1007
  %v1010 = vunpack.c.l.s4 1966171168
  %v1011 = vunpack.c.0.s8 %v1010
  %v1012 = vlaneseq
  %v1013 = vshrl.u32 %v1012, 7
  %v1014 = vsub.s32 %v1011, %v1013
  %v1015 = vrot.slane %v993, %v1014
  %v1017 = vunpack.c.l.s4 1966171168
  %v1018 = vunpack.c.0.s8 %v1017
  %v1019 = vlaneseq
  %v1020 = vshrl.u32 %v1019, 7
  %v1021 = vsub.s32 %v1018, %v1020
  %v1022 = vrot.slane %v994, %v1021
  %v1023 = vcombine.high %v1001, %v1001
  %v1024 = vcombine.high %v1008, %v1008
  %v1025 = vcombine.high %v1015, %v1015
  %v1026 = vcombine.high %v1022, %v1022
  %v1035 = vadd.f32 %v961, %v1001
  %v1036 = vadd.f32 %v962, %v1015
  %v1037 = vadd.f32 %v963, %v1023
  %v1038 = vadd.f32 %v964, %v1025
  %v1039 = vadd.f32 %v965, %v1008
  %v1040 = vadd.f32 %v966, %v1022
  %v1041 = vadd.f32 %v967, %v1024
  %v1042 = vadd.f32 %v968, %v1026
  %v1043 = vmul.f32 %v1035, 0.5
  %v1044 = vmul.f32 %v1036, 0.5
  %v1045 = vmul.f32 %v1037, 0.5
  %v1046 = vmul.f32 %v1038, 0.5
  %v1047 = vmul.f32 %v1039, 0.5
  %v1048 = vmul.f32 %v1040, 0.5
  %v1049 = vmul.f32 %v1041, 0.5
  %v1050 = vmul.f32 %v1042, 0.5
  %v1051 = vtanh.pop %v1043
  %v1052 = vtanh.pop %v1044
  %v1053 = vtanh.pop %v1045
  %v1054 = vtanh.pop %v1046
  %v1055 = vtanh.pop %v1047
  %v1056 = vtanh.pop %v1048
  %v1057 = vtanh.pop %v1049
  %v1058 = vtanh.pop %v1050
  %v1059 = vadd.f32 %v1051, 1.0
  %v1060 = vadd.f32 %v1052, 1.0
  %v1061 = vadd.f32 %v1053, 1.0
  %v1062 = vadd.f32 %v1054, 1.0
  %v1063 = vadd.f32 %v1055, 1.0
  %v1064 = vadd.f32 %v1056, 1.0
  %v1065 = vadd.f32 %v1057, 1.0
  %v1066 = vadd.f32 %v1058, 1.0
  %v1067 = vmul.f32 %v1059, 0.5
  %v1068 = vmul.f32 %v1060, 0.5
  %v1069 = vmul.f32 %v1061, 0.5
  %v1070 = vmul.f32 %v1062, 0.5
  %v1071 = vmul.f32 %v1063, 0.5
  %v1072 = vmul.f32 %v1064, 0.5
  %v1073 = vmul.f32 %v1065, 0.5
  %v1074 = vmul.f32 %v1066, 0.5
  %v1075 = vadd.f32 %v852, %v72
  %v1077 = vcombine.high %v1075, %v1075
  %v1079 = vunpack.c.l.s4 1966171168
  %v1080 = vunpack.c.0.s8 %v1079
  %v1081 = vlaneseq
  %v1082 = vshrl.u32 %v1081, 7
  %v1083 = vsub.s32 %v1080, %v1082
  %v1084 = vrot.slane %v1075, %v1083
  %v1086 = vunpack.c.l.s4 1966171168
  %v1087 = vunpack.c.0.s8 %v1086
  %v1088 = vlaneseq
  %v1089 = vshrl.u32 %v1088, 7
  %v1090 = vsub.s32 %v1087, %v1089
  %v1091 = vrot.slane %v1077, %v1090
  %v1092 = vcombine.high %v1084, %v1084
  %v1093 = vcombine.high %v1091, %v1091
  %v1095 = vunpack.c.l.s4 1966171168
  %v1096 = vunpack.c.0.s8 %v1095
  %v1097 = vlaneseq
  %v1098 = vshrl.u32 %v1097, 7
  %v1099 = vsub.s32 %v1096, %v1098
  %v1100 = vrot.slane %v1084, %v1099
  %v1102 = vunpack.c.l.s4 1966171168
  %v1103 = vunpack.c.0.s8 %v1102
  %v1104 = vlaneseq
  %v1105 = vshrl.u32 %v1104, 7
  %v1106 = vsub.s32 %v1103, %v1105
  %v1107 = vrot.slane %v1091, %v1106
  %v1109 = vunpack.c.l.s4 1966171168
  %v1110 = vunpack.c.0.s8 %v1109
  %v1111 = vlaneseq
  %v1112 = vshrl.u32 %v1111, 7
  %v1113 = vsub.s32 %v1110, %v1112
  %v1114 = vrot.slane %v1092, %v1113
  %v1116 = vunpack.c.l.s4 1966171168
  %v1117 = vunpack.c.0.s8 %v1116
  %v1118 = vlaneseq
  %v1119 = vshrl.u32 %v1118, 7
  %v1120 = vsub.s32 %v1117, %v1119
  %v1121 = vrot.slane %v1093, %v1120
  %v1122 = vcombine.high %v1100, %v1100
  %v1123 = vcombine.high %v1107, %v1107
  %v1124 = vcombine.high %v1114, %v1114
  %v1125 = vcombine.high %v1121, %v1121
  %v1134 = vmul.f32 %v945, %v1100
  %v1135 = vmul.f32 %v946, %v1114
  %v1136 = vmul.f32 %v947, %v1122
  %v1137 = vmul.f32 %v948, %v1124
  %v1138 = vmul.f32 %v949, %v1107
  %v1139 = vmul.f32 %v950, %v1121
  %v1140 = vmul.f32 %v951, %v1123
  %v1141 = vmul.f32 %v952, %v1125
  %v1142 = vrot.slane %v641, 2
  %v1143 = vrot.slane %v643, 2
  %v1144 = vrot.slane %v645, 2
  %v1145 = vrot.slane %v647, 2
  %v1146 = vrot.slane %v649, 2
  %v1147 = vrot.slane %v651, 2
  %v1148 = vrot.slane %v653, 2
  %v1149 = vrot.slane %v655, 2
  %v1158 = vadd.f32 %v1142, %v1134
  %v1159 = vadd.f32 %v1143, %v1135
  %v1160 = vadd.f32 %v1144, %v1136
  %v1161 = vadd.f32 %v1145, %v1137
  %v1162 = vadd.f32 %v1146, %v1138
  %v1163 = vadd.f32 %v1147, %v1139
  %v1164 = vadd.f32 %v1148, %v1140
  %v1165 = vadd.f32 %v1149, %v1141
  %v1166 = vtanh.pop %v1158
  %v1167 = vtanh.pop %v1159
  %v1168 = vtanh.pop %v1160
  %v1169 = vtanh.pop %v1161
  %v1170 = vtanh.pop %v1162
  %v1171 = vtanh.pop %v1163
  %v1172 = vtanh.pop %v1164
  %v1173 = vtanh.pop %v1165
  %v1174 = vsub.f32 1.0, %v1067
  %v1175 = vsub.f32 1.0, %v1068
  %v1176 = vsub.f32 1.0, %v1069
  %v1177 = vsub.f32 1.0, %v1070
  %v1178 = vsub.f32 1.0, %v1071
  %v1179 = vsub.f32 1.0, %v1072
  %v1180 = vsub.f32 1.0, %v1073
  %v1181 = vsub.f32 1.0, %v1074
  %v1182 = vmul.f32 %v1174, %v1166
  %v1183 = vmul.f32 %v1175, %v1167
  %v1184 = vmul.f32 %v1176, %v1168
  %v1185 = vmul.f32 %v1177, %v1169
  %v1186 = vmul.f32 %v1178, %v1170
  %v1187 = vmul.f32 %v1179, %v1171
  %v1188 = vmul.f32 %v1180, %v1172
  %v1189 = vmul.f32 %v1181, %v1173
  %v1190 = vmul.f32 %v1067, %v632
  %v1191 = vmul.f32 %v1068, %v633
  %v1192 = vmul.f32 %v1069, %v634
  %v1193 = vmul.f32 %v1070, %v635
  %v1194 = vmul.f32 %v1071, %v636
  %v1195 = vmul.f32 %v1072, %v637
  %v1196 = vmul.f32 %v1073, %v638
  %v1197 = vmul.f32 %v1074, %v639
  %v1198 = vadd.f32 %v1182, %v1190
  %v1199 = vadd.f32 %v1183, %v1191
  %v1200 = vadd.f32 %v1184, %v1192
  %v1201 = vadd.f32 %v1185, %v1193
  %v1202 = vadd.f32 %v1186, %v1194
  %v1203 = vadd.f32 %v1187, %v1195
  %v1204 = vadd.f32 %v1188, %v1196
  %v1205 = vadd.f32 %v1189, %v1197
  %s1206 = scalar_lea.vmem %s0, 2
  %v1207 = vld [vmem:[%s1206] ss:$8 sm:$0x7]
  %s1208 = scalar_lea.vmem %s0, 26
  %v1209 = vld [vmem:[%s1208] ss:$8 sm:$0x7]
  %s1210 = scalar_lea.vmem %s0, 50
  %v1211 = vld [vmem:[%s1210] ss:$8 sm:$0x7]
  %s1212 = scalar_lea.vmem %s0, 74
  %v1213 = vld [vmem:[%s1212] ss:$8 sm:$0x7]
  %s1214 = scalar_lea.vmem %s0, 98
  %v1215 = vld [vmem:[%s1214] ss:$8 sm:$0x7]
  %s1216 = scalar_lea.vmem %s0, 122
  %v1217 = vld [vmem:[%s1216] ss:$8 sm:$0x7]
  %s1218 = scalar_lea.vmem %s0, 146
  %v1219 = vld [vmem:[%s1218] ss:$8 sm:$0x7]
  %s1220 = scalar_lea.vmem %s0, 170
  %v1221 = vld [vmem:[%s1220] ss:$8 sm:$0x7]
  %v1230 = vcombine.low %v1198, %v1199
  %v1231 = vcombine.low %v1200, %v1201
  %v1232 = vcombine.low %v1202, %v1203
  %v1233 = vcombine.low %v1204, %v1205
  %v1235 = vunpack.c.l.s4 1966171168
  %v1236 = vunpack.c.0.s8 %v1235
  %v1237 = vlaneseq
  %v1238 = vshrl.u32 %v1237, 7
  %v1239 = vsub.s32 %v1236, %v1238
  %v1240 = vrot.slane %v1230, %v1239
  %v1242 = vunpack.c.l.s4 1966171168
  %v1243 = vunpack.c.0.s8 %v1242
  %v1244 = vlaneseq
  %v1245 = vshrl.u32 %v1244, 7
  %v1246 = vsub.s32 %v1243, %v1245
  %v1247 = vrot.slane %v1231, %v1246
  %v1249 = vunpack.c.l.s4 1966171168
  %v1250 = vunpack.c.0.s8 %v1249
  %v1251 = vlaneseq
  %v1252 = vshrl.u32 %v1251, 7
  %v1253 = vsub.s32 %v1250, %v1252
  %v1254 = vrot.slane %v1232, %v1253
  %v1256 = vunpack.c.l.s4 1966171168
  %v1257 = vunpack.c.0.s8 %v1256
  %v1258 = vlaneseq
  %v1259 = vshrl.u32 %v1258, 7
  %v1260 = vsub.s32 %v1257, %v1259
  %v1261 = vrot.slane %v1233, %v1260
  %v1262 = vcombine.low %v1240, %v1247
  %v1263 = vcombine.low %v1254, %v1261
  %v1265 = vunpack.c.l.s4 1966171168
  %v1266 = vunpack.c.0.s8 %v1265
  %v1267 = vlaneseq
  %v1268 = vshrl.u32 %v1267, 7
  %v1269 = vsub.s32 %v1266, %v1268
  %v1270 = vrot.slane %v1262, %v1269
  %v1272 = vunpack.c.l.s4 1966171168
  %v1273 = vunpack.c.0.s8 %v1272
  %v1274 = vlaneseq
  %v1275 = vshrl.u32 %v1274, 7
  %v1276 = vsub.s32 %v1273, %v1275
  %v1277 = vrot.slane %v1263, %v1276
  %v1278 = vcombine.low %v1270, %v1277
  %1280 = vmatprep.subr.mxu0 %v20
  %1281 = vmatpush1.msra.mxu0 %v19
  %1282 = vmatprep.subr.mxu0 %v23
  %1283 = vmatpush1.msra.mxu0 %v22
  %1284 = vmatprep.subr.mxu0 %v26
  %1285 = vmatpush1.msra.mxu0 %v25
  %1286 = vmatprep.subr.mxu0 %v29
  %1287 = vmatpush1.msra.mxu0 %v28
  %1288 = vmatprep.subr.mxu0 %v32
  %1289 = vmatpush1.msra.mxu0 %v31
  %1290 = vmatprep.subr.mxu0 %v35
  %1291 = vmatpush1.msra.mxu0 %v34
  %1292 = vmatprep.subr.mxu0 %v38
  %1293 = vmatpush1.msra.mxu0 %v37
  %1294 = vmatprep.subr.mxu0 %v41
  %1295 = vmatpush1.msra.mxu0 %v40
  %1296 = vmatprep.subr.mxu0 %v44
  %1297 = vmatpush1.msra.mxu0 %v43
  %1298 = vmatprep.subr.mxu0 %v47
  %1299 = vmatpush1.msra.mxu0 %v46
  %1300 = vmatprep.subr.mxu0 %v50
  %1301 = vmatpush1.msra.mxu0 %v49
  %1302 = vmatprep.subr.mxu0 %v53
  %1303 = vmatpush1.msra.mxu0 %v52
  %1304 = vmatprep.subr.mxu0 %v56
  %1305 = vmatpush1.msra.mxu0 %v55
  %1306 = vmatprep.subr.mxu0 %v59
  %1307 = vmatpush1.msra.mxu0 %v58
  %1308 = vmatprep.subr.mxu0 %v62
  %1309 = vmatpush1.msra.mxu0 %v61
  %1310 = vmatprep.subr.mxu0 %v65
  %1311 = vmatpush1.msra.mxu0 %v64
  %1312 = vmatprep.subr.mxu0 0.0
  %1313 = vmatpush1.msra.mxu0 0.0
  %1314 = vmatprep.subr.mxu0 0.0
  %1315 = vmatpush1.msra.mxu0 0.0
  %1316 = vmatprep.subr.mxu0 0.0
  %1317 = vmatpush1.msra.mxu0 0.0
  %1318 = vmatprep.subr.mxu0 0.0
  %1319 = vmatpush1.msra.mxu0 0.0
  %1320 = vmatprep.subr.mxu0 0.0
  %1321 = vmatpush1.msra.mxu0 0.0
  %1322 = vmatprep.subr.mxu0 0.0
  %1323 = vmatpush1.msra.mxu0 0.0
  %1324 = vmatprep.subr.mxu0 0.0
  %1325 = vmatpush1.msra.mxu0 0.0
  %1326 = vmatprep.subr.mxu0 0.0
  %1327 = vmatpush1.msra.mxu0 0.0
  %1328 = vmatprep.subr.mxu0 0.0
  %1329 = vmatpush1.msra.mxu0 0.0
  %1330 = vmatprep.subr.mxu0 0.0
  %1331 = vmatpush1.msra.mxu0 0.0
  %1332 = vmatprep.subr.mxu0 0.0
  %1333 = vmatpush1.msra.mxu0 0.0
  %1334 = vmatprep.subr.mxu0 0.0
  %1335 = vmatpush1.msra.mxu0 0.0
  %1336 = vmatprep.subr.mxu0 0.0
  %1337 = vmatpush1.msra.mxu0 0.0
  %1338 = vmatprep.subr.mxu0 0.0
  %1339 = vmatpush1.msra.mxu0 0.0
  %1340 = vmatprep.subr.mxu0 0.0
  %1341 = vmatpush1.msra.mxu0 0.0
  %1342 = vmatprep.subr.mxu0 0.0
  %1343 = vmatpush1.msra.mxu0 0.0
  %1344 = vmatprep.mubr.f32.mxu0 0.0
  %1345 = vmatmul.mubr.f32.gmra.mrb[0].mxu0 %v1278
  %v1346 = vpop.f32.mrb[0].mxu0
  %v1347 = vadd.f32 0.0, %v1346
  %v1348 = vpop.f32.mrb[0].mxu0
  %v1349 = vadd.f32 0.0, %v1348
  %1350 = vdwg.mxu0
  %1351 = vmatprep.subr.mxu0 0.0
  %1352 = vmatpush1.msra.mxu0 %v21
  %1353 = vmatprep.subr.mxu0 0.0
  %1354 = vmatpush1.msra.mxu0 %v24
  %1355 = vmatprep.subr.mxu0 0.0
  %1356 = vmatpush1.msra.mxu0 %v27
  %1357 = vmatprep.subr.mxu0 0.0
  %1358 = vmatpush1.msra.mxu0 %v30
  %1359 = vmatprep.subr.mxu0 0.0
  %1360 = vmatpush1.msra.mxu0 %v33
  %1361 = vmatprep.subr.mxu0 0.0
  %1362 = vmatpush1.msra.mxu0 %v36
  %1363 = vmatprep.subr.mxu0 0.0
  %1364 = vmatpush1.msra.mxu0 %v39
  %1365 = vmatprep.subr.mxu0 0.0
  %1366 = vmatpush1.msra.mxu0 %v42
  %1367 = vmatprep.subr.mxu0 0.0
  %1368 = vmatpush1.msra.mxu0 %v45
  %1369 = vmatprep.subr.mxu0 0.0
  %1370 = vmatpush1.msra.mxu0 %v48
  %1371 = vmatprep.subr.mxu0 0.0
  %1372 = vmatpush1.msra.mxu0 %v51
  %1373 = vmatprep.subr.mxu0 0.0
  %1374 = vmatpush1.msra.mxu0 %v54
  %1375 = vmatprep.subr.mxu0 0.0
  %1376 = vmatpush1.msra.mxu0 %v57
  %1377 = vmatprep.subr.mxu0 0.0
  %1378 = vmatpush1.msra.mxu0 %v60
  %1379 = vmatprep.subr.mxu0 0.0
  %1380 = vmatpush1.msra.mxu0 %v63
  %1381 = vmatprep.subr.mxu0 0.0
  %1382 = vmatpush1.msra.mxu0 %v66
  %1383 = vmatprep.subr.mxu0 0.0
  %1384 = vmatpush1.msra.mxu0 0.0
  %1385 = vmatprep.subr.mxu0 0.0
  %1386 = vmatpush1.msra.mxu0 0.0
  %1387 = vmatprep.subr.mxu0 0.0
  %1388 = vmatpush1.msra.mxu0 0.0
  %1389 = vmatprep.subr.mxu0 0.0
  %1390 = vmatpush1.msra.mxu0 0.0
  %1391 = vmatprep.subr.mxu0 0.0
  %1392 = vmatpush1.msra.mxu0 0.0
  %1393 = vmatprep.subr.mxu0 0.0
  %1394 = vmatpush1.msra.mxu0 0.0
  %1395 = vmatprep.subr.mxu0 0.0
  %1396 = vmatpush1.msra.mxu0 0.0
  %1397 = vmatprep.subr.mxu0 0.0
  %1398 = vmatpush1.msra.mxu0 0.0
  %1399 = vmatprep.subr.mxu0 0.0
  %1400 = vmatpush1.msra.mxu0 0.0
  %1401 = vmatprep.subr.mxu0 0.0
  %1402 = vmatpush1.msra.mxu0 0.0
  %1403 = vmatprep.subr.mxu0 0.0
  %1404 = vmatpush1.msra.mxu0 0.0
  %1405 = vmatprep.subr.mxu0 0.0
  %1406 = vmatpush1.msra.mxu0 0.0
  %1407 = vmatprep.subr.mxu0 0.0
  %1408 = vmatpush1.msra.mxu0 0.0
  %1409 = vmatprep.subr.mxu0 0.0
  %1410 = vmatpush1.msra.mxu0 0.0
  %1411 = vmatprep.subr.mxu0 0.0
  %1412 = vmatpush1.msra.mxu0 0.0
  %1413 = vmatprep.subr.mxu0 0.0
  %1414 = vmatpush1.msra.mxu0 0.0
  %1415 = vmatprep.mubr.f32.mxu0 0.0
  %1416 = vmatmul.mubr.f32.gmra.mrb[0].mxu0 %v1278
  %v1417 = vpop.f32.mrb[0].mxu0
  %v1418 = vadd.f32 0.0, %v1417
  %v1419 = vpop.f32.mrb[0].mxu0
  %1420 = vdwg.mxu0
  %v1422 = vcombine.high %v1347, %v1347
  %v1424 = vunpack.c.l.s4 1966171168
  %v1425 = vunpack.c.0.s8 %v1424
  %v1426 = vlaneseq
  %v1427 = vshrl.u32 %v1426, 7
  %v1428 = vsub.s32 %v1425, %v1427
  %v1429 = vrot.slane %v1347, %v1428
  %v1431 = vunpack.c.l.s4 1966171168
  %v1432 = vunpack.c.0.s8 %v1431
  %v1433 = vlaneseq
  %v1434 = vshrl.u32 %v1433, 7
  %v1435 = vsub.s32 %v1432, %v1434
  %v1436 = vrot.slane %v1422, %v1435
  %v1437 = vcombine.high %v1429, %v1429
  %v1438 = vcombine.high %v1436, %v1436
  %v1440 = vunpack.c.l.s4 1966171168
  %v1441 = vunpack.c.0.s8 %v1440
  %v1442 = vlaneseq
  %v1443 = vshrl.u32 %v1442, 7
  %v1444 = vsub.s32 %v1441, %v1443
  %v1445 = vrot.slane %v1429, %v1444
  %v1447 = vunpack.c.l.s4 1966171168
  %v1448 = vunpack.c.0.s8 %v1447
  %v1449 = vlaneseq
  %v1450 = vshrl.u32 %v1449, 7
  %v1451 = vsub.s32 %v1448, %v1450
  %v1452 = vrot.slane %v1436, %v1451
  %v1454 = vunpack.c.l.s4 1966171168
  %v1455 = vunpack.c.0.s8 %v1454
  %v1456 = vlaneseq
  %v1457 = vshrl.u32 %v1456, 7
  %v1458 = vsub.s32 %v1455, %v1457
  %v1459 = vrot.slane %v1437, %v1458
  %v1461 = vunpack.c.l.s4 1966171168
  %v1462 = vunpack.c.0.s8 %v1461
  %v1463 = vlaneseq
  %v1464 = vshrl.u32 %v1463, 7
  %v1465 = vsub.s32 %v1462, %v1464
  %v1466 = vrot.slane %v1438, %v1465
  %v1467 = vcombine.high %v1445, %v1445
  %v1468 = vcombine.high %v1452, %v1452
  %v1469 = vcombine.high %v1459, %v1459
  %v1470 = vcombine.high %v1466, %v1466
  %v1479 = vadd.f32 %v1207, %v1445
  %v1480 = vadd.f32 %v1209, %v1459
  %v1481 = vadd.f32 %v1211, %v1467
  %v1482 = vadd.f32 %v1213, %v1469
  %v1483 = vadd.f32 %v1215, %v1452
  %v1484 = vadd.f32 %v1217, %v1466
  %v1485 = vadd.f32 %v1219, %v1468
  %v1486 = vadd.f32 %v1221, %v1470
  %v1487 = vmul.f32 %v1479, 0.5
  %v1488 = vmul.f32 %v1480, 0.5
  %v1489 = vmul.f32 %v1481, 0.5
  %v1490 = vmul.f32 %v1482, 0.5
  %v1491 = vmul.f32 %v1483, 0.5
  %v1492 = vmul.f32 %v1484, 0.5
  %v1493 = vmul.f32 %v1485, 0.5
  %v1494 = vmul.f32 %v1486, 0.5
  %v1495 = vtanh.pop %v1487
  %v1496 = vtanh.pop %v1488
  %v1497 = vtanh.pop %v1489
  %v1498 = vtanh.pop %v1490
  %v1499 = vtanh.pop %v1491
  %v1500 = vtanh.pop %v1492
  %v1501 = vtanh.pop %v1493
  %v1502 = vtanh.pop %v1494
  %v1503 = vadd.f32 %v1495, 1.0
  %v1504 = vadd.f32 %v1496, 1.0
  %v1505 = vadd.f32 %v1497, 1.0
  %v1506 = vadd.f32 %v1498, 1.0
  %v1507 = vadd.f32 %v1499, 1.0
  %v1508 = vadd.f32 %v1500, 1.0
  %v1509 = vadd.f32 %v1501, 1.0
  %v1510 = vadd.f32 %v1502, 1.0
  %v1511 = vmul.f32 %v1503, 0.5
  %v1512 = vmul.f32 %v1504, 0.5
  %v1513 = vmul.f32 %v1505, 0.5
  %v1514 = vmul.f32 %v1506, 0.5
  %v1515 = vmul.f32 %v1507, 0.5
  %v1516 = vmul.f32 %v1508, 0.5
  %v1517 = vmul.f32 %v1509, 0.5
  %v1518 = vmul.f32 %v1510, 0.5
  %v1527 = vrot.slane %v1207, 1
  %v1528 = vrot.slane %v1209, 1
  %v1529 = vrot.slane %v1211, 1
  %v1530 = vrot.slane %v1213, 1
  %v1531 = vrot.slane %v1215, 1
  %v1532 = vrot.slane %v1217, 1
  %v1533 = vrot.slane %v1219, 1
  %v1534 = vrot.slane %v1221, 1
  %v1544 = vcombine.high %v1349, %v1349
  %v1546 = vunpack.c.l.s4 1966171168
  %v1547 = vunpack.c.0.s8 %v1546
  %v1548 = vlaneseq
  %v1549 = vshrl.u32 %v1548, 7
  %v1550 = vsub.s32 %v1547, %v1549
  %v1551 = vrot.slane %v1349, %v1550
  %v1553 = vunpack.c.l.s4 1966171168
  %v1554 = vunpack.c.0.s8 %v1553
  %v1555 = vlaneseq
  %v1556 = vshrl.u32 %v1555, 7
  %v1557 = vsub.s32 %v1554, %v1556
  %v1558 = vrot.slane %v1544, %v1557
  %v1559 = vcombine.high %v1551, %v1551
  %v1560 = vcombine.high %v1558, %v1558
  %v1562 = vunpack.c.l.s4 1966171168
  %v1563 = vunpack.c.0.s8 %v1562
  %v1564 = vlaneseq
  %v1565 = vshrl.u32 %v1564, 7
  %v1566 = vsub.s32 %v1563, %v1565
  %v1567 = vrot.slane %v1551, %v1566
  %v1569 = vunpack.c.l.s4 1966171168
  %v1570 = vunpack.c.0.s8 %v1569
  %v1571 = vlaneseq
  %v1572 = vshrl.u32 %v1571, 7
  %v1573 = vsub.s32 %v1570, %v1572
  %v1574 = vrot.slane %v1558, %v1573
  %v1576 = vunpack.c.l.s4 1966171168
  %v1577 = vunpack.c.0.s8 %v1576
  %v1578 = vlaneseq
  %v1579 = vshrl.u32 %v1578, 7
  %v1580 = vsub.s32 %v1577, %v1579
  %v1581 = vrot.slane %v1559, %v1580
  %v1583 = vunpack.c.l.s4 1966171168
  %v1584 = vunpack.c.0.s8 %v1583
  %v1585 = vlaneseq
  %v1586 = vshrl.u32 %v1585, 7
  %v1587 = vsub.s32 %v1584, %v1586
  %v1588 = vrot.slane %v1560, %v1587
  %v1589 = vcombine.high %v1567, %v1567
  %v1590 = vcombine.high %v1574, %v1574
  %v1591 = vcombine.high %v1581, %v1581
  %v1592 = vcombine.high %v1588, %v1588
  %v1601 = vadd.f32 %v1527, %v1567
  %v1602 = vadd.f32 %v1528, %v1581
  %v1603 = vadd.f32 %v1529, %v1589
  %v1604 = vadd.f32 %v1530, %v1591
  %v1605 = vadd.f32 %v1531, %v1574
  %v1606 = vadd.f32 %v1532, %v1588
  %v1607 = vadd.f32 %v1533, %v1590
  %v1608 = vadd.f32 %v1534, %v1592
  %v1609 = vmul.f32 %v1601, 0.5
  %v1610 = vmul.f32 %v1602, 0.5
  %v1611 = vmul.f32 %v1603, 0.5
  %v1612 = vmul.f32 %v1604, 0.5
  %v1613 = vmul.f32 %v1605, 0.5
  %v1614 = vmul.f32 %v1606, 0.5
  %v1615 = vmul.f32 %v1607, 0.5
  %v1616 = vmul.f32 %v1608, 0.5
  %v1617 = vtanh.pop %v1609
  %v1618 = vtanh.pop %v1610
  %v1619 = vtanh.pop %v1611
  %v1620 = vtanh.pop %v1612
  %v1621 = vtanh.pop %v1613
  %v1622 = vtanh.pop %v1614
  %v1623 = vtanh.pop %v1615
  %v1624 = vtanh.pop %v1616
  %v1625 = vadd.f32 %v1617, 1.0
  %v1626 = vadd.f32 %v1618, 1.0
  %v1627 = vadd.f32 %v1619, 1.0
  %v1628 = vadd.f32 %v1620, 1.0
  %v1629 = vadd.f32 %v1621, 1.0
  %v1630 = vadd.f32 %v1622, 1.0
  %v1631 = vadd.f32 %v1623, 1.0
  %v1632 = vadd.f32 %v1624, 1.0
  %v1633 = vmul.f32 %v1625, 0.5
  %v1634 = vmul.f32 %v1626, 0.5
  %v1635 = vmul.f32 %v1627, 0.5
  %v1636 = vmul.f32 %v1628, 0.5
  %v1637 = vmul.f32 %v1629, 0.5
  %v1638 = vmul.f32 %v1630, 0.5
  %v1639 = vmul.f32 %v1631, 0.5
  %v1640 = vmul.f32 %v1632, 0.5
  %v1641 = vadd.f32 %v1418, %v72
  %v1643 = vcombine.high %v1641, %v1641
  %v1645 = vunpack.c.l.s4 1966171168
  %v1646 = vunpack.c.0.s8 %v1645
  %v1647 = vlaneseq
  %v1648 = vshrl.u32 %v1647, 7
  %v1649 = vsub.s32 %v1646, %v1648
  %v1650 = vrot.slane %v1641, %v1649
  %v1652 = vunpack.c.l.s4 1966171168
  %v1653 = vunpack.c.0.s8 %v1652
  %v1654 = vlaneseq
  %v1655 = vshrl.u32 %v1654, 7
  %v1656 = vsub.s32 %v1653, %v1655
  %v1657 = vrot.slane %v1643, %v1656
  %v1658 = vcombine.high %v1650, %v1650
  %v1659 = vcombine.high %v1657, %v1657
  %v1661 = vunpack.c.l.s4 1966171168
  %v1662 = vunpack.c.0.s8 %v1661
  %v1663 = vlaneseq
  %v1664 = vshrl.u32 %v1663, 7
  %v1665 = vsub.s32 %v1662, %v1664
  %v1666 = vrot.slane %v1650, %v1665
  %v1668 = vunpack.c.l.s4 1966171168
  %v1669 = vunpack.c.0.s8 %v1668
  %v1670 = vlaneseq
  %v1671 = vshrl.u32 %v1670, 7
  %v1672 = vsub.s32 %v1669, %v1671
  %v1673 = vrot.slane %v1657, %v1672
  %v1675 = vunpack.c.l.s4 1966171168
  %v1676 = vunpack.c.0.s8 %v1675
  %v1677 = vlaneseq
  %v1678 = vshrl.u32 %v1677, 7
  %v1679 = vsub.s32 %v1676, %v1678
  %v1680 = vrot.slane %v1658, %v1679
  %v1682 = vunpack.c.l.s4 1966171168
  %v1683 = vunpack.c.0.s8 %v1682
  %v1684 = vlaneseq
  %v1685 = vshrl.u32 %v1684, 7
  %v1686 = vsub.s32 %v1683, %v1685
  %v1687 = vrot.slane %v1659, %v1686
  %v1688 = vcombine.high %v1666, %v1666
  %v1689 = vcombine.high %v1673, %v1673
  %v1690 = vcombine.high %v1680, %v1680
  %v1691 = vcombine.high %v1687, %v1687
  %v1700 = vmul.f32 %v1511, %v1666
  %v1701 = vmul.f32 %v1512, %v1680
  %v1702 = vmul.f32 %v1513, %v1688
  %v1703 = vmul.f32 %v1514, %v1690
  %v1704 = vmul.f32 %v1515, %v1673
  %v1705 = vmul.f32 %v1516, %v1687
  %v1706 = vmul.f32 %v1517, %v1689
  %v1707 = vmul.f32 %v1518, %v1691
  %v1708 = vrot.slane %v1207, 2
  %v1709 = vrot.slane %v1209, 2
  %v1710 = vrot.slane %v1211, 2
  %v1711 = vrot.slane %v1213, 2
  %v1712 = vrot.slane %v1215, 2
  %v1713 = vrot.slane %v1217, 2
  %v1714 = vrot.slane %v1219, 2
  %v1715 = vrot.slane %v1221, 2
  %v1724 = vadd.f32 %v1708, %v1700
  %v1725 = vadd.f32 %v1709, %v1701
  %v1726 = vadd.f32 %v1710, %v1702
  %v1727 = vadd.f32 %v1711, %v1703
  %v1728 = vadd.f32 %v1712, %v1704
  %v1729 = vadd.f32 %v1713, %v1705
  %v1730 = vadd.f32 %v1714, %v1706
  %v1731 = vadd.f32 %v1715, %v1707
  %v1732 = vtanh.pop %v1724
  %v1733 = vtanh.pop %v1725
  %v1734 = vtanh.pop %v1726
  %v1735 = vtanh.pop %v1727
  %v1736 = vtanh.pop %v1728
  %v1737 = vtanh.pop %v1729
  %v1738 = vtanh.pop %v1730
  %v1739 = vtanh.pop %v1731
  %v1740 = vsub.f32 1.0, %v1633
  %v1741 = vsub.f32 1.0, %v1634
  %v1742 = vsub.f32 1.0, %v1635
  %v1743 = vsub.f32 1.0, %v1636
  %v1744 = vsub.f32 1.0, %v1637
  %v1745 = vsub.f32 1.0, %v1638
  %v1746 = vsub.f32 1.0, %v1639
  %v1747 = vsub.f32 1.0, %v1640
  %v1748 = vmul.f32 %v1740, %v1732
  %v1749 = vmul.f32 %v1741, %v1733
  %v1750 = vmul.f32 %v1742, %v1734
  %v1751 = vmul.f32 %v1743, %v1735
  %v1752 = vmul.f32 %v1744, %v1736
  %v1753 = vmul.f32 %v1745, %v1737
  %v1754 = vmul.f32 %v1746, %v1738
  %v1755 = vmul.f32 %v1747, %v1739
  %v1756 = vmul.f32 %v1633, %v1198
  %v1757 = vmul.f32 %v1634, %v1199
  %v1758 = vmul.f32 %v1635, %v1200
  %v1759 = vmul.f32 %v1636, %v1201
  %v1760 = vmul.f32 %v1637, %v1202
  %v1761 = vmul.f32 %v1638, %v1203
  %v1762 = vmul.f32 %v1639, %v1204
  %v1763 = vmul.f32 %v1640, %v1205
  %v1764 = vadd.f32 %v1748, %v1756
  %v1765 = vadd.f32 %v1749, %v1757
  %v1766 = vadd.f32 %v1750, %v1758
  %v1767 = vadd.f32 %v1751, %v1759
  %v1768 = vadd.f32 %v1752, %v1760
  %v1769 = vadd.f32 %v1753, %v1761
  %v1770 = vadd.f32 %v1754, %v1762
  %v1771 = vadd.f32 %v1755, %v1763
  %s1772 = scalar_lea.vmem %s0, 3
  %v1773 = vld [vmem:[%s1772] ss:$8 sm:$0x7]
  %s1774 = scalar_lea.vmem %s0, 27
  %v1775 = vld [vmem:[%s1774] ss:$8 sm:$0x7]
  %s1776 = scalar_lea.vmem %s0, 51
  %v1777 = vld [vmem:[%s1776] ss:$8 sm:$0x7]
  %s1778 = scalar_lea.vmem %s0, 75
  %v1779 = vld [vmem:[%s1778] ss:$8 sm:$0x7]
  %s1780 = scalar_lea.vmem %s0, 99
  %v1781 = vld [vmem:[%s1780] ss:$8 sm:$0x7]
  %s1782 = scalar_lea.vmem %s0, 123
  %v1783 = vld [vmem:[%s1782] ss:$8 sm:$0x7]
  %s1784 = scalar_lea.vmem %s0, 147
  %v1785 = vld [vmem:[%s1784] ss:$8 sm:$0x7]
  %s1786 = scalar_lea.vmem %s0, 171
  %v1787 = vld [vmem:[%s1786] ss:$8 sm:$0x7]
  %v1796 = vcombine.low %v1764, %v1765
  %v1797 = vcombine.low %v1766, %v1767
  %v1798 = vcombine.low %v1768, %v1769
  %v1799 = vcombine.low %v1770, %v1771
  %v1801 = vunpack.c.l.s4 1966171168
  %v1802 = vunpack.c.0.s8 %v1801
  %v1803 = vlaneseq
  %v1804 = vshrl.u32 %v1803, 7
  %v1805 = vsub.s32 %v1802, %v1804
  %v1806 = vrot.slane %v1796, %v1805
  %v1808 = vunpack.c.l.s4 1966171168
  %v1809 = vunpack.c.0.s8 %v1808
  %v1810 = vlaneseq
  %v1811 = vshrl.u32 %v1810, 7
  %v1812 = vsub.s32 %v1809, %v1811
  %v1813 = vrot.slane %v1797, %v1812
  %v1815 = vunpack.c.l.s4 1966171168
  %v1816 = vunpack.c.0.s8 %v1815
  %v1817 = vlaneseq
  %v1818 = vshrl.u32 %v1817, 7
  %v1819 = vsub.s32 %v1816, %v1818
  %v1820 = vrot.slane %v1798, %v1819
  %v1822 = vunpack.c.l.s4 1966171168
  %v1823 = vunpack.c.0.s8 %v1822
  %v1824 = vlaneseq
  %v1825 = vshrl.u32 %v1824, 7
  %v1826 = vsub.s32 %v1823, %v1825
  %v1827 = vrot.slane %v1799, %v1826
  %v1828 = vcombine.low %v1806, %v1813
  %v1829 = vcombine.low %v1820, %v1827
  %v1831 = vunpack.c.l.s4 1966171168
  %v1832 = vunpack.c.0.s8 %v1831
  %v1833 = vlaneseq
  %v1834 = vshrl.u32 %v1833, 7
  %v1835 = vsub.s32 %v1832, %v1834
  %v1836 = vrot.slane %v1828, %v1835
  %v1838 = vunpack.c.l.s4 1966171168
  %v1839 = vunpack.c.0.s8 %v1838
  %v1840 = vlaneseq
  %v1841 = vshrl.u32 %v1840, 7
  %v1842 = vsub.s32 %v1839, %v1841
  %v1843 = vrot.slane %v1829, %v1842
  %v1844 = vcombine.low %v1836, %v1843
  %1846 = vmatprep.subr.mxu0 %v20
  %1847 = vmatpush1.msra.mxu0 %v19
  %1848 = vmatprep.subr.mxu0 %v23
  %1849 = vmatpush1.msra.mxu0 %v22
  %1850 = vmatprep.subr.mxu0 %v26
  %1851 = vmatpush1.msra.mxu0 %v25
  %1852 = vmatprep.subr.mxu0 %v29
  %1853 = vmatpush1.msra.mxu0 %v28
  %1854 = vmatprep.subr.mxu0 %v32
  %1855 = vmatpush1.msra.mxu0 %v31
  %1856 = vmatprep.subr.mxu0 %v35
  %1857 = vmatpush1.msra.mxu0 %v34
  %1858 = vmatprep.subr.mxu0 %v38
  %1859 = vmatpush1.msra.mxu0 %v37
  %1860 = vmatprep.subr.mxu0 %v41
  %1861 = vmatpush1.msra.mxu0 %v40
  %1862 = vmatprep.subr.mxu0 %v44
  %1863 = vmatpush1.msra.mxu0 %v43
  %1864 = vmatprep.subr.mxu0 %v47
  %1865 = vmatpush1.msra.mxu0 %v46
  %1866 = vmatprep.subr.mxu0 %v50
  %1867 = vmatpush1.msra.mxu0 %v49
  %1868 = vmatprep.subr.mxu0 %v53
  %1869 = vmatpush1.msra.mxu0 %v52
  %1870 = vmatprep.subr.mxu0 %v56
  %1871 = vmatpush1.msra.mxu0 %v55
  %1872 = vmatprep.subr.mxu0 %v59
  %1873 = vmatpush1.msra.mxu0 %v58
  %1874 = vmatprep.subr.mxu0 %v62
  %1875 = vmatpush1.msra.mxu0 %v61
  %1876 = vmatprep.subr.mxu0 %v65
  %1877 = vmatpush1.msra.mxu0 %v64
  %1878 = vmatprep.subr.mxu0 0.0
  %1879 = vmatpush1.msra.mxu0 0.0
  %1880 = vmatprep.subr.mxu0 0.0
  %1881 = vmatpush1.msra.mxu0 0.0
  %1882 = vmatprep.subr.mxu0 0.0
  %1883 = vmatpush1.msra.mxu0 0.0
  %1884 = vmatprep.subr.mxu0 0.0
  %1885 = vmatpush1.msra.mxu0 0.0
  %1886 = vmatprep.subr.mxu0 0.0
  %1887 = vmatpush1.msra.mxu0 0.0
  %1888 = vmatprep.subr.mxu0 0.0
  %1889 = vmatpush1.msra.mxu0 0.0
  %1890 = vmatprep.subr.mxu0 0.0
  %1891 = vmatpush1.msra.mxu0 0.0
  %1892 = vmatprep.subr.mxu0 0.0
  %1893 = vmatpush1.msra.mxu0 0.0
  %1894 = vmatprep.subr.mxu0 0.0
  %1895 = vmatpush1.msra.mxu0 0.0
  %1896 = vmatprep.subr.mxu0 0.0
  %1897 = vmatpush1.msra.mxu0 0.0
  %1898 = vmatprep.subr.mxu0 0.0
  %1899 = vmatpush1.msra.mxu0 0.0
  %1900 = vmatprep.subr.mxu0 0.0
  %1901 = vmatpush1.msra.mxu0 0.0
  %1902 = vmatprep.subr.mxu0 0.0
  %1903 = vmatpush1.msra.mxu0 0.0
  %1904 = vmatprep.subr.mxu0 0.0
  %1905 = vmatpush1.msra.mxu0 0.0
  %1906 = vmatprep.subr.mxu0 0.0
  %1907 = vmatpush1.msra.mxu0 0.0
  %1908 = vmatprep.subr.mxu0 0.0
  %1909 = vmatpush1.msra.mxu0 0.0
  %1910 = vmatprep.mubr.f32.mxu0 0.0
  %1911 = vmatmul.mubr.f32.gmra.mrb[0].mxu0 %v1844
  %v1912 = vpop.f32.mrb[0].mxu0
  %v1913 = vadd.f32 0.0, %v1912
  %v1914 = vpop.f32.mrb[0].mxu0
  %v1915 = vadd.f32 0.0, %v1914
  %1916 = vdwg.mxu0
  %1917 = vmatprep.subr.mxu0 0.0
  %1918 = vmatpush1.msra.mxu0 %v21
  %1919 = vmatprep.subr.mxu0 0.0
  %1920 = vmatpush1.msra.mxu0 %v24
  %1921 = vmatprep.subr.mxu0 0.0
  %1922 = vmatpush1.msra.mxu0 %v27
  %1923 = vmatprep.subr.mxu0 0.0
  %1924 = vmatpush1.msra.mxu0 %v30
  %1925 = vmatprep.subr.mxu0 0.0
  %1926 = vmatpush1.msra.mxu0 %v33
  %1927 = vmatprep.subr.mxu0 0.0
  %1928 = vmatpush1.msra.mxu0 %v36
  %1929 = vmatprep.subr.mxu0 0.0
  %1930 = vmatpush1.msra.mxu0 %v39
  %1931 = vmatprep.subr.mxu0 0.0
  %1932 = vmatpush1.msra.mxu0 %v42
  %1933 = vmatprep.subr.mxu0 0.0
  %1934 = vmatpush1.msra.mxu0 %v45
  %1935 = vmatprep.subr.mxu0 0.0
  %1936 = vmatpush1.msra.mxu0 %v48
  %1937 = vmatprep.subr.mxu0 0.0
  %1938 = vmatpush1.msra.mxu0 %v51
  %1939 = vmatprep.subr.mxu0 0.0
  %1940 = vmatpush1.msra.mxu0 %v54
  %1941 = vmatprep.subr.mxu0 0.0
  %1942 = vmatpush1.msra.mxu0 %v57
  %1943 = vmatprep.subr.mxu0 0.0
  %1944 = vmatpush1.msra.mxu0 %v60
  %1945 = vmatprep.subr.mxu0 0.0
  %1946 = vmatpush1.msra.mxu0 %v63
  %1947 = vmatprep.subr.mxu0 0.0
  %1948 = vmatpush1.msra.mxu0 %v66
  %1949 = vmatprep.subr.mxu0 0.0
  %1950 = vmatpush1.msra.mxu0 0.0
  %1951 = vmatprep.subr.mxu0 0.0
  %1952 = vmatpush1.msra.mxu0 0.0
  %1953 = vmatprep.subr.mxu0 0.0
  %1954 = vmatpush1.msra.mxu0 0.0
  %1955 = vmatprep.subr.mxu0 0.0
  %1956 = vmatpush1.msra.mxu0 0.0
  %1957 = vmatprep.subr.mxu0 0.0
  %1958 = vmatpush1.msra.mxu0 0.0
  %1959 = vmatprep.subr.mxu0 0.0
  %1960 = vmatpush1.msra.mxu0 0.0
  %1961 = vmatprep.subr.mxu0 0.0
  %1962 = vmatpush1.msra.mxu0 0.0
  %1963 = vmatprep.subr.mxu0 0.0
  %1964 = vmatpush1.msra.mxu0 0.0
  %1965 = vmatprep.subr.mxu0 0.0
  %1966 = vmatpush1.msra.mxu0 0.0
  %1967 = vmatprep.subr.mxu0 0.0
  %1968 = vmatpush1.msra.mxu0 0.0
  %1969 = vmatprep.subr.mxu0 0.0
  %1970 = vmatpush1.msra.mxu0 0.0
  %1971 = vmatprep.subr.mxu0 0.0
  %1972 = vmatpush1.msra.mxu0 0.0
  %1973 = vmatprep.subr.mxu0 0.0
  %1974 = vmatpush1.msra.mxu0 0.0
  %1975 = vmatprep.subr.mxu0 0.0
  %1976 = vmatpush1.msra.mxu0 0.0
  %1977 = vmatprep.subr.mxu0 0.0
  %1978 = vmatpush1.msra.mxu0 0.0
  %1979 = vmatprep.subr.mxu0 0.0
  %1980 = vmatpush1.msra.mxu0 0.0
  %1981 = vmatprep.mubr.f32.mxu0 0.0
  %1982 = vmatmul.mubr.f32.gmra.mrb[0].mxu0 %v1844
  %v1983 = vpop.f32.mrb[0].mxu0
  %v1984 = vadd.f32 0.0, %v1983
  %v1985 = vpop.f32.mrb[0].mxu0
  %1986 = vdwg.mxu0
  %v1988 = vcombine.high %v1913, %v1913
  %v1990 = vunpack.c.l.s4 1966171168
  %v1991 = vunpack.c.0.s8 %v1990
  %v1992 = vlaneseq
  %v1993 = vshrl.u32 %v1992, 7
  %v1994 = vsub.s32 %v1991, %v1993
  %v1995 = vrot.slane %v1913, %v1994
  %v1997 = vunpack.c.l.s4 1966171168
  %v1998 = vunpack.c.0.s8 %v1997
  %v1999 = vlaneseq
  %v2000 = vshrl.u32 %v1999, 7
  %v2001 = vsub.s32 %v1998, %v2000
  %v2002 = vrot.slane %v1988, %v2001
  %v2003 = vcombine.high %v1995, %v1995
  %v2004 = vcombine.high %v2002, %v2002
  %v2006 = vunpack.c.l.s4 1966171168
  %v2007 = vunpack.c.0.s8 %v2006
  %v2008 = vlaneseq
  %v2009 = vshrl.u32 %v2008, 7
  %v2010 = vsub.s32 %v2007, %v2009
  %v2011 = vrot.slane %v1995, %v2010
  %v2013 = vunpack.c.l.s4 1966171168
  %v2014 = vunpack.c.0.s8 %v2013
  %v2015 = vlaneseq
  %v2016 = vshrl.u32 %v2015, 7
  %v2017 = vsub.s32 %v2014, %v2016
  %v2018 = vrot.slane %v2002, %v2017
  %v2020 = vunpack.c.l.s4 1966171168
  %v2021 = vunpack.c.0.s8 %v2020
  %v2022 = vlaneseq
  %v2023 = vshrl.u32 %v2022, 7
  %v2024 = vsub.s32 %v2021, %v2023
  %v2025 = vrot.slane %v2003, %v2024
  %v2027 = vunpack.c.l.s4 1966171168
  %v2028 = vunpack.c.0.s8 %v2027
  %v2029 = vlaneseq
  %v2030 = vshrl.u32 %v2029, 7
  %v2031 = vsub.s32 %v2028, %v2030
  %v2032 = vrot.slane %v2004, %v2031
  %v2033 = vcombine.high %v2011, %v2011
  %v2034 = vcombine.high %v2018, %v2018
  %v2035 = vcombine.high %v2025, %v2025
  %v2036 = vcombine.high %v2032, %v2032
  %v2045 = vadd.f32 %v1773, %v2011
  %v2046 = vadd.f32 %v1775, %v2025
  %v2047 = vadd.f32 %v1777, %v2033
  %v2048 = vadd.f32 %v1779, %v2035
  %v2049 = vadd.f32 %v1781, %v2018
  %v2050 = vadd.f32 %v1783, %v2032
  %v2051 = vadd.f32 %v1785, %v2034
  %v2052 = vadd.f32 %v1787, %v2036
  %v2053 = vmul.f32 %v2045, 0.5
  %v2054 = vmul.f32 %v2046, 0.5
  %v2055 = vmul.f32 %v2047, 0.5
  %v2056 = vmul.f32 %v2048, 0.5
  %v2057 = vmul.f32 %v2049, 0.5
  %v2058 = vmul.f32 %v2050, 0.5
  %v2059 = vmul.f32 %v2051, 0.5
  %v2060 = vmul.f32 %v2052, 0.5
  %v2061 = vtanh.pop %v2053
  %v2062 = vtanh.pop %v2054
  %v2063 = vtanh.pop %v2055
  %v2064 = vtanh.pop %v2056
  %v2065 = vtanh.pop %v2057
  %v2066 = vtanh.pop %v2058
  %v2067 = vtanh.pop %v2059
  %v2068 = vtanh.pop %v2060
  %v2069 = vadd.f32 %v2061, 1.0
  %v2070 = vadd.f32 %v2062, 1.0
  %v2071 = vadd.f32 %v2063, 1.0
  %v2072 = vadd.f32 %v2064, 1.0
  %v2073 = vadd.f32 %v2065, 1.0
  %v2074 = vadd.f32 %v2066, 1.0
  %v2075 = vadd.f32 %v2067, 1.0
  %v2076 = vadd.f32 %v2068, 1.0
  %v2077 = vmul.f32 %v2069, 0.5
  %v2078 = vmul.f32 %v2070, 0.5
  %v2079 = vmul.f32 %v2071, 0.5
  %v2080 = vmul.f32 %v2072, 0.5
  %v2081 = vmul.f32 %v2073, 0.5
  %v2082 = vmul.f32 %v2074, 0.5
  %v2083 = vmul.f32 %v2075, 0.5
  %v2084 = vmul.f32 %v2076, 0.5
  %v2093 = vrot.slane %v1773, 1
  %v2094 = vrot.slane %v1775, 1
  %v2095 = vrot.slane %v1777, 1
  %v2096 = vrot.slane %v1779, 1
  %v2097 = vrot.slane %v1781, 1
  %v2098 = vrot.slane %v1783, 1
  %v2099 = vrot.slane %v1785, 1
  %v2100 = vrot.slane %v1787, 1
  %v2110 = vcombine.high %v1915, %v1915
  %v2112 = vunpack.c.l.s4 1966171168
  %v2113 = vunpack.c.0.s8 %v2112
  %v2114 = vlaneseq
  %v2115 = vshrl.u32 %v2114, 7
  %v2116 = vsub.s32 %v2113, %v2115
  %v2117 = vrot.slane %v1915, %v2116
  %v2119 = vunpack.c.l.s4 1966171168
  %v2120 = vunpack.c.0.s8 %v2119
  %v2121 = vlaneseq
  %v2122 = vshrl.u32 %v2121, 7
  %v2123 = vsub.s32 %v2120, %v2122
  %v2124 = vrot.slane %v2110, %v2123
  %v2125 = vcombine.high %v2117, %v2117
  %v2126 = vcombine.high %v2124, %v2124
  %v2128 = vunpack.c.l.s4 1966171168
  %v2129 = vunpack.c.0.s8 %v2128
  %v2130 = vlaneseq
  %v2131 = vshrl.u32 %v2130, 7
  %v2132 = vsub.s32 %v2129, %v2131
  %v2133 = vrot.slane %v2117, %v2132
  %v2135 = vunpack.c.l.s4 1966171168
  %v2136 = vunpack.c.0.s8 %v2135
  %v2137 = vlaneseq
  %v2138 = vshrl.u32 %v2137, 7
  %v2139 = vsub.s32 %v2136, %v2138
  %v2140 = vrot.slane %v2124, %v2139
  %v2142 = vunpack.c.l.s4 1966171168
  %v2143 = vunpack.c.0.s8 %v2142
  %v2144 = vlaneseq
  %v2145 = vshrl.u32 %v2144, 7
  %v2146 = vsub.s32 %v2143, %v2145
  %v2147 = vrot.slane %v2125, %v2146
  %v2149 = vunpack.c.l.s4 1966171168
  %v2150 = vunpack.c.0.s8 %v2149
  %v2151 = vlaneseq
  %v2152 = vshrl.u32 %v2151, 7
  %v2153 = vsub.s32 %v2150, %v2152
  %v2154 = vrot.slane %v2126, %v2153
  %v2155 = vcombine.high %v2133, %v2133
  %v2156 = vcombine.high %v2140, %v2140
  %v2157 = vcombine.high %v2147, %v2147
  %v2158 = vcombine.high %v2154, %v2154
  %v2167 = vadd.f32 %v2093, %v2133
  %v2168 = vadd.f32 %v2094, %v2147
  %v2169 = vadd.f32 %v2095, %v2155
  %v2170 = vadd.f32 %v2096, %v2157
  %v2171 = vadd.f32 %v2097, %v2140
  %v2172 = vadd.f32 %v2098, %v2154
  %v2173 = vadd.f32 %v2099, %v2156
  %v2174 = vadd.f32 %v2100, %v2158
  %v2175 = vmul.f32 %v2167, 0.5
  %v2176 = vmul.f32 %v2168, 0.5
  %v2177 = vmul.f32 %v2169, 0.5
  %v2178 = vmul.f32 %v2170, 0.5
  %v2179 = vmul.f32 %v2171, 0.5
  %v2180 = vmul.f32 %v2172, 0.5
  %v2181 = vmul.f32 %v2173, 0.5
  %v2182 = vmul.f32 %v2174, 0.5
  %v2183 = vtanh.pop %v2175
  %v2184 = vtanh.pop %v2176
  %v2185 = vtanh.pop %v2177
  %v2186 = vtanh.pop %v2178
  %v2187 = vtanh.pop %v2179
  %v2188 = vtanh.pop %v2180
  %v2189 = vtanh.pop %v2181
  %v2190 = vtanh.pop %v2182
  %v2191 = vadd.f32 %v2183, 1.0
  %v2192 = vadd.f32 %v2184, 1.0
  %v2193 = vadd.f32 %v2185, 1.0
  %v2194 = vadd.f32 %v2186, 1.0
  %v2195 = vadd.f32 %v2187, 1.0
  %v2196 = vadd.f32 %v2188, 1.0
  %v2197 = vadd.f32 %v2189, 1.0
  %v2198 = vadd.f32 %v2190, 1.0
  %v2199 = vmul.f32 %v2191, 0.5
  %v2200 = vmul.f32 %v2192, 0.5
  %v2201 = vmul.f32 %v2193, 0.5
  %v2202 = vmul.f32 %v2194, 0.5
  %v2203 = vmul.f32 %v2195, 0.5
  %v2204 = vmul.f32 %v2196, 0.5
  %v2205 = vmul.f32 %v2197, 0.5
  %v2206 = vmul.f32 %v2198, 0.5
  %v2207 = vadd.f32 %v1984, %v72
  %v2209 = vcombine.high %v2207, %v2207
  %v2211 = vunpack.c.l.s4 1966171168
  %v2212 = vunpack.c.0.s8 %v2211
  %v2213 = vlaneseq
  %v2214 = vshrl.u32 %v2213, 7
  %v2215 = vsub.s32 %v2212, %v2214
  %v2216 = vrot.slane %v2207, %v2215
  %v2218 = vunpack.c.l.s4 1966171168
  %v2219 = vunpack.c.0.s8 %v2218
  %v2220 = vlaneseq
  %v2221 = vshrl.u32 %v2220, 7
  %v2222 = vsub.s32 %v2219, %v2221
  %v2223 = vrot.slane %v2209, %v2222
  %v2224 = vcombine.high %v2216, %v2216
  %v2225 = vcombine.high %v2223, %v2223
  %v2227 = vunpack.c.l.s4 1966171168
  %v2228 = vunpack.c.0.s8 %v2227
  %v2229 = vlaneseq
  %v2230 = vshrl.u32 %v2229, 7
  %v2231 = vsub.s32 %v2228, %v2230
  %v2232 = vrot.slane %v2216, %v2231
  %v2234 = vunpack.c.l.s4 1966171168
  %v2235 = vunpack.c.0.s8 %v2234
  %v2236 = vlaneseq
  %v2237 = vshrl.u32 %v2236, 7
  %v2238 = vsub.s32 %v2235, %v2237
  %v2239 = vrot.slane %v2223, %v2238
  %v2241 = vunpack.c.l.s4 1966171168
  %v2242 = vunpack.c.0.s8 %v2241
  %v2243 = vlaneseq
  %v2244 = vshrl.u32 %v2243, 7
  %v2245 = vsub.s32 %v2242, %v2244
  %v2246 = vrot.slane %v2224, %v2245
  %v2248 = vunpack.c.l.s4 1966171168
  %v2249 = vunpack.c.0.s8 %v2248
  %v2250 = vlaneseq
  %v2251 = vshrl.u32 %v2250, 7
  %v2252 = vsub.s32 %v2249, %v2251
  %v2253 = vrot.slane %v2225, %v2252
  %v2254 = vcombine.high %v2232, %v2232
  %v2255 = vcombine.high %v2239, %v2239
  %v2256 = vcombine.high %v2246, %v2246
  %v2257 = vcombine.high %v2253, %v2253
  %v2266 = vmul.f32 %v2077, %v2232
  %v2267 = vmul.f32 %v2078, %v2246
  %v2268 = vmul.f32 %v2079, %v2254
  %v2269 = vmul.f32 %v2080, %v2256
  %v2270 = vmul.f32 %v2081, %v2239
  %v2271 = vmul.f32 %v2082, %v2253
  %v2272 = vmul.f32 %v2083, %v2255
  %v2273 = vmul.f32 %v2084, %v2257
  %v2274 = vrot.slane %v1773, 2
  %v2275 = vrot.slane %v1775, 2
  %v2276 = vrot.slane %v1777, 2
  %v2277 = vrot.slane %v1779, 2
  %v2278 = vrot.slane %v1781, 2
  %v2279 = vrot.slane %v1783, 2
  %v2280 = vrot.slane %v1785, 2
  %v2281 = vrot.slane %v1787, 2
  %v2290 = vadd.f32 %v2274, %v2266
  %v2291 = vadd.f32 %v2275, %v2267
  %v2292 = vadd.f32 %v2276, %v2268
  %v2293 = vadd.f32 %v2277, %v2269
  %v2294 = vadd.f32 %v2278, %v2270
  %v2295 = vadd.f32 %v2279, %v2271
  %v2296 = vadd.f32 %v2280, %v2272
  %v2297 = vadd.f32 %v2281, %v2273
  %v2298 = vtanh.pop %v2290
  %v2299 = vtanh.pop %v2291
  %v2300 = vtanh.pop %v2292
  %v2301 = vtanh.pop %v2293
  %v2302 = vtanh.pop %v2294
  %v2303 = vtanh.pop %v2295
  %v2304 = vtanh.pop %v2296
  %v2305 = vtanh.pop %v2297
  %v2306 = vsub.f32 1.0, %v2199
  %v2307 = vsub.f32 1.0, %v2200
  %v2308 = vsub.f32 1.0, %v2201
  %v2309 = vsub.f32 1.0, %v2202
  %v2310 = vsub.f32 1.0, %v2203
  %v2311 = vsub.f32 1.0, %v2204
  %v2312 = vsub.f32 1.0, %v2205
  %v2313 = vsub.f32 1.0, %v2206
  %v2314 = vmul.f32 %v2306, %v2298
  %v2315 = vmul.f32 %v2307, %v2299
  %v2316 = vmul.f32 %v2308, %v2300
  %v2317 = vmul.f32 %v2309, %v2301
  %v2318 = vmul.f32 %v2310, %v2302
  %v2319 = vmul.f32 %v2311, %v2303
  %v2320 = vmul.f32 %v2312, %v2304
  %v2321 = vmul.f32 %v2313, %v2305
  %v2322 = vmul.f32 %v2199, %v1764
  %v2323 = vmul.f32 %v2200, %v1765
  %v2324 = vmul.f32 %v2201, %v1766
  %v2325 = vmul.f32 %v2202, %v1767
  %v2326 = vmul.f32 %v2203, %v1768
  %v2327 = vmul.f32 %v2204, %v1769
  %v2328 = vmul.f32 %v2205, %v1770
  %v2329 = vmul.f32 %v2206, %v1771
  %v2330 = vadd.f32 %v2314, %v2322
  %v2331 = vadd.f32 %v2315, %v2323
  %v2332 = vadd.f32 %v2316, %v2324
  %v2333 = vadd.f32 %v2317, %v2325
  %v2334 = vadd.f32 %v2318, %v2326
  %v2335 = vadd.f32 %v2319, %v2327
  %v2336 = vadd.f32 %v2320, %v2328
  %v2337 = vadd.f32 %v2321, %v2329
  %s2338 = scalar_lea.vmem %s0, 4
  %v2339 = vld [vmem:[%s2338] ss:$8 sm:$0x7]
  %s2340 = scalar_lea.vmem %s0, 28
  %v2341 = vld [vmem:[%s2340] ss:$8 sm:$0x7]
  %s2342 = scalar_lea.vmem %s0, 52
  %v2343 = vld [vmem:[%s2342] ss:$8 sm:$0x7]
  %s2344 = scalar_lea.vmem %s0, 76
  %v2345 = vld [vmem:[%s2344] ss:$8 sm:$0x7]
  %s2346 = scalar_lea.vmem %s0, 100
  %v2347 = vld [vmem:[%s2346] ss:$8 sm:$0x7]
  %s2348 = scalar_lea.vmem %s0, 124
  %v2349 = vld [vmem:[%s2348] ss:$8 sm:$0x7]
  %s2350 = scalar_lea.vmem %s0, 148
  %v2351 = vld [vmem:[%s2350] ss:$8 sm:$0x7]
  %s2352 = scalar_lea.vmem %s0, 172
  %v2353 = vld [vmem:[%s2352] ss:$8 sm:$0x7]
  %v2362 = vcombine.low %v2330, %v2331
  %v2363 = vcombine.low %v2332, %v2333
  %v2364 = vcombine.low %v2334, %v2335
  %v2365 = vcombine.low %v2336, %v2337
  %v2367 = vunpack.c.l.s4 1966171168
  %v2368 = vunpack.c.0.s8 %v2367
  %v2369 = vlaneseq
  %v2370 = vshrl.u32 %v2369, 7
  %v2371 = vsub.s32 %v2368, %v2370
  %v2372 = vrot.slane %v2362, %v2371
  %v2374 = vunpack.c.l.s4 1966171168
  %v2375 = vunpack.c.0.s8 %v2374
  %v2376 = vlaneseq
  %v2377 = vshrl.u32 %v2376, 7
  %v2378 = vsub.s32 %v2375, %v2377
  %v2379 = vrot.slane %v2363, %v2378
  %v2381 = vunpack.c.l.s4 1966171168
  %v2382 = vunpack.c.0.s8 %v2381
  %v2383 = vlaneseq
  %v2384 = vshrl.u32 %v2383, 7
  %v2385 = vsub.s32 %v2382, %v2384
  %v2386 = vrot.slane %v2364, %v2385
  %v2388 = vunpack.c.l.s4 1966171168
  %v2389 = vunpack.c.0.s8 %v2388
  %v2390 = vlaneseq
  %v2391 = vshrl.u32 %v2390, 7
  %v2392 = vsub.s32 %v2389, %v2391
  %v2393 = vrot.slane %v2365, %v2392
  %v2394 = vcombine.low %v2372, %v2379
  %v2395 = vcombine.low %v2386, %v2393
  %v2397 = vunpack.c.l.s4 1966171168
  %v2398 = vunpack.c.0.s8 %v2397
  %v2399 = vlaneseq
  %v2400 = vshrl.u32 %v2399, 7
  %v2401 = vsub.s32 %v2398, %v2400
  %v2402 = vrot.slane %v2394, %v2401
  %v2404 = vunpack.c.l.s4 1966171168
  %v2405 = vunpack.c.0.s8 %v2404
  %v2406 = vlaneseq
  %v2407 = vshrl.u32 %v2406, 7
  %v2408 = vsub.s32 %v2405, %v2407
  %v2409 = vrot.slane %v2395, %v2408
  %v2410 = vcombine.low %v2402, %v2409
  %2412 = vmatprep.subr.mxu0 %v20
  %2413 = vmatpush1.msra.mxu0 %v19
  %2414 = vmatprep.subr.mxu0 %v23
  %2415 = vmatpush1.msra.mxu0 %v22
  %2416 = vmatprep.subr.mxu0 %v26
  %2417 = vmatpush1.msra.mxu0 %v25
  %2418 = vmatprep.subr.mxu0 %v29
  %2419 = vmatpush1.msra.mxu0 %v28
  %2420 = vmatprep.subr.mxu0 %v32
  %2421 = vmatpush1.msra.mxu0 %v31
  %2422 = vmatprep.subr.mxu0 %v35
  %2423 = vmatpush1.msra.mxu0 %v34
  %2424 = vmatprep.subr.mxu0 %v38
  %2425 = vmatpush1.msra.mxu0 %v37
  %2426 = vmatprep.subr.mxu0 %v41
  %2427 = vmatpush1.msra.mxu0 %v40
  %2428 = vmatprep.subr.mxu0 %v44
  %2429 = vmatpush1.msra.mxu0 %v43
  %2430 = vmatprep.subr.mxu0 %v47
  %2431 = vmatpush1.msra.mxu0 %v46
  %2432 = vmatprep.subr.mxu0 %v50
  %2433 = vmatpush1.msra.mxu0 %v49
  %2434 = vmatprep.subr.mxu0 %v53
  %2435 = vmatpush1.msra.mxu0 %v52
  %2436 = vmatprep.subr.mxu0 %v56
  %2437 = vmatpush1.msra.mxu0 %v55
  %2438 = vmatprep.subr.mxu0 %v59
  %2439 = vmatpush1.msra.mxu0 %v58
  %2440 = vmatprep.subr.mxu0 %v62
  %2441 = vmatpush1.msra.mxu0 %v61
  %2442 = vmatprep.subr.mxu0 %v65
  %2443 = vmatpush1.msra.mxu0 %v64
  %2444 = vmatprep.subr.mxu0 0.0
  %2445 = vmatpush1.msra.mxu0 0.0
  %2446 = vmatprep.subr.mxu0 0.0
  %2447 = vmatpush1.msra.mxu0 0.0
  %2448 = vmatprep.subr.mxu0 0.0
  %2449 = vmatpush1.msra.mxu0 0.0
  %2450 = vmatprep.subr.mxu0 0.0
  %2451 = vmatpush1.msra.mxu0 0.0
  %2452 = vmatprep.subr.mxu0 0.0
  %2453 = vmatpush1.msra.mxu0 0.0
  %2454 = vmatprep.subr.mxu0 0.0
  %2455 = vmatpush1.msra.mxu0 0.0
  %2456 = vmatprep.subr.mxu0 0.0
  %2457 = vmatpush1.msra.mxu0 0.0
  %2458 = vmatprep.subr.mxu0 0.0
  %2459 = vmatpush1.msra.mxu0 0.0
  %2460 = vmatprep.subr.mxu0 0.0
  %2461 = vmatpush1.msra.mxu0 0.0
  %2462 = vmatprep.subr.mxu0 0.0
  %2463 = vmatpush1.msra.mxu0 0.0
  %2464 = vmatprep.subr.mxu0 0.0
  %2465 = vmatpush1.msra.mxu0 0.0
  %2466 = vmatprep.subr.mxu0 0.0
  %2467 = vmatpush1.msra.mxu0 0.0
  %2468 = vmatprep.subr.mxu0 0.0
  %2469 = vmatpush1.msra.mxu0 0.0
  %2470 = vmatprep.subr.mxu0 0.0
  %2471 = vmatpush1.msra.mxu0 0.0
  %2472 = vmatprep.subr.mxu0 0.0
  %2473 = vmatpush1.msra.mxu0 0.0
  %2474 = vmatprep.subr.mxu0 0.0
  %2475 = vmatpush1.msra.mxu0 0.0
  %2476 = vmatprep.mubr.f32.mxu0 0.0
  %2477 = vmatmul.mubr.f32.gmra.mrb[0].mxu0 %v2410
  %v2478 = vpop.f32.mrb[0].mxu0
  %v2479 = vadd.f32 0.0, %v2478
  %v2480 = vpop.f32.mrb[0].mxu0
  %v2481 = vadd.f32 0.0, %v2480
  %2482 = vdwg.mxu0
  %2483 = vmatprep.subr.mxu0 0.0
  %2484 = vmatpush1.msra.mxu0 %v21
  %2485 = vmatprep.subr.mxu0 0.0
  %2486 = vmatpush1.msra.mxu0 %v24
  %2487 = vmatprep.subr.mxu0 0.0
  %2488 = vmatpush1.msra.mxu0 %v27
  %2489 = vmatprep.subr.mxu0 0.0
  %2490 = vmatpush1.msra.mxu0 %v30
  %2491 = vmatprep.subr.mxu0 0.0
  %2492 = vmatpush1.msra.mxu0 %v33
  %2493 = vmatprep.subr.mxu0 0.0
  %2494 = vmatpush1.msra.mxu0 %v36
  %2495 = vmatprep.subr.mxu0 0.0
  %2496 = vmatpush1.msra.mxu0 %v39
  %2497 = vmatprep.subr.mxu0 0.0
  %2498 = vmatpush1.msra.mxu0 %v42
  %2499 = vmatprep.subr.mxu0 0.0
  %2500 = vmatpush1.msra.mxu0 %v45
  %2501 = vmatprep.subr.mxu0 0.0
  %2502 = vmatpush1.msra.mxu0 %v48
  %2503 = vmatprep.subr.mxu0 0.0
  %2504 = vmatpush1.msra.mxu0 %v51
  %2505 = vmatprep.subr.mxu0 0.0
  %2506 = vmatpush1.msra.mxu0 %v54
  %2507 = vmatprep.subr.mxu0 0.0
  %2508 = vmatpush1.msra.mxu0 %v57
  %2509 = vmatprep.subr.mxu0 0.0
  %2510 = vmatpush1.msra.mxu0 %v60
  %2511 = vmatprep.subr.mxu0 0.0
  %2512 = vmatpush1.msra.mxu0 %v63
  %2513 = vmatprep.subr.mxu0 0.0
  %2514 = vmatpush1.msra.mxu0 %v66
  %2515 = vmatprep.subr.mxu0 0.0
  %2516 = vmatpush1.msra.mxu0 0.0
  %2517 = vmatprep.subr.mxu0 0.0
  %2518 = vmatpush1.msra.mxu0 0.0
  %2519 = vmatprep.subr.mxu0 0.0
  %2520 = vmatpush1.msra.mxu0 0.0
  %2521 = vmatprep.subr.mxu0 0.0
  %2522 = vmatpush1.msra.mxu0 0.0
  %2523 = vmatprep.subr.mxu0 0.0
  %2524 = vmatpush1.msra.mxu0 0.0
  %2525 = vmatprep.subr.mxu0 0.0
  %2526 = vmatpush1.msra.mxu0 0.0
  %2527 = vmatprep.subr.mxu0 0.0
  %2528 = vmatpush1.msra.mxu0 0.0
  %2529 = vmatprep.subr.mxu0 0.0
  %2530 = vmatpush1.msra.mxu0 0.0
  %2531 = vmatprep.subr.mxu0 0.0
  %2532 = vmatpush1.msra.mxu0 0.0
  %2533 = vmatprep.subr.mxu0 0.0
  %2534 = vmatpush1.msra.mxu0 0.0
  %2535 = vmatprep.subr.mxu0 0.0
  %2536 = vmatpush1.msra.mxu0 0.0
  %2537 = vmatprep.subr.mxu0 0.0
  %2538 = vmatpush1.msra.mxu0 0.0
  %2539 = vmatprep.subr.mxu0 0.0
  %2540 = vmatpush1.msra.mxu0 0.0
  %2541 = vmatprep.subr.mxu0 0.0
  %2542 = vmatpush1.msra.mxu0 0.0
  %2543 = vmatprep.subr.mxu0 0.0
  %2544 = vmatpush1.msra.mxu0 0.0
  %2545 = vmatprep.subr.mxu0 0.0
  %2546 = vmatpush1.msra.mxu0 0.0
  %2547 = vmatprep.mubr.f32.mxu0 0.0
  %2548 = vmatmul.mubr.f32.gmra.mrb[0].mxu0 %v2410
  %v2549 = vpop.f32.mrb[0].mxu0
  %v2550 = vadd.f32 0.0, %v2549
  %v2551 = vpop.f32.mrb[0].mxu0
  %2552 = vdwg.mxu0
  %v2554 = vcombine.high %v2479, %v2479
  %v2556 = vunpack.c.l.s4 1966171168
  %v2557 = vunpack.c.0.s8 %v2556
  %v2558 = vlaneseq
  %v2559 = vshrl.u32 %v2558, 7
  %v2560 = vsub.s32 %v2557, %v2559
  %v2561 = vrot.slane %v2479, %v2560
  %v2563 = vunpack.c.l.s4 1966171168
  %v2564 = vunpack.c.0.s8 %v2563
  %v2565 = vlaneseq
  %v2566 = vshrl.u32 %v2565, 7
  %v2567 = vsub.s32 %v2564, %v2566
  %v2568 = vrot.slane %v2554, %v2567
  %v2569 = vcombine.high %v2561, %v2561
  %v2570 = vcombine.high %v2568, %v2568
  %v2572 = vunpack.c.l.s4 1966171168
  %v2573 = vunpack.c.0.s8 %v2572
  %v2574 = vlaneseq
  %v2575 = vshrl.u32 %v2574, 7
  %v2576 = vsub.s32 %v2573, %v2575
  %v2577 = vrot.slane %v2561, %v2576
  %v2579 = vunpack.c.l.s4 1966171168
  %v2580 = vunpack.c.0.s8 %v2579
  %v2581 = vlaneseq
  %v2582 = vshrl.u32 %v2581, 7
  %v2583 = vsub.s32 %v2580, %v2582
  %v2584 = vrot.slane %v2568, %v2583
  %v2586 = vunpack.c.l.s4 1966171168
  %v2587 = vunpack.c.0.s8 %v2586
  %v2588 = vlaneseq
  %v2589 = vshrl.u32 %v2588, 7
  %v2590 = vsub.s32 %v2587, %v2589
  %v2591 = vrot.slane %v2569, %v2590
  %v2593 = vunpack.c.l.s4 1966171168
  %v2594 = vunpack.c.0.s8 %v2593
  %v2595 = vlaneseq
  %v2596 = vshrl.u32 %v2595, 7
  %v2597 = vsub.s32 %v2594, %v2596
  %v2598 = vrot.slane %v2570, %v2597
  %v2599 = vcombine.high %v2577, %v2577
  %v2600 = vcombine.high %v2584, %v2584
  %v2601 = vcombine.high %v2591, %v2591
  %v2602 = vcombine.high %v2598, %v2598
  %v2611 = vadd.f32 %v2339, %v2577
  %v2612 = vadd.f32 %v2341, %v2591
  %v2613 = vadd.f32 %v2343, %v2599
  %v2614 = vadd.f32 %v2345, %v2601
  %v2615 = vadd.f32 %v2347, %v2584
  %v2616 = vadd.f32 %v2349, %v2598
  %v2617 = vadd.f32 %v2351, %v2600
  %v2618 = vadd.f32 %v2353, %v2602
  %v2619 = vmul.f32 %v2611, 0.5
  %v2620 = vmul.f32 %v2612, 0.5
  %v2621 = vmul.f32 %v2613, 0.5
  %v2622 = vmul.f32 %v2614, 0.5
  %v2623 = vmul.f32 %v2615, 0.5
  %v2624 = vmul.f32 %v2616, 0.5
  %v2625 = vmul.f32 %v2617, 0.5
  %v2626 = vmul.f32 %v2618, 0.5
  %v2627 = vtanh.pop %v2619
  %v2628 = vtanh.pop %v2620
  %v2629 = vtanh.pop %v2621
  %v2630 = vtanh.pop %v2622
  %v2631 = vtanh.pop %v2623
  %v2632 = vtanh.pop %v2624
  %v2633 = vtanh.pop %v2625
  %v2634 = vtanh.pop %v2626
  %v2635 = vadd.f32 %v2627, 1.0
  %v2636 = vadd.f32 %v2628, 1.0
  %v2637 = vadd.f32 %v2629, 1.0
  %v2638 = vadd.f32 %v2630, 1.0
  %v2639 = vadd.f32 %v2631, 1.0
  %v2640 = vadd.f32 %v2632, 1.0
  %v2641 = vadd.f32 %v2633, 1.0
  %v2642 = vadd.f32 %v2634, 1.0
  %v2643 = vmul.f32 %v2635, 0.5
  %v2644 = vmul.f32 %v2636, 0.5
  %v2645 = vmul.f32 %v2637, 0.5
  %v2646 = vmul.f32 %v2638, 0.5
  %v2647 = vmul.f32 %v2639, 0.5
  %v2648 = vmul.f32 %v2640, 0.5
  %v2649 = vmul.f32 %v2641, 0.5
  %v2650 = vmul.f32 %v2642, 0.5
  %v2659 = vrot.slane %v2339, 1
  %v2660 = vrot.slane %v2341, 1
  %v2661 = vrot.slane %v2343, 1
  %v2662 = vrot.slane %v2345, 1
  %v2663 = vrot.slane %v2347, 1
  %v2664 = vrot.slane %v2349, 1
  %v2665 = vrot.slane %v2351, 1
  %v2666 = vrot.slane %v2353, 1
  %v2676 = vcombine.high %v2481, %v2481
  %v2678 = vunpack.c.l.s4 1966171168
  %v2679 = vunpack.c.0.s8 %v2678
  %v2680 = vlaneseq
  %v2681 = vshrl.u32 %v2680, 7
  %v2682 = vsub.s32 %v2679, %v2681
  %v2683 = vrot.slane %v2481, %v2682
  %v2685 = vunpack.c.l.s4 1966171168
  %v2686 = vunpack.c.0.s8 %v2685
  %v2687 = vlaneseq
  %v2688 = vshrl.u32 %v2687, 7
  %v2689 = vsub.s32 %v2686, %v2688
  %v2690 = vrot.slane %v2676, %v2689
  %v2691 = vcombine.high %v2683, %v2683
  %v2692 = vcombine.high %v2690, %v2690
  %v2694 = vunpack.c.l.s4 1966171168
  %v2695 = vunpack.c.0.s8 %v2694
  %v2696 = vlaneseq
  %v2697 = vshrl.u32 %v2696, 7
  %v2698 = vsub.s32 %v2695, %v2697
  %v2699 = vrot.slane %v2683, %v2698
  %v2701 = vunpack.c.l.s4 1966171168
  %v2702 = vunpack.c.0.s8 %v2701
  %v2703 = vlaneseq
  %v2704 = vshrl.u32 %v2703, 7
  %v2705 = vsub.s32 %v2702, %v2704
  %v2706 = vrot.slane %v2690, %v2705
  %v2708 = vunpack.c.l.s4 1966171168
  %v2709 = vunpack.c.0.s8 %v2708
  %v2710 = vlaneseq
  %v2711 = vshrl.u32 %v2710, 7
  %v2712 = vsub.s32 %v2709, %v2711
  %v2713 = vrot.slane %v2691, %v2712
  %v2715 = vunpack.c.l.s4 1966171168
  %v2716 = vunpack.c.0.s8 %v2715
  %v2717 = vlaneseq
  %v2718 = vshrl.u32 %v2717, 7
  %v2719 = vsub.s32 %v2716, %v2718
  %v2720 = vrot.slane %v2692, %v2719
  %v2721 = vcombine.high %v2699, %v2699
  %v2722 = vcombine.high %v2706, %v2706
  %v2723 = vcombine.high %v2713, %v2713
  %v2724 = vcombine.high %v2720, %v2720
  %v2733 = vadd.f32 %v2659, %v2699
  %v2734 = vadd.f32 %v2660, %v2713
  %v2735 = vadd.f32 %v2661, %v2721
  %v2736 = vadd.f32 %v2662, %v2723
  %v2737 = vadd.f32 %v2663, %v2706
  %v2738 = vadd.f32 %v2664, %v2720
  %v2739 = vadd.f32 %v2665, %v2722
  %v2740 = vadd.f32 %v2666, %v2724
  %v2741 = vmul.f32 %v2733, 0.5
  %v2742 = vmul.f32 %v2734, 0.5
  %v2743 = vmul.f32 %v2735, 0.5
  %v2744 = vmul.f32 %v2736, 0.5
  %v2745 = vmul.f32 %v2737, 0.5
  %v2746 = vmul.f32 %v2738, 0.5
  %v2747 = vmul.f32 %v2739, 0.5
  %v2748 = vmul.f32 %v2740, 0.5
  %v2749 = vtanh.pop %v2741
  %v2750 = vtanh.pop %v2742
  %v2751 = vtanh.pop %v2743
  %v2752 = vtanh.pop %v2744
  %v2753 = vtanh.pop %v2745
  %v2754 = vtanh.pop %v2746
  %v2755 = vtanh.pop %v2747
  %v2756 = vtanh.pop %v2748
  %v2757 = vadd.f32 %v2749, 1.0
  %v2758 = vadd.f32 %v2750, 1.0
  %v2759 = vadd.f32 %v2751, 1.0
  %v2760 = vadd.f32 %v2752, 1.0
  %v2761 = vadd.f32 %v2753, 1.0
  %v2762 = vadd.f32 %v2754, 1.0
  %v2763 = vadd.f32 %v2755, 1.0
  %v2764 = vadd.f32 %v2756, 1.0
  %v2765 = vmul.f32 %v2757, 0.5
  %v2766 = vmul.f32 %v2758, 0.5
  %v2767 = vmul.f32 %v2759, 0.5
  %v2768 = vmul.f32 %v2760, 0.5
  %v2769 = vmul.f32 %v2761, 0.5
  %v2770 = vmul.f32 %v2762, 0.5
  %v2771 = vmul.f32 %v2763, 0.5
  %v2772 = vmul.f32 %v2764, 0.5
  %v2773 = vadd.f32 %v2550, %v72
  %v2775 = vcombine.high %v2773, %v2773
  %v2777 = vunpack.c.l.s4 1966171168
  %v2778 = vunpack.c.0.s8 %v2777
  %v2779 = vlaneseq
  %v2780 = vshrl.u32 %v2779, 7
  %v2781 = vsub.s32 %v2778, %v2780
  %v2782 = vrot.slane %v2773, %v2781
  %v2784 = vunpack.c.l.s4 1966171168
  %v2785 = vunpack.c.0.s8 %v2784
  %v2786 = vlaneseq
  %v2787 = vshrl.u32 %v2786, 7
  %v2788 = vsub.s32 %v2785, %v2787
  %v2789 = vrot.slane %v2775, %v2788
  %v2790 = vcombine.high %v2782, %v2782
  %v2791 = vcombine.high %v2789, %v2789
  %v2793 = vunpack.c.l.s4 1966171168
  %v2794 = vunpack.c.0.s8 %v2793
  %v2795 = vlaneseq
  %v2796 = vshrl.u32 %v2795, 7
  %v2797 = vsub.s32 %v2794, %v2796
  %v2798 = vrot.slane %v2782, %v2797
  %v2800 = vunpack.c.l.s4 1966171168
  %v2801 = vunpack.c.0.s8 %v2800
  %v2802 = vlaneseq
  %v2803 = vshrl.u32 %v2802, 7
  %v2804 = vsub.s32 %v2801, %v2803
  %v2805 = vrot.slane %v2789, %v2804
  %v2807 = vunpack.c.l.s4 1966171168
  %v2808 = vunpack.c.0.s8 %v2807
  %v2809 = vlaneseq
  %v2810 = vshrl.u32 %v2809, 7
  %v2811 = vsub.s32 %v2808, %v2810
  %v2812 = vrot.slane %v2790, %v2811
  %v2814 = vunpack.c.l.s4 1966171168
  %v2815 = vunpack.c.0.s8 %v2814
  %v2816 = vlaneseq
  %v2817 = vshrl.u32 %v2816, 7
  %v2818 = vsub.s32 %v2815, %v2817
  %v2819 = vrot.slane %v2791, %v2818
  %v2820 = vcombine.high %v2798, %v2798
  %v2821 = vcombine.high %v2805, %v2805
  %v2822 = vcombine.high %v2812, %v2812
  %v2823 = vcombine.high %v2819, %v2819
  %v2832 = vmul.f32 %v2643, %v2798
  %v2833 = vmul.f32 %v2644, %v2812
  %v2834 = vmul.f32 %v2645, %v2820
  %v2835 = vmul.f32 %v2646, %v2822
  %v2836 = vmul.f32 %v2647, %v2805
  %v2837 = vmul.f32 %v2648, %v2819
  %v2838 = vmul.f32 %v2649, %v2821
  %v2839 = vmul.f32 %v2650, %v2823
  %v2840 = vrot.slane %v2339, 2
  %v2841 = vrot.slane %v2341, 2
  %v2842 = vrot.slane %v2343, 2
  %v2843 = vrot.slane %v2345, 2
  %v2844 = vrot.slane %v2347, 2
  %v2845 = vrot.slane %v2349, 2
  %v2846 = vrot.slane %v2351, 2
  %v2847 = vrot.slane %v2353, 2
  %v2856 = vadd.f32 %v2840, %v2832
  %v2857 = vadd.f32 %v2841, %v2833
  %v2858 = vadd.f32 %v2842, %v2834
  %v2859 = vadd.f32 %v2843, %v2835
  %v2860 = vadd.f32 %v2844, %v2836
  %v2861 = vadd.f32 %v2845, %v2837
  %v2862 = vadd.f32 %v2846, %v2838
  %v2863 = vadd.f32 %v2847, %v2839
  %v2864 = vtanh.pop %v2856
  %v2865 = vtanh.pop %v2857
  %v2866 = vtanh.pop %v2858
  %v2867 = vtanh.pop %v2859
  %v2868 = vtanh.pop %v2860
  %v2869 = vtanh.pop %v2861
  %v2870 = vtanh.pop %v2862
  %v2871 = vtanh.pop %v2863
  %v2872 = vsub.f32 1.0, %v2765
  %v2873 = vsub.f32 1.0, %v2766
  %v2874 = vsub.f32 1.0, %v2767
  %v2875 = vsub.f32 1.0, %v2768
  %v2876 = vsub.f32 1.0, %v2769
  %v2877 = vsub.f32 1.0, %v2770
  %v2878 = vsub.f32 1.0, %v2771
  %v2879 = vsub.f32 1.0, %v2772
  %v2880 = vmul.f32 %v2872, %v2864
  %v2881 = vmul.f32 %v2873, %v2865
  %v2882 = vmul.f32 %v2874, %v2866
  %v2883 = vmul.f32 %v2875, %v2867
  %v2884 = vmul.f32 %v2876, %v2868
  %v2885 = vmul.f32 %v2877, %v2869
  %v2886 = vmul.f32 %v2878, %v2870
  %v2887 = vmul.f32 %v2879, %v2871
  %v2888 = vmul.f32 %v2765, %v2330
  %v2889 = vmul.f32 %v2766, %v2331
  %v2890 = vmul.f32 %v2767, %v2332
  %v2891 = vmul.f32 %v2768, %v2333
  %v2892 = vmul.f32 %v2769, %v2334
  %v2893 = vmul.f32 %v2770, %v2335
  %v2894 = vmul.f32 %v2771, %v2336
  %v2895 = vmul.f32 %v2772, %v2337
  %v2896 = vadd.f32 %v2880, %v2888
  %v2897 = vadd.f32 %v2881, %v2889
  %v2898 = vadd.f32 %v2882, %v2890
  %v2899 = vadd.f32 %v2883, %v2891
  %v2900 = vadd.f32 %v2884, %v2892
  %v2901 = vadd.f32 %v2885, %v2893
  %v2902 = vadd.f32 %v2886, %v2894
  %v2903 = vadd.f32 %v2887, %v2895
  %s2904 = scalar_lea.vmem %s0, 5
  %v2905 = vld [vmem:[%s2904] ss:$8 sm:$0x7]
  %s2906 = scalar_lea.vmem %s0, 29
  %v2907 = vld [vmem:[%s2906] ss:$8 sm:$0x7]
  %s2908 = scalar_lea.vmem %s0, 53
  %v2909 = vld [vmem:[%s2908] ss:$8 sm:$0x7]
  %s2910 = scalar_lea.vmem %s0, 77
  %v2911 = vld [vmem:[%s2910] ss:$8 sm:$0x7]
  %s2912 = scalar_lea.vmem %s0, 101
  %v2913 = vld [vmem:[%s2912] ss:$8 sm:$0x7]
  %s2914 = scalar_lea.vmem %s0, 125
  %v2915 = vld [vmem:[%s2914] ss:$8 sm:$0x7]
  %s2916 = scalar_lea.vmem %s0, 149
  %v2917 = vld [vmem:[%s2916] ss:$8 sm:$0x7]
  %s2918 = scalar_lea.vmem %s0, 173
  %v2919 = vld [vmem:[%s2918] ss:$8 sm:$0x7]
  %v2928 = vcombine.low %v2896, %v2897
  %v2929 = vcombine.low %v2898, %v2899
  %v2930 = vcombine.low %v2900, %v2901
  %v2931 = vcombine.low %v2902, %v2903
  %v2933 = vunpack.c.l.s4 1966171168
  %v2934 = vunpack.c.0.s8 %v2933
  %v2935 = vlaneseq
  %v2936 = vshrl.u32 %v2935, 7
  %v2937 = vsub.s32 %v2934, %v2936
  %v2938 = vrot.slane %v2928, %v2937
  %v2940 = vunpack.c.l.s4 1966171168
  %v2941 = vunpack.c.0.s8 %v2940
  %v2942 = vlaneseq
  %v2943 = vshrl.u32 %v2942, 7
  %v2944 = vsub.s32 %v2941, %v2943
  %v2945 = vrot.slane %v2929, %v2944
  %v2947 = vunpack.c.l.s4 1966171168
  %v2948 = vunpack.c.0.s8 %v2947
  %v2949 = vlaneseq
  %v2950 = vshrl.u32 %v2949, 7
  %v2951 = vsub.s32 %v2948, %v2950
  %v2952 = vrot.slane %v2930, %v2951
  %v2954 = vunpack.c.l.s4 1966171168
  %v2955 = vunpack.c.0.s8 %v2954
  %v2956 = vlaneseq
  %v2957 = vshrl.u32 %v2956, 7
  %v2958 = vsub.s32 %v2955, %v2957
  %v2959 = vrot.slane %v2931, %v2958
  %v2960 = vcombine.low %v2938, %v2945
  %v2961 = vcombine.low %v2952, %v2959
  %v2963 = vunpack.c.l.s4 1966171168
  %v2964 = vunpack.c.0.s8 %v2963
  %v2965 = vlaneseq
  %v2966 = vshrl.u32 %v2965, 7
  %v2967 = vsub.s32 %v2964, %v2966
  %v2968 = vrot.slane %v2960, %v2967
  %v2970 = vunpack.c.l.s4 1966171168
  %v2971 = vunpack.c.0.s8 %v2970
  %v2972 = vlaneseq
  %v2973 = vshrl.u32 %v2972, 7
  %v2974 = vsub.s32 %v2971, %v2973
  %v2975 = vrot.slane %v2961, %v2974
  %v2976 = vcombine.low %v2968, %v2975
  %2978 = vmatprep.subr.mxu0 %v20
  %2979 = vmatpush1.msra.mxu0 %v19
  %2980 = vmatprep.subr.mxu0 %v23
  %2981 = vmatpush1.msra.mxu0 %v22
  %2982 = vmatprep.subr.mxu0 %v26
  %2983 = vmatpush1.msra.mxu0 %v25
  %2984 = vmatprep.subr.mxu0 %v29
  %2985 = vmatpush1.msra.mxu0 %v28
  %2986 = vmatprep.subr.mxu0 %v32
  %2987 = vmatpush1.msra.mxu0 %v31
  %2988 = vmatprep.subr.mxu0 %v35
  %2989 = vmatpush1.msra.mxu0 %v34
  %2990 = vmatprep.subr.mxu0 %v38
  %2991 = vmatpush1.msra.mxu0 %v37
  %2992 = vmatprep.subr.mxu0 %v41
  %2993 = vmatpush1.msra.mxu0 %v40
  %2994 = vmatprep.subr.mxu0 %v44
  %2995 = vmatpush1.msra.mxu0 %v43
  %2996 = vmatprep.subr.mxu0 %v47
  %2997 = vmatpush1.msra.mxu0 %v46
  %2998 = vmatprep.subr.mxu0 %v50
  %2999 = vmatpush1.msra.mxu0 %v49
  %3000 = vmatprep.subr.mxu0 %v53
  %3001 = vmatpush1.msra.mxu0 %v52
  %3002 = vmatprep.subr.mxu0 %v56
  %3003 = vmatpush1.msra.mxu0 %v55
  %3004 = vmatprep.subr.mxu0 %v59
  %3005 = vmatpush1.msra.mxu0 %v58
  %3006 = vmatprep.subr.mxu0 %v62
  %3007 = vmatpush1.msra.mxu0 %v61
  %3008 = vmatprep.subr.mxu0 %v65
  %3009 = vmatpush1.msra.mxu0 %v64
  %3010 = vmatprep.subr.mxu0 0.0
  %3011 = vmatpush1.msra.mxu0 0.0
  %3012 = vmatprep.subr.mxu0 0.0
  %3013 = vmatpush1.msra.mxu0 0.0
  %3014 = vmatprep.subr.mxu0 0.0
  %3015 = vmatpush1.msra.mxu0 0.0
  %3016 = vmatprep.subr.mxu0 0.0
  %3017 = vmatpush1.msra.mxu0 0.0
  %3018 = vmatprep.subr.mxu0 0.0
  %3019 = vmatpush1.msra.mxu0 0.0
  %3020 = vmatprep.subr.mxu0 0.0
  %3021 = vmatpush1.msra.mxu0 0.0
  %3022 = vmatprep.subr.mxu0 0.0
  %3023 = vmatpush1.msra.mxu0 0.0
  %3024 = vmatprep.subr.mxu0 0.0
  %3025 = vmatpush1.msra.mxu0 0.0
  %3026 = vmatprep.subr.mxu0 0.0
  %3027 = vmatpush1.msra.mxu0 0.0
  %3028 = vmatprep.subr.mxu0 0.0
  %3029 = vmatpush1.msra.mxu0 0.0
  %3030 = vmatprep.subr.mxu0 0.0
  %3031 = vmatpush1.msra.mxu0 0.0
  %3032 = vmatprep.subr.mxu0 0.0
  %3033 = vmatpush1.msra.mxu0 0.0
  %3034 = vmatprep.subr.mxu0 0.0
  %3035 = vmatpush1.msra.mxu0 0.0
  %3036 = vmatprep.subr.mxu0 0.0
  %3037 = vmatpush1.msra.mxu0 0.0
  %3038 = vmatprep.subr.mxu0 0.0
  %3039 = vmatpush1.msra.mxu0 0.0
  %3040 = vmatprep.subr.mxu0 0.0
  %3041 = vmatpush1.msra.mxu0 0.0
  %3042 = vmatprep.mubr.f32.mxu0 0.0
  %3043 = vmatmul.mubr.f32.gmra.mrb[0].mxu0 %v2976
  %v3044 = vpop.f32.mrb[0].mxu0
  %v3045 = vadd.f32 0.0, %v3044
  %v3046 = vpop.f32.mrb[0].mxu0
  %v3047 = vadd.f32 0.0, %v3046
  %3048 = vdwg.mxu0
  %3049 = vmatprep.subr.mxu0 0.0
  %3050 = vmatpush1.msra.mxu0 %v21
  %3051 = vmatprep.subr.mxu0 0.0
  %3052 = vmatpush1.msra.mxu0 %v24
  %3053 = vmatprep.subr.mxu0 0.0
  %3054 = vmatpush1.msra.mxu0 %v27
  %3055 = vmatprep.subr.mxu0 0.0
  %3056 = vmatpush1.msra.mxu0 %v30
  %3057 = vmatprep.subr.mxu0 0.0
  %3058 = vmatpush1.msra.mxu0 %v33
  %3059 = vmatprep.subr.mxu0 0.0
  %3060 = vmatpush1.msra.mxu0 %v36
  %3061 = vmatprep.subr.mxu0 0.0
  %3062 = vmatpush1.msra.mxu0 %v39
  %3063 = vmatprep.subr.mxu0 0.0
  %3064 = vmatpush1.msra.mxu0 %v42
  %3065 = vmatprep.subr.mxu0 0.0
  %3066 = vmatpush1.msra.mxu0 %v45
  %3067 = vmatprep.subr.mxu0 0.0
  %3068 = vmatpush1.msra.mxu0 %v48
  %3069 = vmatprep.subr.mxu0 0.0
  %3070 = vmatpush1.msra.mxu0 %v51
  %3071 = vmatprep.subr.mxu0 0.0
  %3072 = vmatpush1.msra.mxu0 %v54
  %3073 = vmatprep.subr.mxu0 0.0
  %3074 = vmatpush1.msra.mxu0 %v57
  %3075 = vmatprep.subr.mxu0 0.0
  %3076 = vmatpush1.msra.mxu0 %v60
  %3077 = vmatprep.subr.mxu0 0.0
  %3078 = vmatpush1.msra.mxu0 %v63
  %3079 = vmatprep.subr.mxu0 0.0
  %3080 = vmatpush1.msra.mxu0 %v66
  %3081 = vmatprep.subr.mxu0 0.0
  %3082 = vmatpush1.msra.mxu0 0.0
  %3083 = vmatprep.subr.mxu0 0.0
  %3084 = vmatpush1.msra.mxu0 0.0
  %3085 = vmatprep.subr.mxu0 0.0
  %3086 = vmatpush1.msra.mxu0 0.0
  %3087 = vmatprep.subr.mxu0 0.0
  %3088 = vmatpush1.msra.mxu0 0.0
  %3089 = vmatprep.subr.mxu0 0.0
  %3090 = vmatpush1.msra.mxu0 0.0
  %3091 = vmatprep.subr.mxu0 0.0
  %3092 = vmatpush1.msra.mxu0 0.0
  %3093 = vmatprep.subr.mxu0 0.0
  %3094 = vmatpush1.msra.mxu0 0.0
  %3095 = vmatprep.subr.mxu0 0.0
  %3096 = vmatpush1.msra.mxu0 0.0
  %3097 = vmatprep.subr.mxu0 0.0
  %3098 = vmatpush1.msra.mxu0 0.0
  %3099 = vmatprep.subr.mxu0 0.0
  %3100 = vmatpush1.msra.mxu0 0.0
  %3101 = vmatprep.subr.mxu0 0.0
  %3102 = vmatpush1.msra.mxu0 0.0
  %3103 = vmatprep.subr.mxu0 0.0
  %3104 = vmatpush1.msra.mxu0 0.0
  %3105 = vmatprep.subr.mxu0 0.0
  %3106 = vmatpush1.msra.mxu0 0.0
  %3107 = vmatprep.subr.mxu0 0.0
  %3108 = vmatpush1.msra.mxu0 0.0
  %3109 = vmatprep.subr.mxu0 0.0
  %3110 = vmatpush1.msra.mxu0 0.0
  %3111 = vmatprep.subr.mxu0 0.0
  %3112 = vmatpush1.msra.mxu0 0.0
  %3113 = vmatprep.mubr.f32.mxu0 0.0
  %3114 = vmatmul.mubr.f32.gmra.mrb[0].mxu0 %v2976
  %v3115 = vpop.f32.mrb[0].mxu0
  %v3116 = vadd.f32 0.0, %v3115
  %v3117 = vpop.f32.mrb[0].mxu0
  %3118 = vdwg.mxu0
  %v3120 = vcombine.high %v3045, %v3045
  %v3122 = vunpack.c.l.s4 1966171168
  %v3123 = vunpack.c.0.s8 %v3122
  %v3124 = vlaneseq
  %v3125 = vshrl.u32 %v3124, 7
  %v3126 = vsub.s32 %v3123, %v3125
  %v3127 = vrot.slane %v3045, %v3126
  %v3129 = vunpack.c.l.s4 1966171168
  %v3130 = vunpack.c.0.s8 %v3129
  %v3131 = vlaneseq
  %v3132 = vshrl.u32 %v3131, 7
  %v3133 = vsub.s32 %v3130, %v3132
  %v3134 = vrot.slane %v3120, %v3133
  %v3135 = vcombine.high %v3127, %v3127
  %v3136 = vcombine.high %v3134, %v3134
  %v3138 = vunpack.c.l.s4 1966171168
  %v3139 = vunpack.c.0.s8 %v3138
  %v3140 = vlaneseq
  %v3141 = vshrl.u32 %v3140, 7
  %v3142 = vsub.s32 %v3139, %v3141
  %v3143 = vrot.slane %v3127, %v3142
  %v3145 = vunpack.c.l.s4 1966171168
  %v3146 = vunpack.c.0.s8 %v3145
  %v3147 = vlaneseq
  %v3148 = vshrl.u32 %v3147, 7
  %v3149 = vsub.s32 %v3146, %v3148
  %v3150 = vrot.slane %v3134, %v3149
  %v3152 = vunpack.c.l.s4 1966171168
  %v3153 = vunpack.c.0.s8 %v3152
  %v3154 = vlaneseq
  %v3155 = vshrl.u32 %v3154, 7
  %v3156 = vsub.s32 %v3153, %v3155
  %v3157 = vrot.slane %v3135, %v3156
  %v3159 = vunpack.c.l.s4 1966171168
  %v3160 = vunpack.c.0.s8 %v3159
  %v3161 = vlaneseq
  %v3162 = vshrl.u32 %v3161, 7
  %v3163 = vsub.s32 %v3160, %v3162
  %v3164 = vrot.slane %v3136, %v3163
  %v3165 = vcombine.high %v3143, %v3143
  %v3166 = vcombine.high %v3150, %v3150
  %v3167 = vcombine.high %v3157, %v3157
  %v3168 = vcombine.high %v3164, %v3164
  %v3177 = vadd.f32 %v2905, %v3143
  %v3178 = vadd.f32 %v2907, %v3157
  %v3179 = vadd.f32 %v2909, %v3165
  %v3180 = vadd.f32 %v2911, %v3167
  %v3181 = vadd.f32 %v2913, %v3150
  %v3182 = vadd.f32 %v2915, %v3164
  %v3183 = vadd.f32 %v2917, %v3166
  %v3184 = vadd.f32 %v2919, %v3168
  %v3185 = vmul.f32 %v3177, 0.5
  %v3186 = vmul.f32 %v3178, 0.5
  %v3187 = vmul.f32 %v3179, 0.5
  %v3188 = vmul.f32 %v3180, 0.5
  %v3189 = vmul.f32 %v3181, 0.5
  %v3190 = vmul.f32 %v3182, 0.5
  %v3191 = vmul.f32 %v3183, 0.5
  %v3192 = vmul.f32 %v3184, 0.5
  %v3193 = vtanh.pop %v3185
  %v3194 = vtanh.pop %v3186
  %v3195 = vtanh.pop %v3187
  %v3196 = vtanh.pop %v3188
  %v3197 = vtanh.pop %v3189
  %v3198 = vtanh.pop %v3190
  %v3199 = vtanh.pop %v3191
  %v3200 = vtanh.pop %v3192
  %v3201 = vadd.f32 %v3193, 1.0
  %v3202 = vadd.f32 %v3194, 1.0
  %v3203 = vadd.f32 %v3195, 1.0
  %v3204 = vadd.f32 %v3196, 1.0
  %v3205 = vadd.f32 %v3197, 1.0
  %v3206 = vadd.f32 %v3198, 1.0
  %v3207 = vadd.f32 %v3199, 1.0
  %v3208 = vadd.f32 %v3200, 1.0
  %v3209 = vmul.f32 %v3201, 0.5
  %v3210 = vmul.f32 %v3202, 0.5
  %v3211 = vmul.f32 %v3203, 0.5
  %v3212 = vmul.f32 %v3204, 0.5
  %v3213 = vmul.f32 %v3205, 0.5
  %v3214 = vmul.f32 %v3206, 0.5
  %v3215 = vmul.f32 %v3207, 0.5
  %v3216 = vmul.f32 %v3208, 0.5
  %v3225 = vrot.slane %v2905, 1
  %v3226 = vrot.slane %v2907, 1
  %v3227 = vrot.slane %v2909, 1
  %v3228 = vrot.slane %v2911, 1
  %v3229 = vrot.slane %v2913, 1
  %v3230 = vrot.slane %v2915, 1
  %v3231 = vrot.slane %v2917, 1
  %v3232 = vrot.slane %v2919, 1
  %v3242 = vcombine.high %v3047, %v3047
  %v3244 = vunpack.c.l.s4 1966171168
  %v3245 = vunpack.c.0.s8 %v3244
  %v3246 = vlaneseq
  %v3247 = vshrl.u32 %v3246, 7
  %v3248 = vsub.s32 %v3245, %v3247
  %v3249 = vrot.slane %v3047, %v3248
  %v3251 = vunpack.c.l.s4 1966171168
  %v3252 = vunpack.c.0.s8 %v3251
  %v3253 = vlaneseq
  %v3254 = vshrl.u32 %v3253, 7
  %v3255 = vsub.s32 %v3252, %v3254
  %v3256 = vrot.slane %v3242, %v3255
  %v3257 = vcombine.high %v3249, %v3249
  %v3258 = vcombine.high %v3256, %v3256
  %v3260 = vunpack.c.l.s4 1966171168
  %v3261 = vunpack.c.0.s8 %v3260
  %v3262 = vlaneseq
  %v3263 = vshrl.u32 %v3262, 7
  %v3264 = vsub.s32 %v3261, %v3263
  %v3265 = vrot.slane %v3249, %v3264
  %v3267 = vunpack.c.l.s4 1966171168
  %v3268 = vunpack.c.0.s8 %v3267
  %v3269 = vlaneseq
  %v3270 = vshrl.u32 %v3269, 7
  %v3271 = vsub.s32 %v3268, %v3270
  %v3272 = vrot.slane %v3256, %v3271
  %v3274 = vunpack.c.l.s4 1966171168
  %v3275 = vunpack.c.0.s8 %v3274
  %v3276 = vlaneseq
  %v3277 = vshrl.u32 %v3276, 7
  %v3278 = vsub.s32 %v3275, %v3277
  %v3279 = vrot.slane %v3257, %v3278
  %v3281 = vunpack.c.l.s4 1966171168
  %v3282 = vunpack.c.0.s8 %v3281
  %v3283 = vlaneseq
  %v3284 = vshrl.u32 %v3283, 7
  %v3285 = vsub.s32 %v3282, %v3284
  %v3286 = vrot.slane %v3258, %v3285
  %v3287 = vcombine.high %v3265, %v3265
  %v3288 = vcombine.high %v3272, %v3272
  %v3289 = vcombine.high %v3279, %v3279
  %v3290 = vcombine.high %v3286, %v3286
  %v3299 = vadd.f32 %v3225, %v3265
  %v3300 = vadd.f32 %v3226, %v3279
  %v3301 = vadd.f32 %v3227, %v3287
  %v3302 = vadd.f32 %v3228, %v3289
  %v3303 = vadd.f32 %v3229, %v3272
  %v3304 = vadd.f32 %v3230, %v3286
  %v3305 = vadd.f32 %v3231, %v3288
  %v3306 = vadd.f32 %v3232, %v3290
  %v3307 = vmul.f32 %v3299, 0.5
  %v3308 = vmul.f32 %v3300, 0.5
  %v3309 = vmul.f32 %v3301, 0.5
  %v3310 = vmul.f32 %v3302, 0.5
  %v3311 = vmul.f32 %v3303, 0.5
  %v3312 = vmul.f32 %v3304, 0.5
  %v3313 = vmul.f32 %v3305, 0.5
  %v3314 = vmul.f32 %v3306, 0.5
  %v3315 = vtanh.pop %v3307
  %v3316 = vtanh.pop %v3308
  %v3317 = vtanh.pop %v3309
  %v3318 = vtanh.pop %v3310
  %v3319 = vtanh.pop %v3311
  %v3320 = vtanh.pop %v3312
  %v3321 = vtanh.pop %v3313
  %v3322 = vtanh.pop %v3314
  %v3323 = vadd.f32 %v3315, 1.0
  %v3324 = vadd.f32 %v3316, 1.0
  %v3325 = vadd.f32 %v3317, 1.0
  %v3326 = vadd.f32 %v3318, 1.0
  %v3327 = vadd.f32 %v3319, 1.0
  %v3328 = vadd.f32 %v3320, 1.0
  %v3329 = vadd.f32 %v3321, 1.0
  %v3330 = vadd.f32 %v3322, 1.0
  %v3331 = vmul.f32 %v3323, 0.5
  %v3332 = vmul.f32 %v3324, 0.5
  %v3333 = vmul.f32 %v3325, 0.5
  %v3334 = vmul.f32 %v3326, 0.5
  %v3335 = vmul.f32 %v3327, 0.5
  %v3336 = vmul.f32 %v3328, 0.5
  %v3337 = vmul.f32 %v3329, 0.5
  %v3338 = vmul.f32 %v3330, 0.5
  %v3339 = vadd.f32 %v3116, %v72
  %v3341 = vcombine.high %v3339, %v3339
  %v3343 = vunpack.c.l.s4 1966171168
  %v3344 = vunpack.c.0.s8 %v3343
  %v3345 = vlaneseq
  %v3346 = vshrl.u32 %v3345, 7
  %v3347 = vsub.s32 %v3344, %v3346
  %v3348 = vrot.slane %v3339, %v3347
  %v3350 = vunpack.c.l.s4 1966171168
  %v3351 = vunpack.c.0.s8 %v3350
  %v3352 = vlaneseq
  %v3353 = vshrl.u32 %v3352, 7
  %v3354 = vsub.s32 %v3351, %v3353
  %v3355 = vrot.slane %v3341, %v3354
  %v3356 = vcombine.high %v3348, %v3348
  %v3357 = vcombine.high %v3355, %v3355
  %v3359 = vunpack.c.l.s4 1966171168
  %v3360 = vunpack.c.0.s8 %v3359
  %v3361 = vlaneseq
  %v3362 = vshrl.u32 %v3361, 7
  %v3363 = vsub.s32 %v3360, %v3362
  %v3364 = vrot.slane %v3348, %v3363
  %v3366 = vunpack.c.l.s4 1966171168
  %v3367 = vunpack.c.0.s8 %v3366
  %v3368 = vlaneseq
  %v3369 = vshrl.u32 %v3368, 7
  %v3370 = vsub.s32 %v3367, %v3369
  %v3371 = vrot.slane %v3355, %v3370
  %v3373 = vunpack.c.l.s4 1966171168
  %v3374 = vunpack.c.0.s8 %v3373
  %v3375 = vlaneseq
  %v3376 = vshrl.u32 %v3375, 7
  %v3377 = vsub.s32 %v3374, %v3376
  %v3378 = vrot.slane %v3356, %v3377
  %v3380 = vunpack.c.l.s4 1966171168
  %v3381 = vunpack.c.0.s8 %v3380
  %v3382 = vlaneseq
  %v3383 = vshrl.u32 %v3382, 7
  %v3384 = vsub.s32 %v3381, %v3383
  %v3385 = vrot.slane %v3357, %v3384
  %v3386 = vcombine.high %v3364, %v3364
  %v3387 = vcombine.high %v3371, %v3371
  %v3388 = vcombine.high %v3378, %v3378
  %v3389 = vcombine.high %v3385, %v3385
  %v3398 = vmul.f32 %v3209, %v3364
  %v3399 = vmul.f32 %v3210, %v3378
  %v3400 = vmul.f32 %v3211, %v3386
  %v3401 = vmul.f32 %v3212, %v3388
  %v3402 = vmul.f32 %v3213, %v3371
  %v3403 = vmul.f32 %v3214, %v3385
  %v3404 = vmul.f32 %v3215, %v3387
  %v3405 = vmul.f32 %v3216, %v3389
  %v3406 = vrot.slane %v2905, 2
  %v3407 = vrot.slane %v2907, 2
  %v3408 = vrot.slane %v2909, 2
  %v3409 = vrot.slane %v2911, 2
  %v3410 = vrot.slane %v2913, 2
  %v3411 = vrot.slane %v2915, 2
  %v3412 = vrot.slane %v2917, 2
  %v3413 = vrot.slane %v2919, 2
  %v3422 = vadd.f32 %v3406, %v3398
  %v3423 = vadd.f32 %v3407, %v3399
  %v3424 = vadd.f32 %v3408, %v3400
  %v3425 = vadd.f32 %v3409, %v3401
  %v3426 = vadd.f32 %v3410, %v3402
  %v3427 = vadd.f32 %v3411, %v3403
  %v3428 = vadd.f32 %v3412, %v3404
  %v3429 = vadd.f32 %v3413, %v3405
  %v3430 = vtanh.pop %v3422
  %v3431 = vtanh.pop %v3423
  %v3432 = vtanh.pop %v3424
  %v3433 = vtanh.pop %v3425
  %v3434 = vtanh.pop %v3426
  %v3435 = vtanh.pop %v3427
  %v3436 = vtanh.pop %v3428
  %v3437 = vtanh.pop %v3429
  %v3438 = vsub.f32 1.0, %v3331
  %v3439 = vsub.f32 1.0, %v3332
  %v3440 = vsub.f32 1.0, %v3333
  %v3441 = vsub.f32 1.0, %v3334
  %v3442 = vsub.f32 1.0, %v3335
  %v3443 = vsub.f32 1.0, %v3336
  %v3444 = vsub.f32 1.0, %v3337
  %v3445 = vsub.f32 1.0, %v3338
  %v3446 = vmul.f32 %v3438, %v3430
  %v3447 = vmul.f32 %v3439, %v3431
  %v3448 = vmul.f32 %v3440, %v3432
  %v3449 = vmul.f32 %v3441, %v3433
  %v3450 = vmul.f32 %v3442, %v3434
  %v3451 = vmul.f32 %v3443, %v3435
  %v3452 = vmul.f32 %v3444, %v3436
  %v3453 = vmul.f32 %v3445, %v3437
  %v3454 = vmul.f32 %v3331, %v2896
  %v3455 = vmul.f32 %v3332, %v2897
  %v3456 = vmul.f32 %v3333, %v2898
  %v3457 = vmul.f32 %v3334, %v2899
  %v3458 = vmul.f32 %v3335, %v2900
  %v3459 = vmul.f32 %v3336, %v2901
  %v3460 = vmul.f32 %v3337, %v2902
  %v3461 = vmul.f32 %v3338, %v2903
  %v3462 = vadd.f32 %v3446, %v3454
  %v3463 = vadd.f32 %v3447, %v3455
  %v3464 = vadd.f32 %v3448, %v3456
  %v3465 = vadd.f32 %v3449, %v3457
  %v3466 = vadd.f32 %v3450, %v3458
  %v3467 = vadd.f32 %v3451, %v3459
  %v3468 = vadd.f32 %v3452, %v3460
  %v3469 = vadd.f32 %v3453, %v3461
  %s3470 = scalar_lea.vmem %s0, 6
  %v3471 = vld [vmem:[%s3470] ss:$8 sm:$0x7]
  %s3472 = scalar_lea.vmem %s0, 30
  %v3473 = vld [vmem:[%s3472] ss:$8 sm:$0x7]
  %s3474 = scalar_lea.vmem %s0, 54
  %v3475 = vld [vmem:[%s3474] ss:$8 sm:$0x7]
  %s3476 = scalar_lea.vmem %s0, 78
  %v3477 = vld [vmem:[%s3476] ss:$8 sm:$0x7]
  %s3478 = scalar_lea.vmem %s0, 102
  %v3479 = vld [vmem:[%s3478] ss:$8 sm:$0x7]
  %s3480 = scalar_lea.vmem %s0, 126
  %v3481 = vld [vmem:[%s3480] ss:$8 sm:$0x7]
  %s3482 = scalar_lea.vmem %s0, 150
  %v3483 = vld [vmem:[%s3482] ss:$8 sm:$0x7]
  %s3484 = scalar_lea.vmem %s0, 174
  %v3485 = vld [vmem:[%s3484] ss:$8 sm:$0x7]
  %v3494 = vcombine.low %v3462, %v3463
  %v3495 = vcombine.low %v3464, %v3465
  %v3496 = vcombine.low %v3466, %v3467
  %v3497 = vcombine.low %v3468, %v3469
  %v3499 = vunpack.c.l.s4 1966171168
  %v3500 = vunpack.c.0.s8 %v3499
  %v3501 = vlaneseq
  %v3502 = vshrl.u32 %v3501, 7
  %v3503 = vsub.s32 %v3500, %v3502
  %v3504 = vrot.slane %v3494, %v3503
  %v3506 = vunpack.c.l.s4 1966171168
  %v3507 = vunpack.c.0.s8 %v3506
  %v3508 = vlaneseq
  %v3509 = vshrl.u32 %v3508, 7
  %v3510 = vsub.s32 %v3507, %v3509
  %v3511 = vrot.slane %v3495, %v3510
  %v3513 = vunpack.c.l.s4 1966171168
  %v3514 = vunpack.c.0.s8 %v3513
  %v3515 = vlaneseq
  %v3516 = vshrl.u32 %v3515, 7
  %v3517 = vsub.s32 %v3514, %v3516
  %v3518 = vrot.slane %v3496, %v3517
  %v3520 = vunpack.c.l.s4 1966171168
  %v3521 = vunpack.c.0.s8 %v3520
  %v3522 = vlaneseq
  %v3523 = vshrl.u32 %v3522, 7
  %v3524 = vsub.s32 %v3521, %v3523
  %v3525 = vrot.slane %v3497, %v3524
  %v3526 = vcombine.low %v3504, %v3511
  %v3527 = vcombine.low %v3518, %v3525
  %v3529 = vunpack.c.l.s4 1966171168
  %v3530 = vunpack.c.0.s8 %v3529
  %v3531 = vlaneseq
  %v3532 = vshrl.u32 %v3531, 7
  %v3533 = vsub.s32 %v3530, %v3532
  %v3534 = vrot.slane %v3526, %v3533
  %v3536 = vunpack.c.l.s4 1966171168
  %v3537 = vunpack.c.0.s8 %v3536
  %v3538 = vlaneseq
  %v3539 = vshrl.u32 %v3538, 7
  %v3540 = vsub.s32 %v3537, %v3539
  %v3541 = vrot.slane %v3527, %v3540
  %v3542 = vcombine.low %v3534, %v3541
  %3544 = vmatprep.subr.mxu0 %v20
  %3545 = vmatpush1.msra.mxu0 %v19
  %3546 = vmatprep.subr.mxu0 %v23
  %3547 = vmatpush1.msra.mxu0 %v22
  %3548 = vmatprep.subr.mxu0 %v26
  %3549 = vmatpush1.msra.mxu0 %v25
  %3550 = vmatprep.subr.mxu0 %v29
  %3551 = vmatpush1.msra.mxu0 %v28
  %3552 = vmatprep.subr.mxu0 %v32
  %3553 = vmatpush1.msra.mxu0 %v31
  %3554 = vmatprep.subr.mxu0 %v35
  %3555 = vmatpush1.msra.mxu0 %v34
  %3556 = vmatprep.subr.mxu0 %v38
  %3557 = vmatpush1.msra.mxu0 %v37
  %3558 = vmatprep.subr.mxu0 %v41
  %3559 = vmatpush1.msra.mxu0 %v40
  %3560 = vmatprep.subr.mxu0 %v44
  %3561 = vmatpush1.msra.mxu0 %v43
  %3562 = vmatprep.subr.mxu0 %v47
  %3563 = vmatpush1.msra.mxu0 %v46
  %3564 = vmatprep.subr.mxu0 %v50
  %3565 = vmatpush1.msra.mxu0 %v49
  %3566 = vmatprep.subr.mxu0 %v53
  %3567 = vmatpush1.msra.mxu0 %v52
  %3568 = vmatprep.subr.mxu0 %v56
  %3569 = vmatpush1.msra.mxu0 %v55
  %3570 = vmatprep.subr.mxu0 %v59
  %3571 = vmatpush1.msra.mxu0 %v58
  %3572 = vmatprep.subr.mxu0 %v62
  %3573 = vmatpush1.msra.mxu0 %v61
  %3574 = vmatprep.subr.mxu0 %v65
  %3575 = vmatpush1.msra.mxu0 %v64
  %3576 = vmatprep.subr.mxu0 0.0
  %3577 = vmatpush1.msra.mxu0 0.0
  %3578 = vmatprep.subr.mxu0 0.0
  %3579 = vmatpush1.msra.mxu0 0.0
  %3580 = vmatprep.subr.mxu0 0.0
  %3581 = vmatpush1.msra.mxu0 0.0
  %3582 = vmatprep.subr.mxu0 0.0
  %3583 = vmatpush1.msra.mxu0 0.0
  %3584 = vmatprep.subr.mxu0 0.0
  %3585 = vmatpush1.msra.mxu0 0.0
  %3586 = vmatprep.subr.mxu0 0.0
  %3587 = vmatpush1.msra.mxu0 0.0
  %3588 = vmatprep.subr.mxu0 0.0
  %3589 = vmatpush1.msra.mxu0 0.0
  %3590 = vmatprep.subr.mxu0 0.0
  %3591 = vmatpush1.msra.mxu0 0.0
  %3592 = vmatprep.subr.mxu0 0.0
  %3593 = vmatpush1.msra.mxu0 0.0
  %3594 = vmatprep.subr.mxu0 0.0
  %3595 = vmatpush1.msra.mxu0 0.0
  %3596 = vmatprep.subr.mxu0 0.0
  %3597 = vmatpush1.msra.mxu0 0.0
  %3598 = vmatprep.subr.mxu0 0.0
  %3599 = vmatpush1.msra.mxu0 0.0
  %3600 = vmatprep.subr.mxu0 0.0
  %3601 = vmatpush1.msra.mxu0 0.0
  %3602 = vmatprep.subr.mxu0 0.0
  %3603 = vmatpush1.msra.mxu0 0.0
  %3604 = vmatprep.subr.mxu0 0.0
  %3605 = vmatpush1.msra.mxu0 0.0
  %3606 = vmatprep.subr.mxu0 0.0
  %3607 = vmatpush1.msra.mxu0 0.0
  %3608 = vmatprep.mubr.f32.mxu0 0.0
  %3609 = vmatmul.mubr.f32.gmra.mrb[0].mxu0 %v3542
  %v3610 = vpop.f32.mrb[0].mxu0
  %v3611 = vadd.f32 0.0, %v3610
  %v3612 = vpop.f32.mrb[0].mxu0
  %v3613 = vadd.f32 0.0, %v3612
  %3614 = vdwg.mxu0
  %3615 = vmatprep.subr.mxu0 0.0
  %3616 = vmatpush1.msra.mxu0 %v21
  %3617 = vmatprep.subr.mxu0 0.0
  %3618 = vmatpush1.msra.mxu0 %v24
  %3619 = vmatprep.subr.mxu0 0.0
  %3620 = vmatpush1.msra.mxu0 %v27
  %3621 = vmatprep.subr.mxu0 0.0
  %3622 = vmatpush1.msra.mxu0 %v30
  %3623 = vmatprep.subr.mxu0 0.0
  %3624 = vmatpush1.msra.mxu0 %v33
  %3625 = vmatprep.subr.mxu0 0.0
  %3626 = vmatpush1.msra.mxu0 %v36
  %3627 = vmatprep.subr.mxu0 0.0
  %3628 = vmatpush1.msra.mxu0 %v39
  %3629 = vmatprep.subr.mxu0 0.0
  %3630 = vmatpush1.msra.mxu0 %v42
  %3631 = vmatprep.subr.mxu0 0.0
  %3632 = vmatpush1.msra.mxu0 %v45
  %3633 = vmatprep.subr.mxu0 0.0
  %3634 = vmatpush1.msra.mxu0 %v48
  %3635 = vmatprep.subr.mxu0 0.0
  %3636 = vmatpush1.msra.mxu0 %v51
  %3637 = vmatprep.subr.mxu0 0.0
  %3638 = vmatpush1.msra.mxu0 %v54
  %3639 = vmatprep.subr.mxu0 0.0
  %3640 = vmatpush1.msra.mxu0 %v57
  %3641 = vmatprep.subr.mxu0 0.0
  %3642 = vmatpush1.msra.mxu0 %v60
  %3643 = vmatprep.subr.mxu0 0.0
  %3644 = vmatpush1.msra.mxu0 %v63
  %3645 = vmatprep.subr.mxu0 0.0
  %3646 = vmatpush1.msra.mxu0 %v66
  %3647 = vmatprep.subr.mxu0 0.0
  %3648 = vmatpush1.msra.mxu0 0.0
  %3649 = vmatprep.subr.mxu0 0.0
  %3650 = vmatpush1.msra.mxu0 0.0
  %3651 = vmatprep.subr.mxu0 0.0
  %3652 = vmatpush1.msra.mxu0 0.0
  %3653 = vmatprep.subr.mxu0 0.0
  %3654 = vmatpush1.msra.mxu0 0.0
  %3655 = vmatprep.subr.mxu0 0.0
  %3656 = vmatpush1.msra.mxu0 0.0
  %3657 = vmatprep.subr.mxu0 0.0
  %3658 = vmatpush1.msra.mxu0 0.0
  %3659 = vmatprep.subr.mxu0 0.0
  %3660 = vmatpush1.msra.mxu0 0.0
  %3661 = vmatprep.subr.mxu0 0.0
  %3662 = vmatpush1.msra.mxu0 0.0
  %3663 = vmatprep.subr.mxu0 0.0
  %3664 = vmatpush1.msra.mxu0 0.0
  %3665 = vmatprep.subr.mxu0 0.0
  %3666 = vmatpush1.msra.mxu0 0.0
  %3667 = vmatprep.subr.mxu0 0.0
  %3668 = vmatpush1.msra.mxu0 0.0
  %3669 = vmatprep.subr.mxu0 0.0
  %3670 = vmatpush1.msra.mxu0 0.0
  %3671 = vmatprep.subr.mxu0 0.0
  %3672 = vmatpush1.msra.mxu0 0.0
  %3673 = vmatprep.subr.mxu0 0.0
  %3674 = vmatpush1.msra.mxu0 0.0
  %3675 = vmatprep.subr.mxu0 0.0
  %3676 = vmatpush1.msra.mxu0 0.0
  %3677 = vmatprep.subr.mxu0 0.0
  %3678 = vmatpush1.msra.mxu0 0.0
  %3679 = vmatprep.mubr.f32.mxu0 0.0
  %3680 = vmatmul.mubr.f32.gmra.mrb[0].mxu0 %v3542
  %v3681 = vpop.f32.mrb[0].mxu0
  %v3682 = vadd.f32 0.0, %v3681
  %v3683 = vpop.f32.mrb[0].mxu0
  %3684 = vdwg.mxu0
  %v3686 = vcombine.high %v3611, %v3611
  %v3688 = vunpack.c.l.s4 1966171168
  %v3689 = vunpack.c.0.s8 %v3688
  %v3690 = vlaneseq
  %v3691 = vshrl.u32 %v3690, 7
  %v3692 = vsub.s32 %v3689, %v3691
  %v3693 = vrot.slane %v3611, %v3692
  %v3695 = vunpack.c.l.s4 1966171168
  %v3696 = vunpack.c.0.s8 %v3695
  %v3697 = vlaneseq
  %v3698 = vshrl.u32 %v3697, 7
  %v3699 = vsub.s32 %v3696, %v3698
  %v3700 = vrot.slane %v3686, %v3699
  %v3701 = vcombine.high %v3693, %v3693
  %v3702 = vcombine.high %v3700, %v3700
  %v3704 = vunpack.c.l.s4 1966171168
  %v3705 = vunpack.c.0.s8 %v3704
  %v3706 = vlaneseq
  %v3707 = vshrl.u32 %v3706, 7
  %v3708 = vsub.s32 %v3705, %v3707
  %v3709 = vrot.slane %v3693, %v3708
  %v3711 = vunpack.c.l.s4 1966171168
  %v3712 = vunpack.c.0.s8 %v3711
  %v3713 = vlaneseq
  %v3714 = vshrl.u32 %v3713, 7
  %v3715 = vsub.s32 %v3712, %v3714
  %v3716 = vrot.slane %v3700, %v3715
  %v3718 = vunpack.c.l.s4 1966171168
  %v3719 = vunpack.c.0.s8 %v3718
  %v3720 = vlaneseq
  %v3721 = vshrl.u32 %v3720, 7
  %v3722 = vsub.s32 %v3719, %v3721
  %v3723 = vrot.slane %v3701, %v3722
  %v3725 = vunpack.c.l.s4 1966171168
  %v3726 = vunpack.c.0.s8 %v3725
  %v3727 = vlaneseq
  %v3728 = vshrl.u32 %v3727, 7
  %v3729 = vsub.s32 %v3726, %v3728
  %v3730 = vrot.slane %v3702, %v3729
  %v3731 = vcombine.high %v3709, %v3709
  %v3732 = vcombine.high %v3716, %v3716
  %v3733 = vcombine.high %v3723, %v3723
  %v3734 = vcombine.high %v3730, %v3730
  %v3743 = vadd.f32 %v3471, %v3709
  %v3744 = vadd.f32 %v3473, %v3723
  %v3745 = vadd.f32 %v3475, %v3731
  %v3746 = vadd.f32 %v3477, %v3733
  %v3747 = vadd.f32 %v3479, %v3716
  %v3748 = vadd.f32 %v3481, %v3730
  %v3749 = vadd.f32 %v3483, %v3732
  %v3750 = vadd.f32 %v3485, %v3734
  %v3751 = vmul.f32 %v3743, 0.5
  %v3752 = vmul.f32 %v3744, 0.5
  %v3753 = vmul.f32 %v3745, 0.5
  %v3754 = vmul.f32 %v3746, 0.5
  %v3755 = vmul.f32 %v3747, 0.5
  %v3756 = vmul.f32 %v3748, 0.5
  %v3757 = vmul.f32 %v3749, 0.5
  %v3758 = vmul.f32 %v3750, 0.5
  %v3759 = vtanh.pop %v3751
  %v3760 = vtanh.pop %v3752
  %v3761 = vtanh.pop %v3753
  %v3762 = vtanh.pop %v3754
  %v3763 = vtanh.pop %v3755
  %v3764 = vtanh.pop %v3756
  %v3765 = vtanh.pop %v3757
  %v3766 = vtanh.pop %v3758
  %v3767 = vadd.f32 %v3759, 1.0
  %v3768 = vadd.f32 %v3760, 1.0
  %v3769 = vadd.f32 %v3761, 1.0
  %v3770 = vadd.f32 %v3762, 1.0
  %v3771 = vadd.f32 %v3763, 1.0
  %v3772 = vadd.f32 %v3764, 1.0
  %v3773 = vadd.f32 %v3765, 1.0
  %v3774 = vadd.f32 %v3766, 1.0
  %v3775 = vmul.f32 %v3767, 0.5
  %v3776 = vmul.f32 %v3768, 0.5
  %v3777 = vmul.f32 %v3769, 0.5
  %v3778 = vmul.f32 %v3770, 0.5
  %v3779 = vmul.f32 %v3771, 0.5
  %v3780 = vmul.f32 %v3772, 0.5
  %v3781 = vmul.f32 %v3773, 0.5
  %v3782 = vmul.f32 %v3774, 0.5
  %v3791 = vrot.slane %v3471, 1
  %v3792 = vrot.slane %v3473, 1
  %v3793 = vrot.slane %v3475, 1
  %v3794 = vrot.slane %v3477, 1
  %v3795 = vrot.slane %v3479, 1
  %v3796 = vrot.slane %v3481, 1
  %v3797 = vrot.slane %v3483, 1
  %v3798 = vrot.slane %v3485, 1
  %v3808 = vcombine.high %v3613, %v3613
  %v3810 = vunpack.c.l.s4 1966171168
  %v3811 = vunpack.c.0.s8 %v3810
  %v3812 = vlaneseq
  %v3813 = vshrl.u32 %v3812, 7
  %v3814 = vsub.s32 %v3811, %v3813
  %v3815 = vrot.slane %v3613, %v3814
  %v3817 = vunpack.c.l.s4 1966171168
  %v3818 = vunpack.c.0.s8 %v3817
  %v3819 = vlaneseq
  %v3820 = vshrl.u32 %v3819, 7
  %v3821 = vsub.s32 %v3818, %v3820
  %v3822 = vrot.slane %v3808, %v3821
  %v3823 = vcombine.high %v3815, %v3815
  %v3824 = vcombine.high %v3822, %v3822
  %v3826 = vunpack.c.l.s4 1966171168
  %v3827 = vunpack.c.0.s8 %v3826
  %v3828 = vlaneseq
  %v3829 = vshrl.u32 %v3828, 7
  %v3830 = vsub.s32 %v3827, %v3829
  %v3831 = vrot.slane %v3815, %v3830
  %v3833 = vunpack.c.l.s4 1966171168
  %v3834 = vunpack.c.0.s8 %v3833
  %v3835 = vlaneseq
  %v3836 = vshrl.u32 %v3835, 7
  %v3837 = vsub.s32 %v3834, %v3836
  %v3838 = vrot.slane %v3822, %v3837
  %v3840 = vunpack.c.l.s4 1966171168
  %v3841 = vunpack.c.0.s8 %v3840
  %v3842 = vlaneseq
  %v3843 = vshrl.u32 %v3842, 7
  %v3844 = vsub.s32 %v3841, %v3843
  %v3845 = vrot.slane %v3823, %v3844
  %v3847 = vunpack.c.l.s4 1966171168
  %v3848 = vunpack.c.0.s8 %v3847
  %v3849 = vlaneseq
  %v3850 = vshrl.u32 %v3849, 7
  %v3851 = vsub.s32 %v3848, %v3850
  %v3852 = vrot.slane %v3824, %v3851
  %v3853 = vcombine.high %v3831, %v3831
  %v3854 = vcombine.high %v3838, %v3838
  %v3855 = vcombine.high %v3845, %v3845
  %v3856 = vcombine.high %v3852, %v3852
  %v3865 = vadd.f32 %v3791, %v3831
  %v3866 = vadd.f32 %v3792, %v3845
  %v3867 = vadd.f32 %v3793, %v3853
  %v3868 = vadd.f32 %v3794, %v3855
  %v3869 = vadd.f32 %v3795, %v3838
  %v3870 = vadd.f32 %v3796, %v3852
  %v3871 = vadd.f32 %v3797, %v3854
  %v3872 = vadd.f32 %v3798, %v3856
  %v3873 = vmul.f32 %v3865, 0.5
  %v3874 = vmul.f32 %v3866, 0.5
  %v3875 = vmul.f32 %v3867, 0.5
  %v3876 = vmul.f32 %v3868, 0.5
  %v3877 = vmul.f32 %v3869, 0.5
  %v3878 = vmul.f32 %v3870, 0.5
  %v3879 = vmul.f32 %v3871, 0.5
  %v3880 = vmul.f32 %v3872, 0.5
  %v3881 = vtanh.pop %v3873
  %v3882 = vtanh.pop %v3874
  %v3883 = vtanh.pop %v3875
  %v3884 = vtanh.pop %v3876
  %v3885 = vtanh.pop %v3877
  %v3886 = vtanh.pop %v3878
  %v3887 = vtanh.pop %v3879
  %v3888 = vtanh.pop %v3880
  %v3889 = vadd.f32 %v3881, 1.0
  %v3890 = vadd.f32 %v3882, 1.0
  %v3891 = vadd.f32 %v3883, 1.0
  %v3892 = vadd.f32 %v3884, 1.0
  %v3893 = vadd.f32 %v3885, 1.0
  %v3894 = vadd.f32 %v3886, 1.0
  %v3895 = vadd.f32 %v3887, 1.0
  %v3896 = vadd.f32 %v3888, 1.0
  %v3897 = vmul.f32 %v3889, 0.5
  %v3898 = vmul.f32 %v3890, 0.5
  %v3899 = vmul.f32 %v3891, 0.5
  %v3900 = vmul.f32 %v3892, 0.5
  %v3901 = vmul.f32 %v3893, 0.5
  %v3902 = vmul.f32 %v3894, 0.5
  %v3903 = vmul.f32 %v3895, 0.5
  %v3904 = vmul.f32 %v3896, 0.5
  %v3905 = vadd.f32 %v3682, %v72
  %v3907 = vcombine.high %v3905, %v3905
  %v3909 = vunpack.c.l.s4 1966171168
  %v3910 = vunpack.c.0.s8 %v3909
  %v3911 = vlaneseq
  %v3912 = vshrl.u32 %v3911, 7
  %v3913 = vsub.s32 %v3910, %v3912
  %v3914 = vrot.slane %v3905, %v3913
  %v3916 = vunpack.c.l.s4 1966171168
  %v3917 = vunpack.c.0.s8 %v3916
  %v3918 = vlaneseq
  %v3919 = vshrl.u32 %v3918, 7
  %v3920 = vsub.s32 %v3917, %v3919
  %v3921 = vrot.slane %v3907, %v3920
  %v3922 = vcombine.high %v3914, %v3914
  %v3923 = vcombine.high %v3921, %v3921
  %v3925 = vunpack.c.l.s4 1966171168
  %v3926 = vunpack.c.0.s8 %v3925
  %v3927 = vlaneseq
  %v3928 = vshrl.u32 %v3927, 7
  %v3929 = vsub.s32 %v3926, %v3928
  %v3930 = vrot.slane %v3914, %v3929
  %v3932 = vunpack.c.l.s4 1966171168
  %v3933 = vunpack.c.0.s8 %v3932
  %v3934 = vlaneseq
  %v3935 = vshrl.u32 %v3934, 7
  %v3936 = vsub.s32 %v3933, %v3935
  %v3937 = vrot.slane %v3921, %v3936
  %v3939 = vunpack.c.l.s4 1966171168
  %v3940 = vunpack.c.0.s8 %v3939
  %v3941 = vlaneseq
  %v3942 = vshrl.u32 %v3941, 7
  %v3943 = vsub.s32 %v3940, %v3942
  %v3944 = vrot.slane %v3922, %v3943
  %v3946 = vunpack.c.l.s4 1966171168
  %v3947 = vunpack.c.0.s8 %v3946
  %v3948 = vlaneseq
  %v3949 = vshrl.u32 %v3948, 7
  %v3950 = vsub.s32 %v3947, %v3949
  %v3951 = vrot.slane %v3923, %v3950
  %v3952 = vcombine.high %v3930, %v3930
  %v3953 = vcombine.high %v3937, %v3937
  %v3954 = vcombine.high %v3944, %v3944
  %v3955 = vcombine.high %v3951, %v3951
  %v3964 = vmul.f32 %v3775, %v3930
  %v3965 = vmul.f32 %v3776, %v3944
  %v3966 = vmul.f32 %v3777, %v3952
  %v3967 = vmul.f32 %v3778, %v3954
  %v3968 = vmul.f32 %v3779, %v3937
  %v3969 = vmul.f32 %v3780, %v3951
  %v3970 = vmul.f32 %v3781, %v3953
  %v3971 = vmul.f32 %v3782, %v3955
  %v3972 = vrot.slane %v3471, 2
  %v3973 = vrot.slane %v3473, 2
  %v3974 = vrot.slane %v3475, 2
  %v3975 = vrot.slane %v3477, 2
  %v3976 = vrot.slane %v3479, 2
  %v3977 = vrot.slane %v3481, 2
  %v3978 = vrot.slane %v3483, 2
  %v3979 = vrot.slane %v3485, 2
  %v3988 = vadd.f32 %v3972, %v3964
  %v3989 = vadd.f32 %v3973, %v3965
  %v3990 = vadd.f32 %v3974, %v3966
  %v3991 = vadd.f32 %v3975, %v3967
  %v3992 = vadd.f32 %v3976, %v3968
  %v3993 = vadd.f32 %v3977, %v3969
  %v3994 = vadd.f32 %v3978, %v3970
  %v3995 = vadd.f32 %v3979, %v3971
  %v3996 = vtanh.pop %v3988
  %v3997 = vtanh.pop %v3989
  %v3998 = vtanh.pop %v3990
  %v3999 = vtanh.pop %v3991
  %v4000 = vtanh.pop %v3992
  %v4001 = vtanh.pop %v3993
  %v4002 = vtanh.pop %v3994
  %v4003 = vtanh.pop %v3995
  %v4004 = vsub.f32 1.0, %v3897
  %v4005 = vsub.f32 1.0, %v3898
  %v4006 = vsub.f32 1.0, %v3899
  %v4007 = vsub.f32 1.0, %v3900
  %v4008 = vsub.f32 1.0, %v3901
  %v4009 = vsub.f32 1.0, %v3902
  %v4010 = vsub.f32 1.0, %v3903
  %v4011 = vsub.f32 1.0, %v3904
  %v4012 = vmul.f32 %v4004, %v3996
  %v4013 = vmul.f32 %v4005, %v3997
  %v4014 = vmul.f32 %v4006, %v3998
  %v4015 = vmul.f32 %v4007, %v3999
  %v4016 = vmul.f32 %v4008, %v4000
  %v4017 = vmul.f32 %v4009, %v4001
  %v4018 = vmul.f32 %v4010, %v4002
  %v4019 = vmul.f32 %v4011, %v4003
  %v4020 = vmul.f32 %v3897, %v3462
  %v4021 = vmul.f32 %v3898, %v3463
  %v4022 = vmul.f32 %v3899, %v3464
  %v4023 = vmul.f32 %v3900, %v3465
  %v4024 = vmul.f32 %v3901, %v3466
  %v4025 = vmul.f32 %v3902, %v3467
  %v4026 = vmul.f32 %v3903, %v3468
  %v4027 = vmul.f32 %v3904, %v3469
  %v4028 = vadd.f32 %v4012, %v4020
  %v4029 = vadd.f32 %v4013, %v4021
  %v4030 = vadd.f32 %v4014, %v4022
  %v4031 = vadd.f32 %v4015, %v4023
  %v4032 = vadd.f32 %v4016, %v4024
  %v4033 = vadd.f32 %v4017, %v4025
  %v4034 = vadd.f32 %v4018, %v4026
  %v4035 = vadd.f32 %v4019, %v4027
  %s4036 = scalar_lea.vmem %s0, 7
  %v4037 = vld [vmem:[%s4036] ss:$8 sm:$0x7]
  %s4038 = scalar_lea.vmem %s0, 31
  %v4039 = vld [vmem:[%s4038] ss:$8 sm:$0x7]
  %s4040 = scalar_lea.vmem %s0, 55
  %v4041 = vld [vmem:[%s4040] ss:$8 sm:$0x7]
  %s4042 = scalar_lea.vmem %s0, 79
  %v4043 = vld [vmem:[%s4042] ss:$8 sm:$0x7]
  %s4044 = scalar_lea.vmem %s0, 103
  %v4045 = vld [vmem:[%s4044] ss:$8 sm:$0x7]
  %s4046 = scalar_lea.vmem %s0, 127
  %v4047 = vld [vmem:[%s4046] ss:$8 sm:$0x7]
  %s4048 = scalar_lea.vmem %s0, 151
  %v4049 = vld [vmem:[%s4048] ss:$8 sm:$0x7]
  %s4050 = scalar_lea.vmem %s0, 175
  %v4051 = vld [vmem:[%s4050] ss:$8 sm:$0x7]
  %v4060 = vcombine.low %v4028, %v4029
  %v4061 = vcombine.low %v4030, %v4031
  %v4062 = vcombine.low %v4032, %v4033
  %v4063 = vcombine.low %v4034, %v4035
  %v4065 = vunpack.c.l.s4 1966171168
  %v4066 = vunpack.c.0.s8 %v4065
  %v4067 = vlaneseq
  %v4068 = vshrl.u32 %v4067, 7
  %v4069 = vsub.s32 %v4066, %v4068
  %v4070 = vrot.slane %v4060, %v4069
  %v4072 = vunpack.c.l.s4 1966171168
  %v4073 = vunpack.c.0.s8 %v4072
  %v4074 = vlaneseq
  %v4075 = vshrl.u32 %v4074, 7
  %v4076 = vsub.s32 %v4073, %v4075
  %v4077 = vrot.slane %v4061, %v4076
  %v4079 = vunpack.c.l.s4 1966171168
  %v4080 = vunpack.c.0.s8 %v4079
  %v4081 = vlaneseq
  %v4082 = vshrl.u32 %v4081, 7
  %v4083 = vsub.s32 %v4080, %v4082
  %v4084 = vrot.slane %v4062, %v4083
  %v4086 = vunpack.c.l.s4 1966171168
  %v4087 = vunpack.c.0.s8 %v4086
  %v4088 = vlaneseq
  %v4089 = vshrl.u32 %v4088, 7
  %v4090 = vsub.s32 %v4087, %v4089
  %v4091 = vrot.slane %v4063, %v4090
  %v4092 = vcombine.low %v4070, %v4077
  %v4093 = vcombine.low %v4084, %v4091
  %v4095 = vunpack.c.l.s4 1966171168
  %v4096 = vunpack.c.0.s8 %v4095
  %v4097 = vlaneseq
  %v4098 = vshrl.u32 %v4097, 7
  %v4099 = vsub.s32 %v4096, %v4098
  %v4100 = vrot.slane %v4092, %v4099
  %v4102 = vunpack.c.l.s4 1966171168
  %v4103 = vunpack.c.0.s8 %v4102
  %v4104 = vlaneseq
  %v4105 = vshrl.u32 %v4104, 7
  %v4106 = vsub.s32 %v4103, %v4105
  %v4107 = vrot.slane %v4093, %v4106
  %v4108 = vcombine.low %v4100, %v4107
  %4110 = vmatprep.subr.mxu0 %v20
  %4111 = vmatpush1.msra.mxu0 %v19
  %4112 = vmatprep.subr.mxu0 %v23
  %4113 = vmatpush1.msra.mxu0 %v22
  %4114 = vmatprep.subr.mxu0 %v26
  %4115 = vmatpush1.msra.mxu0 %v25
  %4116 = vmatprep.subr.mxu0 %v29
  %4117 = vmatpush1.msra.mxu0 %v28
  %4118 = vmatprep.subr.mxu0 %v32
  %4119 = vmatpush1.msra.mxu0 %v31
  %4120 = vmatprep.subr.mxu0 %v35
  %4121 = vmatpush1.msra.mxu0 %v34
  %4122 = vmatprep.subr.mxu0 %v38
  %4123 = vmatpush1.msra.mxu0 %v37
  %4124 = vmatprep.subr.mxu0 %v41
  %4125 = vmatpush1.msra.mxu0 %v40
  %4126 = vmatprep.subr.mxu0 %v44
  %4127 = vmatpush1.msra.mxu0 %v43
  %4128 = vmatprep.subr.mxu0 %v47
  %4129 = vmatpush1.msra.mxu0 %v46
  %4130 = vmatprep.subr.mxu0 %v50
  %4131 = vmatpush1.msra.mxu0 %v49
  %4132 = vmatprep.subr.mxu0 %v53
  %4133 = vmatpush1.msra.mxu0 %v52
  %4134 = vmatprep.subr.mxu0 %v56
  %4135 = vmatpush1.msra.mxu0 %v55
  %4136 = vmatprep.subr.mxu0 %v59
  %4137 = vmatpush1.msra.mxu0 %v58
  %4138 = vmatprep.subr.mxu0 %v62
  %4139 = vmatpush1.msra.mxu0 %v61
  %4140 = vmatprep.subr.mxu0 %v65
  %4141 = vmatpush1.msra.mxu0 %v64
  %4142 = vmatprep.subr.mxu0 0.0
  %4143 = vmatpush1.msra.mxu0 0.0
  %4144 = vmatprep.subr.mxu0 0.0
  %4145 = vmatpush1.msra.mxu0 0.0
  %4146 = vmatprep.subr.mxu0 0.0
  %4147 = vmatpush1.msra.mxu0 0.0
  %4148 = vmatprep.subr.mxu0 0.0
  %4149 = vmatpush1.msra.mxu0 0.0
  %4150 = vmatprep.subr.mxu0 0.0
  %4151 = vmatpush1.msra.mxu0 0.0
  %4152 = vmatprep.subr.mxu0 0.0
  %4153 = vmatpush1.msra.mxu0 0.0
  %4154 = vmatprep.subr.mxu0 0.0
  %4155 = vmatpush1.msra.mxu0 0.0
  %4156 = vmatprep.subr.mxu0 0.0
  %4157 = vmatpush1.msra.mxu0 0.0
  %4158 = vmatprep.subr.mxu0 0.0
  %4159 = vmatpush1.msra.mxu0 0.0
  %4160 = vmatprep.subr.mxu0 0.0
  %4161 = vmatpush1.msra.mxu0 0.0
  %4162 = vmatprep.subr.mxu0 0.0
  %4163 = vmatpush1.msra.mxu0 0.0
  %4164 = vmatprep.subr.mxu0 0.0
  %4165 = vmatpush1.msra.mxu0 0.0
  %4166 = vmatprep.subr.mxu0 0.0
  %4167 = vmatpush1.msra.mxu0 0.0
  %4168 = vmatprep.subr.mxu0 0.0
  %4169 = vmatpush1.msra.mxu0 0.0
  %4170 = vmatprep.subr.mxu0 0.0
  %4171 = vmatpush1.msra.mxu0 0.0
  %4172 = vmatprep.subr.mxu0 0.0
  %4173 = vmatpush1.msra.mxu0 0.0
  %4174 = vmatprep.mubr.f32.mxu0 0.0
  %4175 = vmatmul.mubr.f32.gmra.mrb[0].mxu0 %v4108
  %v4176 = vpop.f32.mrb[0].mxu0
  %v4177 = vadd.f32 0.0, %v4176
  %v4178 = vpop.f32.mrb[0].mxu0
  %v4179 = vadd.f32 0.0, %v4178
  %4180 = vdwg.mxu0
  %4181 = vmatprep.subr.mxu0 0.0
  %4182 = vmatpush1.msra.mxu0 %v21
  %4183 = vmatprep.subr.mxu0 0.0
  %4184 = vmatpush1.msra.mxu0 %v24
  %4185 = vmatprep.subr.mxu0 0.0
  %4186 = vmatpush1.msra.mxu0 %v27
  %4187 = vmatprep.subr.mxu0 0.0
  %4188 = vmatpush1.msra.mxu0 %v30
  %4189 = vmatprep.subr.mxu0 0.0
  %4190 = vmatpush1.msra.mxu0 %v33
  %4191 = vmatprep.subr.mxu0 0.0
  %4192 = vmatpush1.msra.mxu0 %v36
  %4193 = vmatprep.subr.mxu0 0.0
  %4194 = vmatpush1.msra.mxu0 %v39
  %4195 = vmatprep.subr.mxu0 0.0
  %4196 = vmatpush1.msra.mxu0 %v42
  %4197 = vmatprep.subr.mxu0 0.0
  %4198 = vmatpush1.msra.mxu0 %v45
  %4199 = vmatprep.subr.mxu0 0.0
  %4200 = vmatpush1.msra.mxu0 %v48
  %4201 = vmatprep.subr.mxu0 0.0
  %4202 = vmatpush1.msra.mxu0 %v51
  %4203 = vmatprep.subr.mxu0 0.0
  %4204 = vmatpush1.msra.mxu0 %v54
  %4205 = vmatprep.subr.mxu0 0.0
  %4206 = vmatpush1.msra.mxu0 %v57
  %4207 = vmatprep.subr.mxu0 0.0
  %4208 = vmatpush1.msra.mxu0 %v60
  %4209 = vmatprep.subr.mxu0 0.0
  %4210 = vmatpush1.msra.mxu0 %v63
  %4211 = vmatprep.subr.mxu0 0.0
  %4212 = vmatpush1.msra.mxu0 %v66
  %4213 = vmatprep.subr.mxu0 0.0
  %4214 = vmatpush1.msra.mxu0 0.0
  %4215 = vmatprep.subr.mxu0 0.0
  %4216 = vmatpush1.msra.mxu0 0.0
  %4217 = vmatprep.subr.mxu0 0.0
  %4218 = vmatpush1.msra.mxu0 0.0
  %4219 = vmatprep.subr.mxu0 0.0
  %4220 = vmatpush1.msra.mxu0 0.0
  %4221 = vmatprep.subr.mxu0 0.0
  %4222 = vmatpush1.msra.mxu0 0.0
  %4223 = vmatprep.subr.mxu0 0.0
  %4224 = vmatpush1.msra.mxu0 0.0
  %4225 = vmatprep.subr.mxu0 0.0
  %4226 = vmatpush1.msra.mxu0 0.0
  %4227 = vmatprep.subr.mxu0 0.0
  %4228 = vmatpush1.msra.mxu0 0.0
  %4229 = vmatprep.subr.mxu0 0.0
  %4230 = vmatpush1.msra.mxu0 0.0
  %4231 = vmatprep.subr.mxu0 0.0
  %4232 = vmatpush1.msra.mxu0 0.0
  %4233 = vmatprep.subr.mxu0 0.0
  %4234 = vmatpush1.msra.mxu0 0.0
  %4235 = vmatprep.subr.mxu0 0.0
  %4236 = vmatpush1.msra.mxu0 0.0
  %4237 = vmatprep.subr.mxu0 0.0
  %4238 = vmatpush1.msra.mxu0 0.0
  %4239 = vmatprep.subr.mxu0 0.0
  %4240 = vmatpush1.msra.mxu0 0.0
  %4241 = vmatprep.subr.mxu0 0.0
  %4242 = vmatpush1.msra.mxu0 0.0
  %4243 = vmatprep.subr.mxu0 0.0
  %4244 = vmatpush1.msra.mxu0 0.0
  %4245 = vmatprep.mubr.f32.mxu0 0.0
  %4246 = vmatmul.mubr.f32.gmra.mrb[0].mxu0 %v4108
  %v4247 = vpop.f32.mrb[0].mxu0
  %v4248 = vadd.f32 0.0, %v4247
  %v4249 = vpop.f32.mrb[0].mxu0
  %4250 = vdwg.mxu0
  %v4252 = vcombine.high %v4177, %v4177
  %v4254 = vunpack.c.l.s4 1966171168
  %v4255 = vunpack.c.0.s8 %v4254
  %v4256 = vlaneseq
  %v4257 = vshrl.u32 %v4256, 7
  %v4258 = vsub.s32 %v4255, %v4257
  %v4259 = vrot.slane %v4177, %v4258
  %v4261 = vunpack.c.l.s4 1966171168
  %v4262 = vunpack.c.0.s8 %v4261
  %v4263 = vlaneseq
  %v4264 = vshrl.u32 %v4263, 7
  %v4265 = vsub.s32 %v4262, %v4264
  %v4266 = vrot.slane %v4252, %v4265
  %v4267 = vcombine.high %v4259, %v4259
  %v4268 = vcombine.high %v4266, %v4266
  %v4270 = vunpack.c.l.s4 1966171168
  %v4271 = vunpack.c.0.s8 %v4270
  %v4272 = vlaneseq
  %v4273 = vshrl.u32 %v4272, 7
  %v4274 = vsub.s32 %v4271, %v4273
  %v4275 = vrot.slane %v4259, %v4274
  %v4277 = vunpack.c.l.s4 1966171168
  %v4278 = vunpack.c.0.s8 %v4277
  %v4279 = vlaneseq
  %v4280 = vshrl.u32 %v4279, 7
  %v4281 = vsub.s32 %v4278, %v4280
  %v4282 = vrot.slane %v4266, %v4281
  %v4284 = vunpack.c.l.s4 1966171168
  %v4285 = vunpack.c.0.s8 %v4284
  %v4286 = vlaneseq
  %v4287 = vshrl.u32 %v4286, 7
  %v4288 = vsub.s32 %v4285, %v4287
  %v4289 = vrot.slane %v4267, %v4288
  %v4291 = vunpack.c.l.s4 1966171168
  %v4292 = vunpack.c.0.s8 %v4291
  %v4293 = vlaneseq
  %v4294 = vshrl.u32 %v4293, 7
  %v4295 = vsub.s32 %v4292, %v4294
  %v4296 = vrot.slane %v4268, %v4295
  %v4297 = vcombine.high %v4275, %v4275
  %v4298 = vcombine.high %v4282, %v4282
  %v4299 = vcombine.high %v4289, %v4289
  %v4300 = vcombine.high %v4296, %v4296
  %v4309 = vadd.f32 %v4037, %v4275
  %v4310 = vadd.f32 %v4039, %v4289
  %v4311 = vadd.f32 %v4041, %v4297
  %v4312 = vadd.f32 %v4043, %v4299
  %v4313 = vadd.f32 %v4045, %v4282
  %v4314 = vadd.f32 %v4047, %v4296
  %v4315 = vadd.f32 %v4049, %v4298
  %v4316 = vadd.f32 %v4051, %v4300
  %v4317 = vmul.f32 %v4309, 0.5
  %v4318 = vmul.f32 %v4310, 0.5
  %v4319 = vmul.f32 %v4311, 0.5
  %v4320 = vmul.f32 %v4312, 0.5
  %v4321 = vmul.f32 %v4313, 0.5
  %v4322 = vmul.f32 %v4314, 0.5
  %v4323 = vmul.f32 %v4315, 0.5
  %v4324 = vmul.f32 %v4316, 0.5
  %v4325 = vtanh.pop %v4317
  %v4326 = vtanh.pop %v4318
  %v4327 = vtanh.pop %v4319
  %v4328 = vtanh.pop %v4320
  %v4329 = vtanh.pop %v4321
  %v4330 = vtanh.pop %v4322
  %v4331 = vtanh.pop %v4323
  %v4332 = vtanh.pop %v4324
  %v4333 = vadd.f32 %v4325, 1.0
  %v4334 = vadd.f32 %v4326, 1.0
  %v4335 = vadd.f32 %v4327, 1.0
  %v4336 = vadd.f32 %v4328, 1.0
  %v4337 = vadd.f32 %v4329, 1.0
  %v4338 = vadd.f32 %v4330, 1.0
  %v4339 = vadd.f32 %v4331, 1.0
  %v4340 = vadd.f32 %v4332, 1.0
  %v4341 = vmul.f32 %v4333, 0.5
  %v4342 = vmul.f32 %v4334, 0.5
  %v4343 = vmul.f32 %v4335, 0.5
  %v4344 = vmul.f32 %v4336, 0.5
  %v4345 = vmul.f32 %v4337, 0.5
  %v4346 = vmul.f32 %v4338, 0.5
  %v4347 = vmul.f32 %v4339, 0.5
  %v4348 = vmul.f32 %v4340, 0.5
  %v4357 = vrot.slane %v4037, 1
  %v4358 = vrot.slane %v4039, 1
  %v4359 = vrot.slane %v4041, 1
  %v4360 = vrot.slane %v4043, 1
  %v4361 = vrot.slane %v4045, 1
  %v4362 = vrot.slane %v4047, 1
  %v4363 = vrot.slane %v4049, 1
  %v4364 = vrot.slane %v4051, 1
  %v4374 = vcombine.high %v4179, %v4179
  %v4376 = vunpack.c.l.s4 1966171168
  %v4377 = vunpack.c.0.s8 %v4376
  %v4378 = vlaneseq
  %v4379 = vshrl.u32 %v4378, 7
  %v4380 = vsub.s32 %v4377, %v4379
  %v4381 = vrot.slane %v4179, %v4380
  %v4383 = vunpack.c.l.s4 1966171168
  %v4384 = vunpack.c.0.s8 %v4383
  %v4385 = vlaneseq
  %v4386 = vshrl.u32 %v4385, 7
  %v4387 = vsub.s32 %v4384, %v4386
  %v4388 = vrot.slane %v4374, %v4387
  %v4389 = vcombine.high %v4381, %v4381
  %v4390 = vcombine.high %v4388, %v4388
  %v4392 = vunpack.c.l.s4 1966171168
  %v4393 = vunpack.c.0.s8 %v4392
  %v4394 = vlaneseq
  %v4395 = vshrl.u32 %v4394, 7
  %v4396 = vsub.s32 %v4393, %v4395
  %v4397 = vrot.slane %v4381, %v4396
  %v4399 = vunpack.c.l.s4 1966171168
  %v4400 = vunpack.c.0.s8 %v4399
  %v4401 = vlaneseq
  %v4402 = vshrl.u32 %v4401, 7
  %v4403 = vsub.s32 %v4400, %v4402
  %v4404 = vrot.slane %v4388, %v4403
  %v4406 = vunpack.c.l.s4 1966171168
  %v4407 = vunpack.c.0.s8 %v4406
  %v4408 = vlaneseq
  %v4409 = vshrl.u32 %v4408, 7
  %v4410 = vsub.s32 %v4407, %v4409
  %v4411 = vrot.slane %v4389, %v4410
  %v4413 = vunpack.c.l.s4 1966171168
  %v4414 = vunpack.c.0.s8 %v4413
  %v4415 = vlaneseq
  %v4416 = vshrl.u32 %v4415, 7
  %v4417 = vsub.s32 %v4414, %v4416
  %v4418 = vrot.slane %v4390, %v4417
  %v4419 = vcombine.high %v4397, %v4397
  %v4420 = vcombine.high %v4404, %v4404
  %v4421 = vcombine.high %v4411, %v4411
  %v4422 = vcombine.high %v4418, %v4418
  %v4431 = vadd.f32 %v4357, %v4397
  %v4432 = vadd.f32 %v4358, %v4411
  %v4433 = vadd.f32 %v4359, %v4419
  %v4434 = vadd.f32 %v4360, %v4421
  %v4435 = vadd.f32 %v4361, %v4404
  %v4436 = vadd.f32 %v4362, %v4418
  %v4437 = vadd.f32 %v4363, %v4420
  %v4438 = vadd.f32 %v4364, %v4422
  %v4439 = vmul.f32 %v4431, 0.5
  %v4440 = vmul.f32 %v4432, 0.5
  %v4441 = vmul.f32 %v4433, 0.5
  %v4442 = vmul.f32 %v4434, 0.5
  %v4443 = vmul.f32 %v4435, 0.5
  %v4444 = vmul.f32 %v4436, 0.5
  %v4445 = vmul.f32 %v4437, 0.5
  %v4446 = vmul.f32 %v4438, 0.5
  %v4447 = vtanh.pop %v4439
  %v4448 = vtanh.pop %v4440
  %v4449 = vtanh.pop %v4441
  %v4450 = vtanh.pop %v4442
  %v4451 = vtanh.pop %v4443
  %v4452 = vtanh.pop %v4444
  %v4453 = vtanh.pop %v4445
  %v4454 = vtanh.pop %v4446
  %v4455 = vadd.f32 %v4447, 1.0
  %v4456 = vadd.f32 %v4448, 1.0
  %v4457 = vadd.f32 %v4449, 1.0
  %v4458 = vadd.f32 %v4450, 1.0
  %v4459 = vadd.f32 %v4451, 1.0
  %v4460 = vadd.f32 %v4452, 1.0
  %v4461 = vadd.f32 %v4453, 1.0
  %v4462 = vadd.f32 %v4454, 1.0
  %v4463 = vmul.f32 %v4455, 0.5
  %v4464 = vmul.f32 %v4456, 0.5
  %v4465 = vmul.f32 %v4457, 0.5
  %v4466 = vmul.f32 %v4458, 0.5
  %v4467 = vmul.f32 %v4459, 0.5
  %v4468 = vmul.f32 %v4460, 0.5
  %v4469 = vmul.f32 %v4461, 0.5
  %v4470 = vmul.f32 %v4462, 0.5
  %v4471 = vadd.f32 %v4248, %v72
  %v4473 = vcombine.high %v4471, %v4471
  %v4475 = vunpack.c.l.s4 1966171168
  %v4476 = vunpack.c.0.s8 %v4475
  %v4477 = vlaneseq
  %v4478 = vshrl.u32 %v4477, 7
  %v4479 = vsub.s32 %v4476, %v4478
  %v4480 = vrot.slane %v4471, %v4479
  %v4482 = vunpack.c.l.s4 1966171168
  %v4483 = vunpack.c.0.s8 %v4482
  %v4484 = vlaneseq
  %v4485 = vshrl.u32 %v4484, 7
  %v4486 = vsub.s32 %v4483, %v4485
  %v4487 = vrot.slane %v4473, %v4486
  %v4488 = vcombine.high %v4480, %v4480
  %v4489 = vcombine.high %v4487, %v4487
  %v4491 = vunpack.c.l.s4 1966171168
  %v4492 = vunpack.c.0.s8 %v4491
  %v4493 = vlaneseq
  %v4494 = vshrl.u32 %v4493, 7
  %v4495 = vsub.s32 %v4492, %v4494
  %v4496 = vrot.slane %v4480, %v4495
  %v4498 = vunpack.c.l.s4 1966171168
  %v4499 = vunpack.c.0.s8 %v4498
  %v4500 = vlaneseq
  %v4501 = vshrl.u32 %v4500, 7
  %v4502 = vsub.s32 %v4499, %v4501
  %v4503 = vrot.slane %v4487, %v4502
  %v4505 = vunpack.c.l.s4 1966171168
  %v4506 = vunpack.c.0.s8 %v4505
  %v4507 = vlaneseq
  %v4508 = vshrl.u32 %v4507, 7
  %v4509 = vsub.s32 %v4506, %v4508
  %v4510 = vrot.slane %v4488, %v4509
  %v4512 = vunpack.c.l.s4 1966171168
  %v4513 = vunpack.c.0.s8 %v4512
  %v4514 = vlaneseq
  %v4515 = vshrl.u32 %v4514, 7
  %v4516 = vsub.s32 %v4513, %v4515
  %v4517 = vrot.slane %v4489, %v4516
  %v4518 = vcombine.high %v4496, %v4496
  %v4519 = vcombine.high %v4503, %v4503
  %v4520 = vcombine.high %v4510, %v4510
  %v4521 = vcombine.high %v4517, %v4517
  %v4530 = vmul.f32 %v4341, %v4496
  %v4531 = vmul.f32 %v4342, %v4510
  %v4532 = vmul.f32 %v4343, %v4518
  %v4533 = vmul.f32 %v4344, %v4520
  %v4534 = vmul.f32 %v4345, %v4503
  %v4535 = vmul.f32 %v4346, %v4517
  %v4536 = vmul.f32 %v4347, %v4519
  %v4537 = vmul.f32 %v4348, %v4521
  %v4538 = vrot.slane %v4037, 2
  %v4539 = vrot.slane %v4039, 2
  %v4540 = vrot.slane %v4041, 2
  %v4541 = vrot.slane %v4043, 2
  %v4542 = vrot.slane %v4045, 2
  %v4543 = vrot.slane %v4047, 2
  %v4544 = vrot.slane %v4049, 2
  %v4545 = vrot.slane %v4051, 2
  %v4554 = vadd.f32 %v4538, %v4530
  %v4555 = vadd.f32 %v4539, %v4531
  %v4556 = vadd.f32 %v4540, %v4532
  %v4557 = vadd.f32 %v4541, %v4533
  %v4558 = vadd.f32 %v4542, %v4534
  %v4559 = vadd.f32 %v4543, %v4535
  %v4560 = vadd.f32 %v4544, %v4536
  %v4561 = vadd.f32 %v4545, %v4537
  %v4562 = vtanh.pop %v4554
  %v4563 = vtanh.pop %v4555
  %v4564 = vtanh.pop %v4556
  %v4565 = vtanh.pop %v4557
  %v4566 = vtanh.pop %v4558
  %v4567 = vtanh.pop %v4559
  %v4568 = vtanh.pop %v4560
  %v4569 = vtanh.pop %v4561
  %v4570 = vsub.f32 1.0, %v4463
  %v4571 = vsub.f32 1.0, %v4464
  %v4572 = vsub.f32 1.0, %v4465
  %v4573 = vsub.f32 1.0, %v4466
  %v4574 = vsub.f32 1.0, %v4467
  %v4575 = vsub.f32 1.0, %v4468
  %v4576 = vsub.f32 1.0, %v4469
  %v4577 = vsub.f32 1.0, %v4470
  %v4578 = vmul.f32 %v4570, %v4562
  %v4579 = vmul.f32 %v4571, %v4563
  %v4580 = vmul.f32 %v4572, %v4564
  %v4581 = vmul.f32 %v4573, %v4565
  %v4582 = vmul.f32 %v4574, %v4566
  %v4583 = vmul.f32 %v4575, %v4567
  %v4584 = vmul.f32 %v4576, %v4568
  %v4585 = vmul.f32 %v4577, %v4569
  %v4586 = vmul.f32 %v4463, %v4028
  %v4587 = vmul.f32 %v4464, %v4029
  %v4588 = vmul.f32 %v4465, %v4030
  %v4589 = vmul.f32 %v4466, %v4031
  %v4590 = vmul.f32 %v4467, %v4032
  %v4591 = vmul.f32 %v4468, %v4033
  %v4592 = vmul.f32 %v4469, %v4034
  %v4593 = vmul.f32 %v4470, %v4035
  %v4594 = vadd.f32 %v4578, %v4586
  %v4595 = vadd.f32 %v4579, %v4587
  %v4596 = vadd.f32 %v4580, %v4588
  %v4597 = vadd.f32 %v4581, %v4589
  %v4598 = vadd.f32 %v4582, %v4590
  %v4599 = vadd.f32 %v4583, %v4591
  %v4600 = vadd.f32 %v4584, %v4592
  %v4601 = vadd.f32 %v4585, %v4593
  %v4602 = vlaneseq
  %v4603 = vshrl.u32 %v4602, 7
  %v4604 = vsub.s32 0, %v4603
  %v4605 = vrot.slane %v1198, %v4604
  %v4606 = vlaneseq
  %v4607 = vshrl.u32 %v4606, 7
  %v4608 = vsub.s32 0, %v4607
  %v4609 = vrot.slane %v1199, %v4608
  %v4610 = vlaneseq
  %v4611 = vshrl.u32 %v4610, 7
  %v4612 = vsub.s32 0, %v4611
  %v4613 = vrot.slane %v1200, %v4612
  %v4614 = vlaneseq
  %v4615 = vshrl.u32 %v4614, 7
  %v4616 = vsub.s32 0, %v4615
  %v4617 = vrot.slane %v1201, %v4616
  %v4618 = vlaneseq
  %v4619 = vshrl.u32 %v4618, 7
  %v4620 = vsub.s32 0, %v4619
  %v4621 = vrot.slane %v1202, %v4620
  %v4622 = vlaneseq
  %v4623 = vshrl.u32 %v4622, 7
  %v4624 = vsub.s32 0, %v4623
  %v4625 = vrot.slane %v1203, %v4624
  %v4626 = vlaneseq
  %v4627 = vshrl.u32 %v4626, 7
  %v4628 = vsub.s32 0, %v4627
  %v4629 = vrot.slane %v1204, %v4628
  %v4630 = vlaneseq
  %v4631 = vshrl.u32 %v4630, 7
  %v4632 = vsub.s32 0, %v4631
  %v4633 = vrot.slane %v1205, %v4632
  %v4642 = vlaneseq
  %v4643 = vshrl.u32 %v4642, 7
  %v4644 = vsub.s32 0, %v4643
  %v4645 = vrot.slane %v1764, %v4644
  %v4646 = vlaneseq
  %v4647 = vshrl.u32 %v4646, 7
  %v4648 = vsub.s32 0, %v4647
  %v4649 = vrot.slane %v1765, %v4648
  %v4650 = vlaneseq
  %v4651 = vshrl.u32 %v4650, 7
  %v4652 = vsub.s32 0, %v4651
  %v4653 = vrot.slane %v1766, %v4652
  %v4654 = vlaneseq
  %v4655 = vshrl.u32 %v4654, 7
  %v4656 = vsub.s32 0, %v4655
  %v4657 = vrot.slane %v1767, %v4656
  %v4658 = vlaneseq
  %v4659 = vshrl.u32 %v4658, 7
  %v4660 = vsub.s32 0, %v4659
  %v4661 = vrot.slane %v1768, %v4660
  %v4662 = vlaneseq
  %v4663 = vshrl.u32 %v4662, 7
  %v4664 = vsub.s32 0, %v4663
  %v4665 = vrot.slane %v1769, %v4664
  %v4666 = vlaneseq
  %v4667 = vshrl.u32 %v4666, 7
  %v4668 = vsub.s32 0, %v4667
  %v4669 = vrot.slane %v1770, %v4668
  %v4670 = vlaneseq
  %v4671 = vshrl.u32 %v4670, 7
  %v4672 = vsub.s32 0, %v4671
  %v4673 = vrot.slane %v1771, %v4672
  %v4682 = vlaneseq
  %v4683 = vshrl.u32 %v4682, 7
  %v4684 = vsub.s32 0, %v4683
  %v4685 = vrot.slane %v2330, %v4684
  %v4686 = vlaneseq
  %v4687 = vshrl.u32 %v4686, 7
  %v4688 = vsub.s32 0, %v4687
  %v4689 = vrot.slane %v2331, %v4688
  %v4690 = vlaneseq
  %v4691 = vshrl.u32 %v4690, 7
  %v4692 = vsub.s32 0, %v4691
  %v4693 = vrot.slane %v2332, %v4692
  %v4694 = vlaneseq
  %v4695 = vshrl.u32 %v4694, 7
  %v4696 = vsub.s32 0, %v4695
  %v4697 = vrot.slane %v2333, %v4696
  %v4698 = vlaneseq
  %v4699 = vshrl.u32 %v4698, 7
  %v4700 = vsub.s32 0, %v4699
  %v4701 = vrot.slane %v2334, %v4700
  %v4702 = vlaneseq
  %v4703 = vshrl.u32 %v4702, 7
  %v4704 = vsub.s32 0, %v4703
  %v4705 = vrot.slane %v2335, %v4704
  %v4706 = vlaneseq
  %v4707 = vshrl.u32 %v4706, 7
  %v4708 = vsub.s32 0, %v4707
  %v4709 = vrot.slane %v2336, %v4708
  %v4710 = vlaneseq
  %v4711 = vshrl.u32 %v4710, 7
  %v4712 = vsub.s32 0, %v4711
  %v4713 = vrot.slane %v2337, %v4712
  %v4722 = vlaneseq
  %v4723 = vshrl.u32 %v4722, 7
  %v4724 = vsub.s32 0, %v4723
  %v4725 = vrot.slane %v2896, %v4724
  %v4726 = vlaneseq
  %v4727 = vshrl.u32 %v4726, 7
  %v4728 = vsub.s32 0, %v4727
  %v4729 = vrot.slane %v2897, %v4728
  %v4730 = vlaneseq
  %v4731 = vshrl.u32 %v4730, 7
  %v4732 = vsub.s32 0, %v4731
  %v4733 = vrot.slane %v2898, %v4732
  %v4734 = vlaneseq
  %v4735 = vshrl.u32 %v4734, 7
  %v4736 = vsub.s32 0, %v4735
  %v4737 = vrot.slane %v2899, %v4736
  %v4738 = vlaneseq
  %v4739 = vshrl.u32 %v4738, 7
  %v4740 = vsub.s32 0, %v4739
  %v4741 = vrot.slane %v2900, %v4740
  %v4742 = vlaneseq
  %v4743 = vshrl.u32 %v4742, 7
  %v4744 = vsub.s32 0, %v4743
  %v4745 = vrot.slane %v2901, %v4744
  %v4746 = vlaneseq
  %v4747 = vshrl.u32 %v4746, 7
  %v4748 = vsub.s32 0, %v4747
  %v4749 = vrot.slane %v2902, %v4748
  %v4750 = vlaneseq
  %v4751 = vshrl.u32 %v4750, 7
  %v4752 = vsub.s32 0, %v4751
  %v4753 = vrot.slane %v2903, %v4752
  %v4762 = vlaneseq
  %v4763 = vshrl.u32 %v4762, 7
  %v4764 = vsub.s32 0, %v4763
  %v4765 = vrot.slane %v3462, %v4764
  %v4766 = vlaneseq
  %v4767 = vshrl.u32 %v4766, 7
  %v4768 = vsub.s32 0, %v4767
  %v4769 = vrot.slane %v3463, %v4768
  %v4770 = vlaneseq
  %v4771 = vshrl.u32 %v4770, 7
  %v4772 = vsub.s32 0, %v4771
  %v4773 = vrot.slane %v3464, %v4772
  %v4774 = vlaneseq
  %v4775 = vshrl.u32 %v4774, 7
  %v4776 = vsub.s32 0, %v4775
  %v4777 = vrot.slane %v3465, %v4776
  %v4778 = vlaneseq
  %v4779 = vshrl.u32 %v4778, 7
  %v4780 = vsub.s32 0, %v4779
  %v4781 = vrot.slane %v3466, %v4780
  %v4782 = vlaneseq
  %v4783 = vshrl.u32 %v4782, 7
  %v4784 = vsub.s32 0, %v4783
  %v4785 = vrot.slane %v3467, %v4784
  %v4786 = vlaneseq
  %v4787 = vshrl.u32 %v4786, 7
  %v4788 = vsub.s32 0, %v4787
  %v4789 = vrot.slane %v3468, %v4788
  %v4790 = vlaneseq
  %v4791 = vshrl.u32 %v4790, 7
  %v4792 = vsub.s32 0, %v4791
  %v4793 = vrot.slane %v3469, %v4792
  %v4802 = vlaneseq
  %v4803 = vshrl.u32 %v4802, 7
  %v4804 = vsub.s32 0, %v4803
  %v4805 = vrot.slane %v4028, %v4804
  %v4806 = vlaneseq
  %v4807 = vshrl.u32 %v4806, 7
  %v4808 = vsub.s32 0, %v4807
  %v4809 = vrot.slane %v4029, %v4808
  %v4810 = vlaneseq
  %v4811 = vshrl.u32 %v4810, 7
  %v4812 = vsub.s32 0, %v4811
  %v4813 = vrot.slane %v4030, %v4812
  %v4814 = vlaneseq
  %v4815 = vshrl.u32 %v4814, 7
  %v4816 = vsub.s32 0, %v4815
  %v4817 = vrot.slane %v4031, %v4816
  %v4818 = vlaneseq
  %v4819 = vshrl.u32 %v4818, 7
  %v4820 = vsub.s32 0, %v4819
  %v4821 = vrot.slane %v4032, %v4820
  %v4822 = vlaneseq
  %v4823 = vshrl.u32 %v4822, 7
  %v4824 = vsub.s32 0, %v4823
  %v4825 = vrot.slane %v4033, %v4824
  %v4826 = vlaneseq
  %v4827 = vshrl.u32 %v4826, 7
  %v4828 = vsub.s32 0, %v4827
  %v4829 = vrot.slane %v4034, %v4828
  %v4830 = vlaneseq
  %v4831 = vshrl.u32 %v4830, 7
  %v4832 = vsub.s32 0, %v4831
  %v4833 = vrot.slane %v4035, %v4832
  %v4850 = vlaneseq
  %v4851 = vshrl.u32 %v4850, 7
  %v4852 = vsub.s32 0, %v4851
  %v4853 = vrot.slane %v4594, %v4852
  %v4854 = vlaneseq
  %v4855 = vshrl.u32 %v4854, 7
  %v4856 = vsub.s32 0, %v4855
  %v4857 = vrot.slane %v4595, %v4856
  %v4858 = vlaneseq
  %v4859 = vshrl.u32 %v4858, 7
  %v4860 = vsub.s32 0, %v4859
  %v4861 = vrot.slane %v4596, %v4860
  %v4862 = vlaneseq
  %v4863 = vshrl.u32 %v4862, 7
  %v4864 = vsub.s32 0, %v4863
  %v4865 = vrot.slane %v4597, %v4864
  %v4866 = vlaneseq
  %v4867 = vshrl.u32 %v4866, 7
  %v4868 = vsub.s32 0, %v4867
  %v4869 = vrot.slane %v4598, %v4868
  %v4870 = vlaneseq
  %v4871 = vshrl.u32 %v4870, 7
  %v4872 = vsub.s32 0, %v4871
  %v4873 = vrot.slane %v4599, %v4872
  %v4874 = vlaneseq
  %v4875 = vshrl.u32 %v4874, 7
  %v4876 = vsub.s32 0, %v4875
  %v4877 = vrot.slane %v4600, %v4876
  %v4878 = vlaneseq
  %v4879 = vshrl.u32 %v4878, 7
  %v4880 = vsub.s32 0, %v4879
  %v4881 = vrot.slane %v4601, %v4880
  %vm4890 = vcmask 1040384
  %v4891 = vsel %vm4890, %v632, %v4605
  %v4892 = vsel %vm4890, %v633, %v4609
  %v4893 = vsel %vm4890, %v634, %v4613
  %v4894 = vsel %vm4890, %v635, %v4617
  %v4895 = vsel %vm4890, %v636, %v4621
  %v4896 = vsel %vm4890, %v637, %v4625
  %v4897 = vsel %vm4890, %v638, %v4629
  %v4898 = vsel %vm4890, %v639, %v4633
  %vm4899 = vcmask 1041408
  %v4900 = vsel %vm4899, %v4891, %v4645
  %v4901 = vsel %vm4899, %v4892, %v4649
  %v4902 = vsel %vm4899, %v4893, %v4653
  %v4903 = vsel %vm4899, %v4894, %v4657
  %v4904 = vsel %vm4899, %v4895, %v4661
  %v4905 = vsel %vm4899, %v4896, %v4665
  %v4906 = vsel %vm4899, %v4897, %v4669
  %v4907 = vsel %vm4899, %v4898, %v4673
  %vm4908 = vcmask 1042432
  %v4909 = vsel %vm4908, %v4900, %v4685
  %v4910 = vsel %vm4908, %v4901, %v4689
  %v4911 = vsel %vm4908, %v4902, %v4693
  %v4912 = vsel %vm4908, %v4903, %v4697
  %v4913 = vsel %vm4908, %v4904, %v4701
  %v4914 = vsel %vm4908, %v4905, %v4705
  %v4915 = vsel %vm4908, %v4906, %v4709
  %v4916 = vsel %vm4908, %v4907, %v4713
  %vm4917 = vcmask 1043456
  %v4918 = vsel %vm4917, %v4909, %v4725
  %v4919 = vsel %vm4917, %v4910, %v4729
  %v4920 = vsel %vm4917, %v4911, %v4733
  %v4921 = vsel %vm4917, %v4912, %v4737
  %v4922 = vsel %vm4917, %v4913, %v4741
  %v4923 = vsel %vm4917, %v4914, %v4745
  %v4924 = vsel %vm4917, %v4915, %v4749
  %v4925 = vsel %vm4917, %v4916, %v4753
  %vm4926 = vcmask 1044480
  %v4927 = vsel %vm4926, %v4918, %v4765
  %v4928 = vsel %vm4926, %v4919, %v4769
  %v4929 = vsel %vm4926, %v4920, %v4773
  %v4930 = vsel %vm4926, %v4921, %v4777
  %v4931 = vsel %vm4926, %v4922, %v4781
  %v4932 = vsel %vm4926, %v4923, %v4785
  %v4933 = vsel %vm4926, %v4924, %v4789
  %v4934 = vsel %vm4926, %v4925, %v4793
  %vm4935 = vcmask 1045504
  %v4936 = vsel %vm4935, %v4927, %v4805
  %v4937 = vsel %vm4935, %v4928, %v4809
  %v4938 = vsel %vm4935, %v4929, %v4813
  %v4939 = vsel %vm4935, %v4930, %v4817
  %v4940 = vsel %vm4935, %v4931, %v4821
  %v4941 = vsel %vm4935, %v4932, %v4825
  %v4942 = vsel %vm4935, %v4933, %v4829
  %v4943 = vsel %vm4935, %v4934, %v4833
  %vm4944 = vcmask 1046528
  %v4945 = vsel %vm4944, %v4936, %v4853
  %v4946 = vsel %vm4944, %v4937, %v4857
  %v4947 = vsel %vm4944, %v4938, %v4861
  %v4948 = vsel %vm4944, %v4939, %v4865
  %v4949 = vsel %vm4944, %v4940, %v4869
  %v4950 = vsel %vm4944, %v4941, %v4873
  %v4951 = vsel %vm4944, %v4942, %v4877
  %v4952 = vsel %vm4944, %v4943, %v4881
  %4953 = vst [vmem:[%s3] sm:$0xff] %v4945
  %4954 = vst [vmem:[%s3 + $0x8] sm:$0xff] %v4946
  %4955 = vst [vmem:[%s3 + $0x10] sm:$0xff] %v4947
  %4956 = vst [vmem:[%s3 + $0x18] sm:$0xff] %v4948
  %4957 = vst [vmem:[%s3 + $0x20] sm:$0xff] %v4949
  %4958 = vst [vmem:[%s3 + $0x28] sm:$0xff] %v4950
  %4959 = vst [vmem:[%s3 + $0x30] sm:$0xff] %v4951
  %4960 = vst [vmem:[%s3 + $0x38] sm:$0xff] %v4952
  %v4961 = vcombine.low %v4594, %v4595
  %v4962 = vcombine.low %v4596, %v4597
  %v4963 = vcombine.low %v4598, %v4599
  %v4964 = vcombine.low %v4600, %v4601
  %v4966 = vunpack.c.l.s4 1966171168
  %v4967 = vunpack.c.0.s8 %v4966
  %v4968 = vlaneseq
  %v4969 = vshrl.u32 %v4968, 7
  %v4970 = vsub.s32 %v4967, %v4969
  %v4971 = vrot.slane %v4961, %v4970
  %v4973 = vunpack.c.l.s4 1966171168
  %v4974 = vunpack.c.0.s8 %v4973
  %v4975 = vlaneseq
  %v4976 = vshrl.u32 %v4975, 7
  %v4977 = vsub.s32 %v4974, %v4976
  %v4978 = vrot.slane %v4962, %v4977
  %v4980 = vunpack.c.l.s4 1966171168
  %v4981 = vunpack.c.0.s8 %v4980
  %v4982 = vlaneseq
  %v4983 = vshrl.u32 %v4982, 7
  %v4984 = vsub.s32 %v4981, %v4983
  %v4985 = vrot.slane %v4963, %v4984
  %v4987 = vunpack.c.l.s4 1966171168
  %v4988 = vunpack.c.0.s8 %v4987
  %v4989 = vlaneseq
  %v4990 = vshrl.u32 %v4989, 7
  %v4991 = vsub.s32 %v4988, %v4990
  %v4992 = vrot.slane %v4964, %v4991
  %v4993 = vcombine.low %v4971, %v4978
  %v4994 = vcombine.low %v4985, %v4992
  %v4996 = vunpack.c.l.s4 1966171168
  %v4997 = vunpack.c.0.s8 %v4996
  %v4998 = vlaneseq
  %v4999 = vshrl.u32 %v4998, 7
  %v5000 = vsub.s32 %v4997, %v4999
  %v5001 = vrot.slane %v4993, %v5000
  %v5003 = vunpack.c.l.s4 1966171168
  %v5004 = vunpack.c.0.s8 %v5003
  %v5005 = vlaneseq
  %v5006 = vshrl.u32 %v5005, 7
  %v5007 = vsub.s32 %v5004, %v5006
  %v5008 = vrot.slane %v4994, %v5007
  %v5009 = vcombine.low %v5001, %v5008
  %5011 = vst [vmem:[#allocation2] sm:$0xff] %v5009
  // Predicated region
  $region18: #{gru_uni_forward.2} parent=0 // pred_check
    _
  $region19: #{gru_uni_forward.2} parent=0 // pred_check_branch
    %5013 = sbr.rel (0) target = $region21
  $region20: #{gru_uni_forward.2} parent=0 // pred_region
    _
  $region21: #{gru_uni_forward.2} parent=0 // pred_fallthru
    _
  // Predicated region
  $region22: #{gru_uni_forward.2} parent=0 // pred_check
    _
  $region23: #{gru_uni_forward.2} parent=0 // pred_check_branch
    %5015 = sbr.rel (0) target = $region25
  $region24: #{gru_uni_forward.2} parent=0 // pred_region
    _
  $region25: #{gru_uni_forward.2} parent=0 // pred_fallthru
    _

</llo_original>
